<compile_context>
chip_gen: v7x
topology: tpu7x:2x2x1
jax: 0.10.0
libtpu: 0.0.40
codegen_flags: <defaults>
</compile_context>

<pallas_src>
import jax
import jax.numpy as jnp
from jax.experimental import pallas as pl
from jax.experimental.pallas import tpu as pltpu

INPUT_DIM = 2048
HIDDEN_DIM_1 = 256
HIDDEN_DIM_2 = 64
HIDDEN_DIM_2_PAD = 128   # padded to a full lane width
OUTPUT_DIM = 1


def _mlp_kernel(x_ref, w1_ref, b1_ref, w2_ref, b2_ref, w3_ref, b3_ref, o_ref):
    # Upcast the streamed fingerprint tile (int8/uint8/f32) to bf16 on the VPU;
    # exact for 0/1 inputs and hidden under the fc1 MXU work.
    x = x_ref[...].astype(jnp.bfloat16)

    # fc1 + ReLU (bf16 x / bf16 w1, f32 accumulation on the MXU)
    h1 = jnp.dot(x, w1_ref[...], preferred_element_type=jnp.float32)
    h1 = jnp.maximum(h1 + b1_ref[...], 0.0)

    # fc2 + ReLU (bf16 h1 / bf16 w2, f32 accumulation; cols >= 64 are zero pad)
    h2 = jnp.dot(h1.astype(jnp.bfloat16), w2_ref[...],
                 preferred_element_type=jnp.float32)
    h2 = jnp.maximum(h2 + b2_ref[...], 0.0)

    # fc3: N=1 output -> keep it off the MXU.  Transpose h2 (XLU), then a VPU
    # broadcast-multiply + sublane reduce yields a lane-dense (1, bt) row
    # directly (no masked width-1 stores).
    h2_t = h2.T                                              # [H2_PAD, bt]
    out = jnp.sum(h2_t * w3_ref[...], axis=0, keepdims=True) + b3_ref[...]
    o_ref[0] = out.astype(o_ref.dtype)                       # block is (1,1,bt)


def _pick_batch_tile(B, max_tile=1024):
    """Lane-dense batch tile: multiple of 128, capped at max_tile, and (for
    B > 128) sized so there are >= 2 grid steps for v7x's two TensorCores."""
    if B <= 128:
        return 128
    half = -(-B // 2)                            # cdiv(B, 2)
    return min(max_tile, ((half + 127) // 128) * 128)


def cost_predictor_forward(x, params, *, batch_tile=None):
    """Fused 3-layer MLP forward.

    x: [B, INPUT_DIM].  Feed int8/uint8 0/1 fingerprints for the fast path
    (x is streamed as-is and upcast in-kernel; no out-of-kernel cast/pad copy).
    """
    w1, b1, w2, b2, w3, b3 = params
    B, D = x.shape
    assert D == INPUT_DIM == w1.shape[0]

    if batch_tile is None:
        batch_tile = _pick_batch_tile(B)
    assert batch_tile % 128 == 0, "batch_tile must be a multiple of 128 (lane-dense output)"

    num_tiles = pl.cdiv(B, batch_tile)

    full = lambda arr: pl.BlockSpec(arr.shape, lambda i: (0,) * arr.ndim)

    out = pl.pallas_call(
        _mlp_kernel,
        out_shape=jax.ShapeDtypeStruct((num_tiles, 1, batch_tile), jnp.float32),
        grid_spec=pltpu.PrefetchScalarGridSpec(
            num_scalar_prefetch=0,
            grid=(num_tiles,),
            in_specs=[
                pl.BlockSpec((batch_tile, D), lambda i: (i, 0)),  # streamed x tile
                full(w1), full(b1),                               # resident weights
                full(w2), full(b2),
                full(w3), full(b3),
            ],
            out_specs=pl.BlockSpec((1, 1, batch_tile), lambda i: (i, 0, 0)),
        ),
        compiler_params=pltpu.CompilerParams(
            dimension_semantics=("parallel",),      # megacore-shardable on v7x
            vmem_limit_bytes=32 * 1024 * 1024,      # safe on v5e/v6e/v7x
        ),
    )(x, w1, b1, w2, b2, w3, b3)

    # (num_tiles, 1, batch_tile) -> (B, 1); rows >= B came from the unspecified
    # padding of the last partial x tile and are dropped here.
    return out.reshape(num_tiles * batch_tile, 1)[:B]


def init_params(key):
    """nn.Linear-style init (uniform +/- 1/sqrt(fan_in)), packed into the kernel
    layout: matmul weights stored [in, out] in bf16, biases f32 [1, out],
    hidden_dim_2 zero-padded to 128."""
    ks = jax.random.split(key, 6)

    def linear(kw, kb, fan_in, fan_out):
        bound = 1.0 / (fan_in ** 0.5)
        w = jax.random.uniform(kw, (fan_in, fan_out), jnp.float32, -bound, bound)
        b = jax.random.uniform(kb, (1, fan_out), jnp.float32, -bound, bound)
        return w, b

    w1, b1 = linear(ks[0], ks[1], INPUT_DIM, HIDDEN_DIM_1)
    w2, b2 = linear(ks[2], ks[3], HIDDEN_DIM_1, HIDDEN_DIM_2)
    w3, b3 = linear(ks[4], ks[5], HIDDEN_DIM_2, OUTPUT_DIM)

    pad2 = HIDDEN_DIM_2_PAD - HIDDEN_DIM_2
    w2p = jnp.pad(w2, ((0, 0), (0, pad2)))        # [256, 128]
    b2p = jnp.pad(b2, ((0, 0), (0, pad2)))        # [1, 128]
    w3p = jnp.pad(w3, ((0, pad2), (0, 0)))        # [128, 1]

    return (w1.astype(jnp.bfloat16), b1,
            w2p.astype(jnp.bfloat16), b2p,
            w3p, b3)


def reference_forward(x, params):
    """Pure-JAX reference with numerics matching the kernel (bf16 matmul inputs,
    f32 accumulation, exact f32 fc3, zero-padded hidden_dim_2)."""
    w1, b1, w2, b2, w3, b3 = params
    xb = x.astype(jnp.bfloat16)
    h1 = jnp.maximum(jnp.dot(xb, w1, preferred_element_type=jnp.float32) + b1, 0.0)
    h2 = jnp.maximum(jnp.dot(h1.astype(jnp.bfloat16), w2,
                             preferred_element_type=jnp.float32) + b2, 0.0)
    return jnp.dot(h2, w3, precision=jax.lax.Precision.HIGHEST,
                   preferred_element_type=jnp.float32) + b3


if __name__ == "__main__":
    key = jax.random.PRNGKey(0)
    k_param, k_x = jax.random.split(key)
    params = init_params(k_param)

    # Fingerprint batch: 0/1 bit-vectors (np.unpackbits-style), streamed as int8.
    # Ragged B=300 exercises the partial-last-tile path; tile=256 -> grid=(2,)
    # so the "parallel" axis has work for both v7x TensorCores.
    B = 300
    bits = jax.random.bernoulli(k_x, 0.5, (B, INPUT_DIM)).astype(jnp.int8)

    out = cost_predictor_forward(bits, params)
    out = jax.block_until_ready(out)

    ref = reference_forward(bits, params)
    assert out.shape == (B, OUTPUT_DIM)
    max_err = float(jnp.max(jnp.abs(out - ref)))
    assert jnp.allclose(out, ref, atol=2e-3, rtol=2e-3), (
        f"mismatch vs reference: max abs err {max_err:.3e}")

    print("KERNEL_OK")
</pallas_src>

<mosaic_0001>
module attributes {stable_mosaic.version = 11 : i64} {
  func.func @_mlp_kernel(%arg0: i32, %arg1: memref<256x2048xi8, #tpu.memory_space<vmem>>, %arg2: memref<2048x256xbf16, #tpu.memory_space<vmem>>, %arg3: memref<1x256xf32, #tpu.memory_space<vmem>>, %arg4: memref<256x128xbf16, #tpu.memory_space<vmem>>, %arg5: memref<1x128xf32, #tpu.memory_space<vmem>>, %arg6: memref<128x1xf32, #tpu.memory_space<vmem>>, %arg7: memref<1x1xf32, #tpu.memory_space<vmem>>, %arg8: memref<1x1x256xf32, #tpu.memory_space<vmem>>) attributes {dimension_semantics = [#tpu.dimension_semantics<parallel>], iteration_bounds = array<i64: 2>, scalar_prefetch = 0 : i64, scratch_operands = 0 : i64, tpu.core_type = #tpu.core_type<tc>, window_params = [{transform_indices = @transform_0, window_bounds = array<i64: 256, 2048>}, {pipeline_mode = #tpu.pipeline_mode<synchronous>, transform_indices = @transform_1, window_bounds = array<i64: 2048, 256>}, {pipeline_mode = #tpu.pipeline_mode<synchronous>, transform_indices = @transform_2, window_bounds = array<i64: 1, 256>}, {pipeline_mode = #tpu.pipeline_mode<synchronous>, transform_indices = @transform_3, window_bounds = array<i64: 256, 128>}, {pipeline_mode = #tpu.pipeline_mode<synchronous>, transform_indices = @transform_4, window_bounds = array<i64: 1, 128>}, {pipeline_mode = #tpu.pipeline_mode<synchronous>, transform_indices = @transform_5, window_bounds = array<i64: 128, 1>}, {pipeline_mode = #tpu.pipeline_mode<synchronous>, transform_indices = @transform_6, window_bounds = array<i64: 1, 1>}, {transform_indices = @transform_7, window_bounds = array<i64: 1, 1, 256>}]} {
    %c0 = arith.constant 0 : index
    %c0_0 = arith.constant 0 : index
    %0 = vector.load %arg1[%c0, %c0_0] : memref<256x2048xi8, #tpu.memory_space<vmem>>, vector<256x2048xi8>
    %1 = arith.sitofp %0 : vector<256x2048xi8> to vector<256x2048xbf16>
    %c0_1 = arith.constant 0 : index
    %c0_2 = arith.constant 0 : index
    %2 = vector.load %arg2[%c0_1, %c0_2] : memref<2048x256xbf16, #tpu.memory_space<vmem>>, vector<2048x256xbf16>
    %cst = arith.constant dense<0.000000e+00> : vector<256x256xf32>
    %3 = tpu.matmul %1, %2, %cst {dimension_numbers = #tpu.dot_dimension_numbers<[1], [0], [0], [1], [0, 0, 1, 1], [], []>} : vector<256x2048xbf16>, vector<2048x256xbf16>, vector<256x256xf32> -> vector<256x256xf32>
    %c0_3 = arith.constant 0 : index
    %c0_4 = arith.constant 0 : index
    %4 = vector.load %arg3[%c0_3, %c0_4] : memref<1x256xf32, #tpu.memory_space<vmem>>, vector<1x256xf32>
    %5 = vector.broadcast %4 : vector<1x256xf32> to vector<256x256xf32>
    %6 = arith.addf %3, %5 : vector<256x256xf32>
    %cst_5 = arith.constant 0.000000e+00 : f32
    %7 = vector.broadcast %cst_5 : f32 to vector<256x256xf32>
    %8 = arith.maximumf %6, %7 : vector<256x256xf32>
    %9 = arith.truncf %8 : vector<256x256xf32> to vector<256x256xbf16>
    %c0_6 = arith.constant 0 : index
    %c0_7 = arith.constant 0 : index
    %10 = vector.load %arg4[%c0_6, %c0_7] : memref<256x128xbf16, #tpu.memory_space<vmem>>, vector<256x128xbf16>
    %cst_8 = arith.constant dense<0.000000e+00> : vector<256x128xf32>
    %11 = tpu.matmul %9, %10, %cst_8 {dimension_numbers = #tpu.dot_dimension_numbers<[1], [0], [0], [1], [0, 0, 1, 1], [], []>} : vector<256x256xbf16>, vector<256x128xbf16>, vector<256x128xf32> -> vector<256x128xf32>
    %c0_9 = arith.constant 0 : index
    %c0_10 = arith.constant 0 : index
    %12 = vector.load %arg5[%c0_9, %c0_10] : memref<1x128xf32, #tpu.memory_space<vmem>>, vector<1x128xf32>
    %13 = vector.broadcast %12 : vector<1x128xf32> to vector<256x128xf32>
    %14 = arith.addf %11, %13 : vector<256x128xf32>
    %cst_11 = arith.constant 0.000000e+00 : f32
    %15 = vector.broadcast %cst_11 : f32 to vector<256x128xf32>
    %16 = arith.maximumf %14, %15 : vector<256x128xf32>
    %17 = tpu.transpose %16, [1, 0] : vector<256x128xf32> -> vector<128x256xf32>
    %c0_12 = arith.constant 0 : index
    %c0_13 = arith.constant 0 : index
    %18 = vector.load %arg6[%c0_12, %c0_13] : memref<128x1xf32, #tpu.memory_space<vmem>>, vector<128x1xf32>
    %19 = vector.broadcast %18 : vector<128x1xf32> to vector<128x256xf32>
    %20 = arith.mulf %17, %19 : vector<128x256xf32>
    %cst_14 = arith.constant dense<0.000000e+00> : vector<256xf32>
    %21 = vector.multi_reduction <add>, %20, %cst_14 [0] : vector<128x256xf32> to vector<256xf32>
    %22 = vector.shape_cast %21 : vector<256xf32> to vector<1x256xf32>
    %c0_15 = arith.constant 0 : index
    %c0_16 = arith.constant 0 : index
    %23 = vector.load %arg7[%c0_15, %c0_16] : memref<1x1xf32, #tpu.memory_space<vmem>>, vector<1x1xf32>
    %24 = vector.broadcast %23 : vector<1x1xf32> to vector<1x256xf32>
    %25 = arith.addf %22, %24 : vector<1x256xf32>
    %c0_17 = arith.constant 0 : index
    %c0_18 = arith.constant 0 : index
    %c0_19 = arith.constant 0 : index
    %26 = vector.load %arg8[%c0_17, %c0_18, %c0_19] : memref<1x1x256xf32, #tpu.memory_space<vmem>>, vector<1x1x256xf32>
    %27 = vector.shape_cast %26 : vector<1x1x256xf32> to vector<1x256xf32>
    %28 = vector.shape_cast %25 : vector<1x256xf32> to vector<1x1x256xf32>
    tpu.vector_store %arg8[%c0_17, %c0_18, %c0_19], %28 {strides = array<i32>} : memref<1x1x256xf32, #tpu.memory_space<vmem>>, vector<1x1x256xf32>,
    return
  }
  func.func @transform_0(%arg0: i32) -> (i32, i32) {
    %c0_i32 = arith.constant 0 : i32
    %c0_i32_0 = arith.constant 0 : i32
    return %arg0, %c0_i32 : i32, i32
  }
  func.func @transform_1(%arg0: i32) -> (i32, i32) {
    %c0_i32 = arith.constant 0 : i32
    %c0_i32_0 = arith.constant 0 : i32
    %c0_i32_1 = arith.constant 0 : i32
    return %c0_i32, %c0_i32_0 : i32, i32
  }
  func.func @transform_2(%arg0: i32) -> (i32, i32) {
    %c0_i32 = arith.constant 0 : i32
    %c0_i32_0 = arith.constant 0 : i32
    %c0_i32_1 = arith.constant 0 : i32
    return %c0_i32, %c0_i32_0 : i32, i32
  }
  func.func @transform_3(%arg0: i32) -> (i32, i32) {
    %c0_i32 = arith.constant 0 : i32
    %c0_i32_0 = arith.constant 0 : i32
    %c0_i32_1 = arith.constant 0 : i32
    return %c0_i32, %c0_i32_0 : i32, i32
  }
  func.func @transform_4(%arg0: i32) -> (i32, i32) {
    %c0_i32 = arith.constant 0 : i32
    %c0_i32_0 = arith.constant 0 : i32
    %c0_i32_1 = arith.constant 0 : i32
    return %c0_i32, %c0_i32_0 : i32, i32
  }
  func.func @transform_5(%arg0: i32) -> (i32, i32) {
    %c0_i32 = arith.constant 0 : i32
    %c0_i32_0 = arith.constant 0 : i32
    %c0_i32_1 = arith.constant 0 : i32
    return %c0_i32, %c0_i32_0 : i32, i32
  }
  func.func @transform_6(%arg0: i32) -> (i32, i32) {
    %c0_i32 = arith.constant 0 : i32
    %c0_i32_0 = arith.constant 0 : i32
    %c0_i32_1 = arith.constant 0 : i32
    return %c0_i32, %c0_i32_0 : i32, i32
  }
  func.func @transform_7(%arg0: i32) -> (i32, i32, i32) {
    %c0_i32 = arith.constant 0 : i32
    %c0_i32_0 = arith.constant 0 : i32
    %c0_i32_1 = arith.constant 0 : i32
    return %arg0, %c0_i32, %c0_i32_0 : i32, i32, i32
  }
}

</mosaic_0001>

<llo_original>
// kernel: tpu_custom_call.1
$region0: #{tpu_custom_call.1}
  #allocation0 [shape = 'u32[]', space=smem, size = 0x4, offset = 0x4, fixed_abs, tag = 'smem constant byte address 0x4 - core index']
  #allocation1 [shape = 'u32[144,128]{1,0:T(1,128)}', space=vmem, size = 0x12000, scoped, tag = 'internal scratch']
  #allocation2 [shape = 'f32[1,1]{1,0:T(1,128)S(1)}', space=vmem, size = 0x200, scoped, tag = 'scoped memory for tpu_custom_call.1']
  %s0 = inlined_call_operand.hbm [shape: s8[300,2048], index: 0, kind: input, shape index: {}]
  %s1 = inlined_call_operand.hbm [shape: bf16[2048,256], index: 1, kind: input, shape index: {}]
  %s2 = inlined_call_operand.vmem [shape: f32[1,256], index: 2, kind: input, shape index: {}]
  %s3 = inlined_call_operand.vmem [shape: bf16[256,128], index: 3, kind: input, shape index: {}]
  %s4 = inlined_call_operand.vmem [shape: f32[1,128], index: 4, kind: input, shape index: {}]
  %s5 = inlined_call_operand.vmem [shape: f32[128,1], index: 5, kind: input, shape index: {}]
  %s6 = inlined_call_operand.<no memory space> [shape: f32[1,1], index: 6, kind: input, shape index: {}]
  %s7 = inlined_call_operand.hbm [shape: f32[2,1,256], index: 7, kind: output, shape index: {}]
  %s8 = sld [smem:[#allocation0]]
  $region69: #{tpu_custom_call.1} parent=0
    _
  %s10 = ssub.s32 1, %s8
  %s11 = scalar_select 0, %s10, %s8
  %v12 = vstv %s6
  %13 = vst [vmem:[#allocation2] sm:$0x1] %v12
  $region1: #{tpu_custom_call.1} parent=0
    #allocation3 [shape = 'u8[1048576]{0}', space=vmem, size = 0x100000, scoped, tag = 'input window, operand 0']
    #allocation4 [shape = 's32[2]{0}', space=sflag, size = 0x8, scoped, tag = 'scoped memory for tpu_custom_call.1']
    #allocation5 [shape = 's32[2]{0}', space=sflag, size = 0x8, scoped, tag = 'scoped memory for tpu_custom_call.1']
    #allocation6 [shape = 'u8[1048576]{0}', space=vmem, size = 0x100000, scoped, tag = 'input window, operand 1, single buffered']
    #allocation7 [shape = 's32[1]{0}', space=sflag, size = 0x4, scoped, tag = 'scoped memory for tpu_custom_call.1']
    #allocation8 [shape = 'u8[2048]{0}', space=vmem, size = 0x800, scoped, tag = 'output window, operand 0']
    %14 = vsyncpa [#allocation4], 0
    %s15 = scalar_lea.sflag [#allocation4], 1
    %16 = vsyncpa %s15, 0
    %17 = vsyncpa [#allocation7], 0
    %18 = vsyncpa [#allocation5], 0
    %s19 = scalar_lea.sflag [#allocation5], 1
    %20 = vsyncpa %s19, 0
    loop: start=0, step=1, limit=4
    $region2: #{tpu_custom_call.1} parent=1 // loop_pre_header
      _
    $region3: #{tpu_custom_call.1} parent=1 // loop_header
      %s22 = sphi 0, %s26
      %p23 = scmp.ge.s32.totalorder %s22, 4
      %s32 = sphi 0, %s34
      %s35 = sphi 0, %s32
      %s36 = sphi 0, %s35
      %s52 = sphi 0, %s36
      %s56 = sphi 0, %s56
      %s58 = sphi 0, %s56
      %s59 = sphi 0, %s58
      %s73 = sphi 0, %s59
      %s77 = sphi 0, %s77
      %s79 = sphi 0, %s77
      %s80 = sphi 0, %s79
      %s94 = sphi 0, %s80
      %s98 = sphi 0, %s98
      %s100 = sphi 0, %s98
      %s101 = sphi 0, %s100
      %s115 = sphi 0, %s101
      %s119 = sphi 0, %s119
      %s121 = sphi 0, %s119
      %s122 = sphi 0, %s121
      %s136 = sphi 0, %s122
      %s140 = sphi 0, %s140
      %s142 = sphi 0, %s140
      %s143 = sphi 0, %s142
      %s157 = sphi 0, %s143
      %s161 = sphi 0, %s161
      %s163 = sphi 0, %s161
      %s164 = sphi 0, %s163
      %s178 = sphi 0, %s164
      %s184 = sphi 0, %s186
      %s187 = sphi 0, %s184
      %s188 = sphi 0, %s187
      %s204 = sphi 0, %s188
    $region4: #{tpu_custom_call.1} parent=1 // loop_header_branch
      %25 = sbr.rel (%p23) target = $region8
    $region5: #{tpu_custom_call.1} parent=1 // loop_body
      %s27 = ssub.s32 %s22, 1
      %s28 = ssub.s32 %s22, 2
      %s29 = sadd.s32 %s22, 1
      %s30 = ssub.s32 %s22, %s29
      %p31 = scmp.eq.s32.totalorder %s30, 0
      %s33 = sadd.s32 %s32, 1
      %s34 = scalar_select %p31, %s32, %s33
      %p37 = pneg %p31
      %p38 = scmp.eq.s32.totalorder %s22, 1
      %p39 = por %p37, %p38
      %p40 = scmp.ne.s32.totalorder %s32, %s35
      %p41 = scmp.eq.s32.totalorder %s22, 0
      %p42 = por %p40, %p41
      %p43 = scmp.ne.s32.totalorder %s32, %s35
      %p44 = scmp.eq.s32.totalorder %s27, 1
      %p45 = por %p43, %p44
      %p46 = scmp.ne.s32.totalorder %s35, %s36
      %p47 = scmp.eq.s32.totalorder %s27, 0
      %p48 = por %p46, %p47
      %p49 = scmp.ne.s32.totalorder %s35, %s36
      %p50 = scmp.eq.s32.totalorder %s28, 1
      %p51 = por %p49, %p50
      %p53 = scmp.ne.s32.totalorder %s36, %s52
      %p54 = scmp.eq.s32.totalorder %s28, 0
      %p55 = por %p53, %p54
      %s57 = sadd.s32 %s56, 1
      %p60 = scmp.eq.s32.totalorder %s22, 1
      %p61 = scmp.ne.s32.totalorder %s56, %s58
      %p62 = scmp.eq.s32.totalorder %s22, 0
      %p63 = por %p61, %p62
      %p64 = scmp.ne.s32.totalorder %s56, %s58
      %p65 = scmp.eq.s32.totalorder %s27, 1
      %p66 = por %p64, %p65
      %p67 = scmp.ne.s32.totalorder %s58, %s59
      %p68 = scmp.eq.s32.totalorder %s27, 0
      %p69 = por %p67, %p68
      %p70 = scmp.ne.s32.totalorder %s58, %s59
      %p71 = scmp.eq.s32.totalorder %s28, 1
      %p72 = por %p70, %p71
      %p74 = scmp.ne.s32.totalorder %s59, %s73
      %p75 = scmp.eq.s32.totalorder %s28, 0
      %p76 = por %p74, %p75
      %s78 = sadd.s32 %s77, 1
      %p81 = scmp.eq.s32.totalorder %s22, 1
      %p82 = scmp.ne.s32.totalorder %s77, %s79
      %p83 = scmp.eq.s32.totalorder %s22, 0
      %p84 = por %p82, %p83
      %p85 = scmp.ne.s32.totalorder %s77, %s79
      %p86 = scmp.eq.s32.totalorder %s27, 1
      %p87 = por %p85, %p86
      %p88 = scmp.ne.s32.totalorder %s79, %s80
      %p89 = scmp.eq.s32.totalorder %s27, 0
      %p90 = por %p88, %p89
      %p91 = scmp.ne.s32.totalorder %s79, %s80
      %p92 = scmp.eq.s32.totalorder %s28, 1
      %p93 = por %p91, %p92
      %p95 = scmp.ne.s32.totalorder %s80, %s94
      %p96 = scmp.eq.s32.totalorder %s28, 0
      %p97 = por %p95, %p96
      %s99 = sadd.s32 %s98, 1
      %p102 = scmp.eq.s32.totalorder %s22, 1
      %p103 = scmp.ne.s32.totalorder %s98, %s100
      %p104 = scmp.eq.s32.totalorder %s22, 0
      %p105 = por %p103, %p104
      %p106 = scmp.ne.s32.totalorder %s98, %s100
      %p107 = scmp.eq.s32.totalorder %s27, 1
      %p108 = por %p106, %p107
      %p109 = scmp.ne.s32.totalorder %s100, %s101
      %p110 = scmp.eq.s32.totalorder %s27, 0
      %p111 = por %p109, %p110
      %p112 = scmp.ne.s32.totalorder %s100, %s101
      %p113 = scmp.eq.s32.totalorder %s28, 1
      %p114 = por %p112, %p113
      %p116 = scmp.ne.s32.totalorder %s101, %s115
      %p117 = scmp.eq.s32.totalorder %s28, 0
      %p118 = por %p116, %p117
      %s120 = sadd.s32 %s119, 1
      %p123 = scmp.eq.s32.totalorder %s22, 1
      %p124 = scmp.ne.s32.totalorder %s119, %s121
      %p125 = scmp.eq.s32.totalorder %s22, 0
      %p126 = por %p124, %p125
      %p127 = scmp.ne.s32.totalorder %s119, %s121
      %p128 = scmp.eq.s32.totalorder %s27, 1
      %p129 = por %p127, %p128
      %p130 = scmp.ne.s32.totalorder %s121, %s122
      %p131 = scmp.eq.s32.totalorder %s27, 0
      %p132 = por %p130, %p131
      %p133 = scmp.ne.s32.totalorder %s121, %s122
      %p134 = scmp.eq.s32.totalorder %s28, 1
      %p135 = por %p133, %p134
      %p137 = scmp.ne.s32.totalorder %s122, %s136
      %p138 = scmp.eq.s32.totalorder %s28, 0
      %p139 = por %p137, %p138
      %s141 = sadd.s32 %s140, 1
      %p144 = scmp.eq.s32.totalorder %s22, 1
      %p145 = scmp.ne.s32.totalorder %s140, %s142
      %p146 = scmp.eq.s32.totalorder %s22, 0
      %p147 = por %p145, %p146
      %p148 = scmp.ne.s32.totalorder %s140, %s142
      %p149 = scmp.eq.s32.totalorder %s27, 1
      %p150 = por %p148, %p149
      %p151 = scmp.ne.s32.totalorder %s142, %s143
      %p152 = scmp.eq.s32.totalorder %s27, 0
      %p153 = por %p151, %p152
      %p154 = scmp.ne.s32.totalorder %s142, %s143
      %p155 = scmp.eq.s32.totalorder %s28, 1
      %p156 = por %p154, %p155
      %p158 = scmp.ne.s32.totalorder %s143, %s157
      %p159 = scmp.eq.s32.totalorder %s28, 0
      %p160 = por %p158, %p159
      %s162 = sadd.s32 %s161, 1
      %p165 = scmp.eq.s32.totalorder %s22, 1
      %p166 = scmp.ne.s32.totalorder %s161, %s163
      %p167 = scmp.eq.s32.totalorder %s22, 0
      %p168 = por %p166, %p167
      %p169 = scmp.ne.s32.totalorder %s161, %s163
      %p170 = scmp.eq.s32.totalorder %s27, 1
      %p171 = por %p169, %p170
      %p172 = scmp.ne.s32.totalorder %s163, %s164
      %p173 = scmp.eq.s32.totalorder %s27, 0
      %p174 = por %p172, %p173
      %p175 = scmp.ne.s32.totalorder %s163, %s164
      %p176 = scmp.eq.s32.totalorder %s28, 1
      %p177 = por %p175, %p176
      %p179 = scmp.ne.s32.totalorder %s164, %s178
      %p180 = scmp.eq.s32.totalorder %s28, 0
      %p181 = por %p179, %p180
      %s182 = ssub.s32 %s22, %s29
      %p183 = scmp.eq.s32.totalorder %s182, 0
      %s185 = sadd.s32 %s184, 1
      %s186 = scalar_select %p183, %s184, %s185
      %p189 = pneg %p183
      %p190 = scmp.eq.s32.totalorder %s22, 1
      %p191 = por %p189, %p190
      %p192 = scmp.ne.s32.totalorder %s184, %s187
      %p193 = scmp.eq.s32.totalorder %s22, 0
      %p194 = por %p192, %p193
      %p195 = scmp.ne.s32.totalorder %s184, %s187
      %p196 = scmp.eq.s32.totalorder %s27, 1
      %p197 = por %p195, %p196
      %p198 = scmp.ne.s32.totalorder %s187, %s188
      %p199 = scmp.eq.s32.totalorder %s27, 0
      %p200 = por %p198, %p199
      %p201 = scmp.ne.s32.totalorder %s187, %s188
      %p202 = scmp.eq.s32.totalorder %s28, 1
      %p203 = por %p201, %p202
      %p205 = scmp.ne.s32.totalorder %s188, %s204
      %p206 = scmp.eq.s32.totalorder %s28, 0
      %p207 = por %p205, %p206
      %p208 = scmp.le.s32.totalorder 1, %s22
      %p209 = scmp.lt.s32.totalorder %s22, 3
      %p210 = pnand %p208, %p209
      %p211 = pneg %p210
      // Predicated region
      $region9: #{tpu_custom_call.1} parent=5 // pred_check
        _
      $region10: #{tpu_custom_call.1} parent=5 // pred_check_branch
        %213 = sbr.rel (%p210) target = $region12
      $region11: #{tpu_custom_call.1} parent=5 // pred_region
        %s214 = ssub.s32 %s22, 1
        // Predicated region
        $region13: #{tpu_custom_call.1} parent=11 // pred_check
          %p215 = pneg %p69
        $region14: #{tpu_custom_call.1} parent=11 // pred_check_branch
          %217 = sbr.rel (%p215) target = $region16
        $region15: #{tpu_custom_call.1} parent=11 // pred_region
          %s219 = ssub.s32 32768, 32768
          %220 = vsyncadd [#allocation7], %s219
          %s221 = sshll.u32 [#allocation6], 4
          %s222 = int_to_ptr.vmem [resolvable:$true] %s221
          %227 = dma.hbm_to_vmem [thread:$0]  %s1, 32768, %s222, [#allocation7], 128, 128, 8
        $region16: #{tpu_custom_call.1} parent=11 // pred_fallthru
          _
        // Predicated region
        $region17: #{tpu_custom_call.1} parent=11 // pred_check
          %p228 = pneg %p90
        $region18: #{tpu_custom_call.1} parent=11 // pred_check_branch
          %230 = sbr.rel (%p228) target = $region20
        $region19: #{tpu_custom_call.1} parent=11 // pred_region
          _
        $region20: #{tpu_custom_call.1} parent=11 // pred_fallthru
          _
        // Predicated region
        $region21: #{tpu_custom_call.1} parent=11 // pred_check
          %p231 = pneg %p111
        $region22: #{tpu_custom_call.1} parent=11 // pred_check_branch
          %233 = sbr.rel (%p231) target = $region24
        $region23: #{tpu_custom_call.1} parent=11 // pred_region
          _
        $region24: #{tpu_custom_call.1} parent=11 // pred_fallthru
          _
        // Predicated region
        $region25: #{tpu_custom_call.1} parent=11 // pred_check
          %p234 = pneg %p132
        $region26: #{tpu_custom_call.1} parent=11 // pred_check_branch
          %236 = sbr.rel (%p234) target = $region28
        $region27: #{tpu_custom_call.1} parent=11 // pred_region
          _
        $region28: #{tpu_custom_call.1} parent=11 // pred_fallthru
          _
        // Predicated region
        $region29: #{tpu_custom_call.1} parent=11 // pred_check
          %p237 = pneg %p153
        $region30: #{tpu_custom_call.1} parent=11 // pred_check_branch
          %239 = sbr.rel (%p237) target = $region32
        $region31: #{tpu_custom_call.1} parent=11 // pred_region
          _
        $region32: #{tpu_custom_call.1} parent=11 // pred_fallthru
          _
        // Predicated region
        $region33: #{tpu_custom_call.1} parent=11 // pred_check
          %p240 = pneg %p174
        $region34: #{tpu_custom_call.1} parent=11 // pred_check_branch
          %242 = sbr.rel (%p240) target = $region36
        $region35: #{tpu_custom_call.1} parent=11 // pred_region
          _
        $region36: #{tpu_custom_call.1} parent=11 // pred_fallthru
          _
      $region12: #{tpu_custom_call.1} parent=5 // pred_fallthru
        _
      %p243 = scmp.lt.s32.totalorder %s22, 2
      // Predicated region
      $region37: #{tpu_custom_call.1} parent=5 // pred_check
        %p244 = pneg %p243
      $region38: #{tpu_custom_call.1} parent=5 // pred_check_branch
        %246 = sbr.rel (%p244) target = $region40
      $region39: #{tpu_custom_call.1} parent=5 // pred_region
        // Predicated region
        $region41: #{tpu_custom_call.1} parent=39 // pred_check
          %p247 = pneg %p42
        $region42: #{tpu_custom_call.1} parent=39 // pred_check_branch
          %249 = sbr.rel (%p247) target = $region44
        $region43: #{tpu_custom_call.1} parent=39 // pred_region
          %s250 = sand.u32 %s32, 1
          %s251 = scalar_lea.sflag [#allocation4], %s250
          %s252 = sand.u32 %s32, 1
          %s253 = smul.addr %s252, 1024
          %s254 = scalar_lea.vmem [#allocation3], %s253
          %s255 = smul.u32 32, %s22
          %s256 = ssub.s32 38, %s255
          %p257 = scmp.lt.s32.totalorder %s256, 32
          %s258 = scalar_select %p257, %s256, 32
          %s259 = smul.u32 32, %s258
          %s260 = smul.u32 %s259, 16
          %s262 = ssub.s32 16384, %s260
          %263 = vsyncadd %s251, %s262
          %p264 = scmp.ne.s32.totalorder 0, %s260
          %s265 = smul.addr %s255, 16
          %s266 = smul.addr %s265, 32
          %s267 = scalar_lea.hbm %s0, %s266
          %s268 = smul.u32 32, %s258
          %s269 = sshll.u32 %s254, 4
          %s270 = int_to_ptr.vmem [resolvable:$true] %s269
          %s271 = sshll.u32 %s268, 4
          %275 = dma.hbm_to_vmem [thread:$0]  (%p264), %s267, %s271, %s270, %s251, 512, 512, 32
        $region44: #{tpu_custom_call.1} parent=39 // pred_fallthru
          _
      $region40: #{tpu_custom_call.1} parent=5 // pred_fallthru
        _
      %p276 = scmp.le.s32.totalorder 1, %s22
      %p277 = scmp.lt.s32.totalorder %s22, 3
      %p278 = pnand %p276, %p277
      %p279 = pneg %p278
      // Predicated region
      $region45: #{tpu_custom_call.1} parent=5 // pred_check
        _
      $region46: #{tpu_custom_call.1} parent=5 // pred_check_branch
        %281 = sbr.rel (%p278) target = $region48
      $region47: #{tpu_custom_call.1} parent=5 // pred_region
        %s282 = ssub.s32 %s22, 1
        %s283 = sand.u32 %s35, 1
        %s284 = scalar_lea.sflag [#allocation4], %s283
        %s285 = sand.u32 %s35, 1
        %s286 = smul.addr %s285, 1024
        %s287 = scalar_lea.vmem [#allocation3], %s286
        // Predicated region
        $region49: #{tpu_custom_call.1} parent=47 // pred_check
          %p288 = pneg %p48
        $region50: #{tpu_custom_call.1} parent=47 // pred_check_branch
          %290 = sbr.rel (%p288) target = $region52
        $region51: #{tpu_custom_call.1} parent=47 // pred_region
          %291 = dma.done %s284, 16384
        $region52: #{tpu_custom_call.1} parent=47 // pred_fallthru
          _
        // Predicated region
        $region53: #{tpu_custom_call.1} parent=47 // pred_check
          %p292 = pneg %p69
        $region54: #{tpu_custom_call.1} parent=47 // pred_check_branch
          %294 = sbr.rel (%p292) target = $region56
        $region55: #{tpu_custom_call.1} parent=47 // pred_region
          %295 = dma.done [#allocation7], 32768
        $region56: #{tpu_custom_call.1} parent=47 // pred_fallthru
          _
        %s296 = sand.u32 %s35, 1
        %s297 = scalar_lea.sflag [#allocation4], %s296
        %s298 = sand.u32 %s35, 1
        %s299 = smul.addr %s298, 1024
        %s300 = scalar_lea.vmem [#allocation3], %s299
        %p301 = pneg %p48
        %p302 = pneg %p45
        %p303 = pneg %p69
        %p304 = pneg %p66
        %p305 = pneg %p90
        %p306 = pneg %p87
        %p307 = pneg %p111
        %p308 = pneg %p108
        %p309 = pneg %p132
        %p310 = pneg %p129
        %p311 = pneg %p153
        %p312 = pneg %p150
        %p313 = pneg %p174
        %p314 = pneg %p171
        %p315 = pneg %p200
        %p316 = pneg %p197
        %s317 = sand.u32 %s187, 1
        %s318 = scalar_lea.sflag [#allocation5], %s317
        %s319 = sand.u32 %s187, 1
        %s320 = smul.addr %s319, 2
        %s321 = scalar_lea.vmem [#allocation8], %s320
        %s322 = smul.u32 32, %s27
        %s323 = ssub.s32 38, %s322
        %p324 = scmp.lt.s32.totalorder %s323, 32
        %s325 = scalar_select %p324, %s323, 32
        %s326 = smul.u32 32, %s325
        %s327 = smul.u32 %s326, 16
        %v329 = vld [vmem:[%s287] sm:$0xff]
        %v330 = vld [vmem:[%s287 + $0x8] sm:$0xff]
        %v331 = vld [vmem:[%s287 + $0x10] sm:$0xff]
        %v332 = vld [vmem:[%s287 + $0x18] sm:$0xff]
        %v333 = vld [vmem:[%s287 + $0x20] sm:$0xff]
        %v334 = vld [vmem:[%s287 + $0x28] sm:$0xff]
        %v335 = vld [vmem:[%s287 + $0x30] sm:$0xff]
        %v336 = vld [vmem:[%s287 + $0x38] sm:$0xff]
        %v337 = vld [vmem:[%s287 + $0x40] sm:$0xff]
        %v338 = vld [vmem:[%s287 + $0x48] sm:$0xff]
        %v339 = vld [vmem:[%s287 + $0x50] sm:$0xff]
        %v340 = vld [vmem:[%s287 + $0x58] sm:$0xff]
        %v341 = vld [vmem:[%s287 + $0x60] sm:$0xff]
        %v342 = vld [vmem:[%s287 + $0x68] sm:$0xff]
        %v343 = vld [vmem:[%s287 + $0x70] sm:$0xff]
        %v344 = vld [vmem:[%s287 + $0x78] sm:$0xff]
        %v345 = vld [vmem:[%s287 + $0x80] sm:$0xff]
        %v346 = vld [vmem:[%s287 + $0x88] sm:$0xff]
        %v347 = vld [vmem:[%s287 + $0x90] sm:$0xff]
        %v348 = vld [vmem:[%s287 + $0x98] sm:$0xff]
        %v349 = vld [vmem:[%s287 + $0xa0] sm:$0xff]
        %v350 = vld [vmem:[%s287 + $0xa8] sm:$0xff]
        %v351 = vld [vmem:[%s287 + $0xb0] sm:$0xff]
        %v352 = vld [vmem:[%s287 + $0xb8] sm:$0xff]
        %v353 = vld [vmem:[%s287 + $0xc0] sm:$0xff]
        %v354 = vld [vmem:[%s287 + $0xc8] sm:$0xff]
        %v355 = vld [vmem:[%s287 + $0xd0] sm:$0xff]
        %v356 = vld [vmem:[%s287 + $0xd8] sm:$0xff]
        %v357 = vld [vmem:[%s287 + $0xe0] sm:$0xff]
        %v358 = vld [vmem:[%s287 + $0xe8] sm:$0xff]
        %v359 = vld [vmem:[%s287 + $0xf0] sm:$0xff]
        %v360 = vld [vmem:[%s287 + $0xf8] sm:$0xff]
        %v361 = vld [vmem:[%s287 + $0x100] sm:$0xff]
        %v362 = vld [vmem:[%s287 + $0x108] sm:$0xff]
        %v363 = vld [vmem:[%s287 + $0x110] sm:$0xff]
        %v364 = vld [vmem:[%s287 + $0x118] sm:$0xff]
        %v365 = vld [vmem:[%s287 + $0x120] sm:$0xff]
        %v366 = vld [vmem:[%s287 + $0x128] sm:$0xff]
        %v367 = vld [vmem:[%s287 + $0x130] sm:$0xff]
        %v368 = vld [vmem:[%s287 + $0x138] sm:$0xff]
        %v369 = vld [vmem:[%s287 + $0x140] sm:$0xff]
        %v370 = vld [vmem:[%s287 + $0x148] sm:$0xff]
        %v371 = vld [vmem:[%s287 + $0x150] sm:$0xff]
        %v372 = vld [vmem:[%s287 + $0x158] sm:$0xff]
        %v373 = vld [vmem:[%s287 + $0x160] sm:$0xff]
        %v374 = vld [vmem:[%s287 + $0x168] sm:$0xff]
        %v375 = vld [vmem:[%s287 + $0x170] sm:$0xff]
        %v376 = vld [vmem:[%s287 + $0x178] sm:$0xff]
        %v377 = vld [vmem:[%s287 + $0x180] sm:$0xff]
        %v378 = vld [vmem:[%s287 + $0x188] sm:$0xff]
        %v379 = vld [vmem:[%s287 + $0x190] sm:$0xff]
        %v380 = vld [vmem:[%s287 + $0x198] sm:$0xff]
        %v381 = vld [vmem:[%s287 + $0x1a0] sm:$0xff]
        %v382 = vld [vmem:[%s287 + $0x1a8] sm:$0xff]
        %v383 = vld [vmem:[%s287 + $0x1b0] sm:$0xff]
        %v384 = vld [vmem:[%s287 + $0x1b8] sm:$0xff]
        %v385 = vld [vmem:[%s287 + $0x1c0] sm:$0xff]
        %v386 = vld [vmem:[%s287 + $0x1c8] sm:$0xff]
        %v387 = vld [vmem:[%s287 + $0x1d0] sm:$0xff]
        %v388 = vld [vmem:[%s287 + $0x1d8] sm:$0xff]
        %v389 = vld [vmem:[%s287 + $0x1e0] sm:$0xff]
        %v390 = vld [vmem:[%s287 + $0x1e8] sm:$0xff]
        %v391 = vld [vmem:[%s287 + $0x1f0] sm:$0xff]
        %v392 = vld [vmem:[%s287 + $0x1f8] sm:$0xff]
        %v393 = vld [vmem:[%s287 + $0x200] sm:$0xff]
        %v394 = vld [vmem:[%s287 + $0x208] sm:$0xff]
        %v395 = vld [vmem:[%s287 + $0x210] sm:$0xff]
        %v396 = vld [vmem:[%s287 + $0x218] sm:$0xff]
        %v397 = vld [vmem:[%s287 + $0x220] sm:$0xff]
        %v398 = vld [vmem:[%s287 + $0x228] sm:$0xff]
        %v399 = vld [vmem:[%s287 + $0x230] sm:$0xff]
        %v400 = vld [vmem:[%s287 + $0x238] sm:$0xff]
        %v401 = vld [vmem:[%s287 + $0x240] sm:$0xff]
        %v402 = vld [vmem:[%s287 + $0x248] sm:$0xff]
        %v403 = vld [vmem:[%s287 + $0x250] sm:$0xff]
        %v404 = vld [vmem:[%s287 + $0x258] sm:$0xff]
        %v405 = vld [vmem:[%s287 + $0x260] sm:$0xff]
        %v406 = vld [vmem:[%s287 + $0x268] sm:$0xff]
        %v407 = vld [vmem:[%s287 + $0x270] sm:$0xff]
        %v408 = vld [vmem:[%s287 + $0x278] sm:$0xff]
        %v409 = vld [vmem:[%s287 + $0x280] sm:$0xff]
        %v410 = vld [vmem:[%s287 + $0x288] sm:$0xff]
        %v411 = vld [vmem:[%s287 + $0x290] sm:$0xff]
        %v412 = vld [vmem:[%s287 + $0x298] sm:$0xff]
        %v413 = vld [vmem:[%s287 + $0x2a0] sm:$0xff]
        %v414 = vld [vmem:[%s287 + $0x2a8] sm:$0xff]
        %v415 = vld [vmem:[%s287 + $0x2b0] sm:$0xff]
        %v416 = vld [vmem:[%s287 + $0x2b8] sm:$0xff]
        %v417 = vld [vmem:[%s287 + $0x2c0] sm:$0xff]
        %v418 = vld [vmem:[%s287 + $0x2c8] sm:$0xff]
        %v419 = vld [vmem:[%s287 + $0x2d0] sm:$0xff]
        %v420 = vld [vmem:[%s287 + $0x2d8] sm:$0xff]
        %v421 = vld [vmem:[%s287 + $0x2e0] sm:$0xff]
        %v422 = vld [vmem:[%s287 + $0x2e8] sm:$0xff]
        %v423 = vld [vmem:[%s287 + $0x2f0] sm:$0xff]
        %v424 = vld [vmem:[%s287 + $0x2f8] sm:$0xff]
        %v425 = vld [vmem:[%s287 + $0x300] sm:$0xff]
        %v426 = vld [vmem:[%s287 + $0x308] sm:$0xff]
        %v427 = vld [vmem:[%s287 + $0x310] sm:$0xff]
        %v428 = vld [vmem:[%s287 + $0x318] sm:$0xff]
        %v429 = vld [vmem:[%s287 + $0x320] sm:$0xff]
        %v430 = vld [vmem:[%s287 + $0x328] sm:$0xff]
        %v431 = vld [vmem:[%s287 + $0x330] sm:$0xff]
        %v432 = vld [vmem:[%s287 + $0x338] sm:$0xff]
        %v433 = vld [vmem:[%s287 + $0x340] sm:$0xff]
        %v434 = vld [vmem:[%s287 + $0x348] sm:$0xff]
        %v435 = vld [vmem:[%s287 + $0x350] sm:$0xff]
        %v436 = vld [vmem:[%s287 + $0x358] sm:$0xff]
        %v437 = vld [vmem:[%s287 + $0x360] sm:$0xff]
        %v438 = vld [vmem:[%s287 + $0x368] sm:$0xff]
        %v439 = vld [vmem:[%s287 + $0x370] sm:$0xff]
        %v440 = vld [vmem:[%s287 + $0x378] sm:$0xff]
        %v441 = vld [vmem:[%s287 + $0x380] sm:$0xff]
        %v442 = vld [vmem:[%s287 + $0x388] sm:$0xff]
        %v443 = vld [vmem:[%s287 + $0x390] sm:$0xff]
        %v444 = vld [vmem:[%s287 + $0x398] sm:$0xff]
        %v445 = vld [vmem:[%s287 + $0x3a0] sm:$0xff]
        %v446 = vld [vmem:[%s287 + $0x3a8] sm:$0xff]
        %v447 = vld [vmem:[%s287 + $0x3b0] sm:$0xff]
        %v448 = vld [vmem:[%s287 + $0x3b8] sm:$0xff]
        %v449 = vld [vmem:[%s287 + $0x3c0] sm:$0xff]
        %v450 = vld [vmem:[%s287 + $0x3c8] sm:$0xff]
        %v451 = vld [vmem:[%s287 + $0x3d0] sm:$0xff]
        %v452 = vld [vmem:[%s287 + $0x3d8] sm:$0xff]
        %v453 = vld [vmem:[%s287 + $0x3e0] sm:$0xff]
        %v454 = vld [vmem:[%s287 + $0x3e8] sm:$0xff]
        %v455 = vld [vmem:[%s287 + $0x3f0] sm:$0xff]
        %v456 = vld [vmem:[%s287 + $0x3f8] sm:$0xff]
        %v457 = vunpack.c.l.s8.bf16 %v329
        %v458 = vunpack.c.h.s8.bf16 %v329
        %v459 = vunpack.c.l.s8.bf16 %v330
        %v460 = vunpack.c.h.s8.bf16 %v330
        %v461 = vunpack.c.l.s8.bf16 %v331
        %v462 = vunpack.c.h.s8.bf16 %v331
        %v463 = vunpack.c.l.s8.bf16 %v332
        %v464 = vunpack.c.h.s8.bf16 %v332
        %v465 = vunpack.c.l.s8.bf16 %v333
        %v466 = vunpack.c.h.s8.bf16 %v333
        %v467 = vunpack.c.l.s8.bf16 %v334
        %v468 = vunpack.c.h.s8.bf16 %v334
        %v469 = vunpack.c.l.s8.bf16 %v335
        %v470 = vunpack.c.h.s8.bf16 %v335
        %v471 = vunpack.c.l.s8.bf16 %v336
        %v472 = vunpack.c.h.s8.bf16 %v336
        %v473 = vunpack.c.l.s8.bf16 %v337
        %v474 = vunpack.c.h.s8.bf16 %v337
        %v475 = vunpack.c.l.s8.bf16 %v338
        %v476 = vunpack.c.h.s8.bf16 %v338
        %v477 = vunpack.c.l.s8.bf16 %v339
        %v478 = vunpack.c.h.s8.bf16 %v339
        %v479 = vunpack.c.l.s8.bf16 %v340
        %v480 = vunpack.c.h.s8.bf16 %v340
        %v481 = vunpack.c.l.s8.bf16 %v341
        %v482 = vunpack.c.h.s8.bf16 %v341
        %v483 = vunpack.c.l.s8.bf16 %v342
        %v484 = vunpack.c.h.s8.bf16 %v342
        %v485 = vunpack.c.l.s8.bf16 %v343
        %v486 = vunpack.c.h.s8.bf16 %v343
        %v487 = vunpack.c.l.s8.bf16 %v344
        %v488 = vunpack.c.h.s8.bf16 %v344
        %v489 = vunpack.c.l.s8.bf16 %v345
        %v490 = vunpack.c.h.s8.bf16 %v345
        %v491 = vunpack.c.l.s8.bf16 %v346
        %v492 = vunpack.c.h.s8.bf16 %v346
        %v493 = vunpack.c.l.s8.bf16 %v347
        %v494 = vunpack.c.h.s8.bf16 %v347
        %v495 = vunpack.c.l.s8.bf16 %v348
        %v496 = vunpack.c.h.s8.bf16 %v348
        %v497 = vunpack.c.l.s8.bf16 %v349
        %v498 = vunpack.c.h.s8.bf16 %v349
        %v499 = vunpack.c.l.s8.bf16 %v350
        %v500 = vunpack.c.h.s8.bf16 %v350
        %v501 = vunpack.c.l.s8.bf16 %v351
        %v502 = vunpack.c.h.s8.bf16 %v351
        %v503 = vunpack.c.l.s8.bf16 %v352
        %v504 = vunpack.c.h.s8.bf16 %v352
        %v505 = vunpack.c.l.s8.bf16 %v353
        %v506 = vunpack.c.h.s8.bf16 %v353
        %v507 = vunpack.c.l.s8.bf16 %v354
        %v508 = vunpack.c.h.s8.bf16 %v354
        %v509 = vunpack.c.l.s8.bf16 %v355
        %v510 = vunpack.c.h.s8.bf16 %v355
        %v511 = vunpack.c.l.s8.bf16 %v356
        %v512 = vunpack.c.h.s8.bf16 %v356
        %v513 = vunpack.c.l.s8.bf16 %v357
        %v514 = vunpack.c.h.s8.bf16 %v357
        %v515 = vunpack.c.l.s8.bf16 %v358
        %v516 = vunpack.c.h.s8.bf16 %v358
        %v517 = vunpack.c.l.s8.bf16 %v359
        %v518 = vunpack.c.h.s8.bf16 %v359
        %v519 = vunpack.c.l.s8.bf16 %v360
        %v520 = vunpack.c.h.s8.bf16 %v360
        %v521 = vunpack.c.l.s8.bf16 %v361
        %v522 = vunpack.c.h.s8.bf16 %v361
        %v523 = vunpack.c.l.s8.bf16 %v362
        %v524 = vunpack.c.h.s8.bf16 %v362
        %v525 = vunpack.c.l.s8.bf16 %v363
        %v526 = vunpack.c.h.s8.bf16 %v363
        %v527 = vunpack.c.l.s8.bf16 %v364
        %v528 = vunpack.c.h.s8.bf16 %v364
        %v529 = vunpack.c.l.s8.bf16 %v365
        %v530 = vunpack.c.h.s8.bf16 %v365
        %v531 = vunpack.c.l.s8.bf16 %v366
        %v532 = vunpack.c.h.s8.bf16 %v366
        %v533 = vunpack.c.l.s8.bf16 %v367
        %v534 = vunpack.c.h.s8.bf16 %v367
        %v535 = vunpack.c.l.s8.bf16 %v368
        %v536 = vunpack.c.h.s8.bf16 %v368
        %v537 = vunpack.c.l.s8.bf16 %v369
        %v538 = vunpack.c.h.s8.bf16 %v369
        %v539 = vunpack.c.l.s8.bf16 %v370
        %v540 = vunpack.c.h.s8.bf16 %v370
        %v541 = vunpack.c.l.s8.bf16 %v371
        %v542 = vunpack.c.h.s8.bf16 %v371
        %v543 = vunpack.c.l.s8.bf16 %v372
        %v544 = vunpack.c.h.s8.bf16 %v372
        %v545 = vunpack.c.l.s8.bf16 %v373
        %v546 = vunpack.c.h.s8.bf16 %v373
        %v547 = vunpack.c.l.s8.bf16 %v374
        %v548 = vunpack.c.h.s8.bf16 %v374
        %v549 = vunpack.c.l.s8.bf16 %v375
        %v550 = vunpack.c.h.s8.bf16 %v375
        %v551 = vunpack.c.l.s8.bf16 %v376
        %v552 = vunpack.c.h.s8.bf16 %v376
        %v553 = vunpack.c.l.s8.bf16 %v377
        %v554 = vunpack.c.h.s8.bf16 %v377
        %v555 = vunpack.c.l.s8.bf16 %v378
        %v556 = vunpack.c.h.s8.bf16 %v378
        %v557 = vunpack.c.l.s8.bf16 %v379
        %v558 = vunpack.c.h.s8.bf16 %v379
        %v559 = vunpack.c.l.s8.bf16 %v380
        %v560 = vunpack.c.h.s8.bf16 %v380
        %v561 = vunpack.c.l.s8.bf16 %v381
        %v562 = vunpack.c.h.s8.bf16 %v381
        %v563 = vunpack.c.l.s8.bf16 %v382
        %v564 = vunpack.c.h.s8.bf16 %v382
        %v565 = vunpack.c.l.s8.bf16 %v383
        %v566 = vunpack.c.h.s8.bf16 %v383
        %v567 = vunpack.c.l.s8.bf16 %v384
        %v568 = vunpack.c.h.s8.bf16 %v384
        %v569 = vunpack.c.l.s8.bf16 %v385
        %v570 = vunpack.c.h.s8.bf16 %v385
        %v571 = vunpack.c.l.s8.bf16 %v386
        %v572 = vunpack.c.h.s8.bf16 %v386
        %v573 = vunpack.c.l.s8.bf16 %v387
        %v574 = vunpack.c.h.s8.bf16 %v387
        %v575 = vunpack.c.l.s8.bf16 %v388
        %v576 = vunpack.c.h.s8.bf16 %v388
        %v577 = vunpack.c.l.s8.bf16 %v389
        %v578 = vunpack.c.h.s8.bf16 %v389
        %v579 = vunpack.c.l.s8.bf16 %v390
        %v580 = vunpack.c.h.s8.bf16 %v390
        %v581 = vunpack.c.l.s8.bf16 %v391
        %v582 = vunpack.c.h.s8.bf16 %v391
        %v583 = vunpack.c.l.s8.bf16 %v392
        %v584 = vunpack.c.h.s8.bf16 %v392
        %v585 = vunpack.c.l.s8.bf16 %v393
        %v586 = vunpack.c.h.s8.bf16 %v393
        %v587 = vunpack.c.l.s8.bf16 %v394
        %v588 = vunpack.c.h.s8.bf16 %v394
        %v589 = vunpack.c.l.s8.bf16 %v395
        %v590 = vunpack.c.h.s8.bf16 %v395
        %v591 = vunpack.c.l.s8.bf16 %v396
        %v592 = vunpack.c.h.s8.bf16 %v396
        %v593 = vunpack.c.l.s8.bf16 %v397
        %v594 = vunpack.c.h.s8.bf16 %v397
        %v595 = vunpack.c.l.s8.bf16 %v398
        %v596 = vunpack.c.h.s8.bf16 %v398
        %v597 = vunpack.c.l.s8.bf16 %v399
        %v598 = vunpack.c.h.s8.bf16 %v399
        %v599 = vunpack.c.l.s8.bf16 %v400
        %v600 = vunpack.c.h.s8.bf16 %v400
        %v601 = vunpack.c.l.s8.bf16 %v401
        %v602 = vunpack.c.h.s8.bf16 %v401
        %v603 = vunpack.c.l.s8.bf16 %v402
        %v604 = vunpack.c.h.s8.bf16 %v402
        %v605 = vunpack.c.l.s8.bf16 %v403
        %v606 = vunpack.c.h.s8.bf16 %v403
        %v607 = vunpack.c.l.s8.bf16 %v404
        %v608 = vunpack.c.h.s8.bf16 %v404
        %v609 = vunpack.c.l.s8.bf16 %v405
        %v610 = vunpack.c.h.s8.bf16 %v405
        %v611 = vunpack.c.l.s8.bf16 %v406
        %v612 = vunpack.c.h.s8.bf16 %v406
        %v613 = vunpack.c.l.s8.bf16 %v407
        %v614 = vunpack.c.h.s8.bf16 %v407
        %v615 = vunpack.c.l.s8.bf16 %v408
        %v616 = vunpack.c.h.s8.bf16 %v408
        %v617 = vunpack.c.l.s8.bf16 %v409
        %v618 = vunpack.c.h.s8.bf16 %v409
        %v619 = vunpack.c.l.s8.bf16 %v410
        %v620 = vunpack.c.h.s8.bf16 %v410
        %v621 = vunpack.c.l.s8.bf16 %v411
        %v622 = vunpack.c.h.s8.bf16 %v411
        %v623 = vunpack.c.l.s8.bf16 %v412
        %v624 = vunpack.c.h.s8.bf16 %v412
        %v625 = vunpack.c.l.s8.bf16 %v413
        %v626 = vunpack.c.h.s8.bf16 %v413
        %v627 = vunpack.c.l.s8.bf16 %v414
        %v628 = vunpack.c.h.s8.bf16 %v414
        %v629 = vunpack.c.l.s8.bf16 %v415
        %v630 = vunpack.c.h.s8.bf16 %v415
        %v631 = vunpack.c.l.s8.bf16 %v416
        %v632 = vunpack.c.h.s8.bf16 %v416
        %v633 = vunpack.c.l.s8.bf16 %v417
        %v634 = vunpack.c.h.s8.bf16 %v417
        %v635 = vunpack.c.l.s8.bf16 %v418
        %v636 = vunpack.c.h.s8.bf16 %v418
        %v637 = vunpack.c.l.s8.bf16 %v419
        %v638 = vunpack.c.h.s8.bf16 %v419
        %v639 = vunpack.c.l.s8.bf16 %v420
        %v640 = vunpack.c.h.s8.bf16 %v420
        %v641 = vunpack.c.l.s8.bf16 %v421
        %v642 = vunpack.c.h.s8.bf16 %v421
        %v643 = vunpack.c.l.s8.bf16 %v422
        %v644 = vunpack.c.h.s8.bf16 %v422
        %v645 = vunpack.c.l.s8.bf16 %v423
        %v646 = vunpack.c.h.s8.bf16 %v423
        %v647 = vunpack.c.l.s8.bf16 %v424
        %v648 = vunpack.c.h.s8.bf16 %v424
        %v649 = vunpack.c.l.s8.bf16 %v425
        %v650 = vunpack.c.h.s8.bf16 %v425
        %v651 = vunpack.c.l.s8.bf16 %v426
        %v652 = vunpack.c.h.s8.bf16 %v426
        %v653 = vunpack.c.l.s8.bf16 %v427
        %v654 = vunpack.c.h.s8.bf16 %v427
        %v655 = vunpack.c.l.s8.bf16 %v428
        %v656 = vunpack.c.h.s8.bf16 %v428
        %v657 = vunpack.c.l.s8.bf16 %v429
        %v658 = vunpack.c.h.s8.bf16 %v429
        %v659 = vunpack.c.l.s8.bf16 %v430
        %v660 = vunpack.c.h.s8.bf16 %v430
        %v661 = vunpack.c.l.s8.bf16 %v431
        %v662 = vunpack.c.h.s8.bf16 %v431
        %v663 = vunpack.c.l.s8.bf16 %v432
        %v664 = vunpack.c.h.s8.bf16 %v432
        %v665 = vunpack.c.l.s8.bf16 %v433
        %v666 = vunpack.c.h.s8.bf16 %v433
        %v667 = vunpack.c.l.s8.bf16 %v434
        %v668 = vunpack.c.h.s8.bf16 %v434
        %v669 = vunpack.c.l.s8.bf16 %v435
        %v670 = vunpack.c.h.s8.bf16 %v435
        %v671 = vunpack.c.l.s8.bf16 %v436
        %v672 = vunpack.c.h.s8.bf16 %v436
        %v673 = vunpack.c.l.s8.bf16 %v437
        %v674 = vunpack.c.h.s8.bf16 %v437
        %v675 = vunpack.c.l.s8.bf16 %v438
        %v676 = vunpack.c.h.s8.bf16 %v438
        %v677 = vunpack.c.l.s8.bf16 %v439
        %v678 = vunpack.c.h.s8.bf16 %v439
        %v679 = vunpack.c.l.s8.bf16 %v440
        %v680 = vunpack.c.h.s8.bf16 %v440
        %v681 = vunpack.c.l.s8.bf16 %v441
        %v682 = vunpack.c.h.s8.bf16 %v441
        %v683 = vunpack.c.l.s8.bf16 %v442
        %v684 = vunpack.c.h.s8.bf16 %v442
        %v685 = vunpack.c.l.s8.bf16 %v443
        %v686 = vunpack.c.h.s8.bf16 %v443
        %v687 = vunpack.c.l.s8.bf16 %v444
        %v688 = vunpack.c.h.s8.bf16 %v444
        %v689 = vunpack.c.l.s8.bf16 %v445
        %v690 = vunpack.c.h.s8.bf16 %v445
        %v691 = vunpack.c.l.s8.bf16 %v446
        %v692 = vunpack.c.h.s8.bf16 %v446
        %v693 = vunpack.c.l.s8.bf16 %v447
        %v694 = vunpack.c.h.s8.bf16 %v447
        %v695 = vunpack.c.l.s8.bf16 %v448
        %v696 = vunpack.c.h.s8.bf16 %v448
        %v697 = vunpack.c.l.s8.bf16 %v449
        %v698 = vunpack.c.h.s8.bf16 %v449
        %v699 = vunpack.c.l.s8.bf16 %v450
        %v700 = vunpack.c.h.s8.bf16 %v450
        %v701 = vunpack.c.l.s8.bf16 %v451
        %v702 = vunpack.c.h.s8.bf16 %v451
        %v703 = vunpack.c.l.s8.bf16 %v452
        %v704 = vunpack.c.h.s8.bf16 %v452
        %v705 = vunpack.c.l.s8.bf16 %v453
        %v706 = vunpack.c.h.s8.bf16 %v453
        %v707 = vunpack.c.l.s8.bf16 %v454
        %v708 = vunpack.c.h.s8.bf16 %v454
        %v709 = vunpack.c.l.s8.bf16 %v455
        %v710 = vunpack.c.h.s8.bf16 %v455
        %v711 = vunpack.c.l.s8.bf16 %v456
        %v712 = vunpack.c.h.s8.bf16 %v456
        %v713 = vld [vmem:[#allocation6] sm:$0xff]
        %v714 = vld [vmem:[#allocation6 + $0x8] sm:$0xff]
        %v715 = vld [vmem:[#allocation6 + $0x10] sm:$0xff]
        %v716 = vld [vmem:[#allocation6 + $0x18] sm:$0xff]
        %v717 = vld [vmem:[#allocation6 + $0x20] sm:$0xff]
        %v718 = vld [vmem:[#allocation6 + $0x28] sm:$0xff]
        %v719 = vld [vmem:[#allocation6 + $0x30] sm:$0xff]
        %v720 = vld [vmem:[#allocation6 + $0x38] sm:$0xff]
        %v721 = vld [vmem:[#allocation6 + $0x40] sm:$0xff]
        %v722 = vld [vmem:[#allocation6 + $0x48] sm:$0xff]
        %v723 = vld [vmem:[#allocation6 + $0x50] sm:$0xff]
        %v724 = vld [vmem:[#allocation6 + $0x58] sm:$0xff]
        %v725 = vld [vmem:[#allocation6 + $0x60] sm:$0xff]
        %v726 = vld [vmem:[#allocation6 + $0x68] sm:$0xff]
        %v727 = vld [vmem:[#allocation6 + $0x70] sm:$0xff]
        %v728 = vld [vmem:[#allocation6 + $0x78] sm:$0xff]
        %v729 = vld [vmem:[#allocation6 + $0x80] sm:$0xff]
        %v730 = vld [vmem:[#allocation6 + $0x88] sm:$0xff]
        %v731 = vld [vmem:[#allocation6 + $0x90] sm:$0xff]
        %v732 = vld [vmem:[#allocation6 + $0x98] sm:$0xff]
        %v733 = vld [vmem:[#allocation6 + $0xa0] sm:$0xff]
        %v734 = vld [vmem:[#allocation6 + $0xa8] sm:$0xff]
        %v735 = vld [vmem:[#allocation6 + $0xb0] sm:$0xff]
        %v736 = vld [vmem:[#allocation6 + $0xb8] sm:$0xff]
        %v737 = vld [vmem:[#allocation6 + $0xc0] sm:$0xff]
        %v738 = vld [vmem:[#allocation6 + $0xc8] sm:$0xff]
        %v739 = vld [vmem:[#allocation6 + $0xd0] sm:$0xff]
        %v740 = vld [vmem:[#allocation6 + $0xd8] sm:$0xff]
        %v741 = vld [vmem:[#allocation6 + $0xe0] sm:$0xff]
        %v742 = vld [vmem:[#allocation6 + $0xe8] sm:$0xff]
        %v743 = vld [vmem:[#allocation6 + $0xf0] sm:$0xff]
        %v744 = vld [vmem:[#allocation6 + $0xf8] sm:$0xff]
        %v745 = vld [vmem:[#allocation6 + $0x100] sm:$0xff]
        %v746 = vld [vmem:[#allocation6 + $0x108] sm:$0xff]
        %v747 = vld [vmem:[#allocation6 + $0x110] sm:$0xff]
        %v748 = vld [vmem:[#allocation6 + $0x118] sm:$0xff]
        %v749 = vld [vmem:[#allocation6 + $0x120] sm:$0xff]
        %v750 = vld [vmem:[#allocation6 + $0x128] sm:$0xff]
        %v751 = vld [vmem:[#allocation6 + $0x130] sm:$0xff]
        %v752 = vld [vmem:[#allocation6 + $0x138] sm:$0xff]
        %v753 = vld [vmem:[#allocation6 + $0x140] sm:$0xff]
        %v754 = vld [vmem:[#allocation6 + $0x148] sm:$0xff]
        %v755 = vld [vmem:[#allocation6 + $0x150] sm:$0xff]
        %v756 = vld [vmem:[#allocation6 + $0x158] sm:$0xff]
        %v757 = vld [vmem:[#allocation6 + $0x160] sm:$0xff]
        %v758 = vld [vmem:[#allocation6 + $0x168] sm:$0xff]
        %v759 = vld [vmem:[#allocation6 + $0x170] sm:$0xff]
        %v760 = vld [vmem:[#allocation6 + $0x178] sm:$0xff]
        %v761 = vld [vmem:[#allocation6 + $0x180] sm:$0xff]
        %v762 = vld [vmem:[#allocation6 + $0x188] sm:$0xff]
        %v763 = vld [vmem:[#allocation6 + $0x190] sm:$0xff]
        %v764 = vld [vmem:[#allocation6 + $0x198] sm:$0xff]
        %v765 = vld [vmem:[#allocation6 + $0x1a0] sm:$0xff]
        %v766 = vld [vmem:[#allocation6 + $0x1a8] sm:$0xff]
        %v767 = vld [vmem:[#allocation6 + $0x1b0] sm:$0xff]
        %v768 = vld [vmem:[#allocation6 + $0x1b8] sm:$0xff]
        %v769 = vld [vmem:[#allocation6 + $0x1c0] sm:$0xff]
        %v770 = vld [vmem:[#allocation6 + $0x1c8] sm:$0xff]
        %v771 = vld [vmem:[#allocation6 + $0x1d0] sm:$0xff]
        %v772 = vld [vmem:[#allocation6 + $0x1d8] sm:$0xff]
        %v773 = vld [vmem:[#allocation6 + $0x1e0] sm:$0xff]
        %v774 = vld [vmem:[#allocation6 + $0x1e8] sm:$0xff]
        %v775 = vld [vmem:[#allocation6 + $0x1f0] sm:$0xff]
        %v776 = vld [vmem:[#allocation6 + $0x1f8] sm:$0xff]
        %v777 = vld [vmem:[#allocation6 + $0x200] sm:$0xff]
        %v778 = vld [vmem:[#allocation6 + $0x208] sm:$0xff]
        %v779 = vld [vmem:[#allocation6 + $0x210] sm:$0xff]
        %v780 = vld [vmem:[#allocation6 + $0x218] sm:$0xff]
        %v781 = vld [vmem:[#allocation6 + $0x220] sm:$0xff]
        %v782 = vld [vmem:[#allocation6 + $0x228] sm:$0xff]
        %v783 = vld [vmem:[#allocation6 + $0x230] sm:$0xff]
        %v784 = vld [vmem:[#allocation6 + $0x238] sm:$0xff]
        %v785 = vld [vmem:[#allocation6 + $0x240] sm:$0xff]
        %v786 = vld [vmem:[#allocation6 + $0x248] sm:$0xff]
        %v787 = vld [vmem:[#allocation6 + $0x250] sm:$0xff]
        %v788 = vld [vmem:[#allocation6 + $0x258] sm:$0xff]
        %v789 = vld [vmem:[#allocation6 + $0x260] sm:$0xff]
        %v790 = vld [vmem:[#allocation6 + $0x268] sm:$0xff]
        %v791 = vld [vmem:[#allocation6 + $0x270] sm:$0xff]
        %v792 = vld [vmem:[#allocation6 + $0x278] sm:$0xff]
        %v793 = vld [vmem:[#allocation6 + $0x280] sm:$0xff]
        %v794 = vld [vmem:[#allocation6 + $0x288] sm:$0xff]
        %v795 = vld [vmem:[#allocation6 + $0x290] sm:$0xff]
        %v796 = vld [vmem:[#allocation6 + $0x298] sm:$0xff]
        %v797 = vld [vmem:[#allocation6 + $0x2a0] sm:$0xff]
        %v798 = vld [vmem:[#allocation6 + $0x2a8] sm:$0xff]
        %v799 = vld [vmem:[#allocation6 + $0x2b0] sm:$0xff]
        %v800 = vld [vmem:[#allocation6 + $0x2b8] sm:$0xff]
        %v801 = vld [vmem:[#allocation6 + $0x2c0] sm:$0xff]
        %v802 = vld [vmem:[#allocation6 + $0x2c8] sm:$0xff]
        %v803 = vld [vmem:[#allocation6 + $0x2d0] sm:$0xff]
        %v804 = vld [vmem:[#allocation6 + $0x2d8] sm:$0xff]
        %v805 = vld [vmem:[#allocation6 + $0x2e0] sm:$0xff]
        %v806 = vld [vmem:[#allocation6 + $0x2e8] sm:$0xff]
        %v807 = vld [vmem:[#allocation6 + $0x2f0] sm:$0xff]
        %v808 = vld [vmem:[#allocation6 + $0x2f8] sm:$0xff]
        %v809 = vld [vmem:[#allocation6 + $0x300] sm:$0xff]
        %v810 = vld [vmem:[#allocation6 + $0x308] sm:$0xff]
        %v811 = vld [vmem:[#allocation6 + $0x310] sm:$0xff]
        %v812 = vld [vmem:[#allocation6 + $0x318] sm:$0xff]
        %v813 = vld [vmem:[#allocation6 + $0x320] sm:$0xff]
        %v814 = vld [vmem:[#allocation6 + $0x328] sm:$0xff]
        %v815 = vld [vmem:[#allocation6 + $0x330] sm:$0xff]
        %v816 = vld [vmem:[#allocation6 + $0x338] sm:$0xff]
        %v817 = vld [vmem:[#allocation6 + $0x340] sm:$0xff]
        %v818 = vld [vmem:[#allocation6 + $0x348] sm:$0xff]
        %v819 = vld [vmem:[#allocation6 + $0x350] sm:$0xff]
        %v820 = vld [vmem:[#allocation6 + $0x358] sm:$0xff]
        %v821 = vld [vmem:[#allocation6 + $0x360] sm:$0xff]
        %v822 = vld [vmem:[#allocation6 + $0x368] sm:$0xff]
        %v823 = vld [vmem:[#allocation6 + $0x370] sm:$0xff]
        %v824 = vld [vmem:[#allocation6 + $0x378] sm:$0xff]
        %v825 = vld [vmem:[#allocation6 + $0x380] sm:$0xff]
        %v826 = vld [vmem:[#allocation6 + $0x388] sm:$0xff]
        %v827 = vld [vmem:[#allocation6 + $0x390] sm:$0xff]
        %v828 = vld [vmem:[#allocation6 + $0x398] sm:$0xff]
        %v829 = vld [vmem:[#allocation6 + $0x3a0] sm:$0xff]
        %v830 = vld [vmem:[#allocation6 + $0x3a8] sm:$0xff]
        %v831 = vld [vmem:[#allocation6 + $0x3b0] sm:$0xff]
        %v832 = vld [vmem:[#allocation6 + $0x3b8] sm:$0xff]
        %v833 = vld [vmem:[#allocation6 + $0x3c0] sm:$0xff]
        %v834 = vld [vmem:[#allocation6 + $0x3c8] sm:$0xff]
        %v835 = vld [vmem:[#allocation6 + $0x3d0] sm:$0xff]
        %v836 = vld [vmem:[#allocation6 + $0x3d8] sm:$0xff]
        %v837 = vld [vmem:[#allocation6 + $0x3e0] sm:$0xff]
        %v838 = vld [vmem:[#allocation6 + $0x3e8] sm:$0xff]
        %v839 = vld [vmem:[#allocation6 + $0x3f0] sm:$0xff]
        %v840 = vld [vmem:[#allocation6 + $0x3f8] sm:$0xff]
        %v841 = vld [vmem:[#allocation6 + $0x400] sm:$0xff]
        %v842 = vld [vmem:[#allocation6 + $0x408] sm:$0xff]
        %v843 = vld [vmem:[#allocation6 + $0x410] sm:$0xff]
        %v844 = vld [vmem:[#allocation6 + $0x418] sm:$0xff]
        %v845 = vld [vmem:[#allocation6 + $0x420] sm:$0xff]
        %v846 = vld [vmem:[#allocation6 + $0x428] sm:$0xff]
        %v847 = vld [vmem:[#allocation6 + $0x430] sm:$0xff]
        %v848 = vld [vmem:[#allocation6 + $0x438] sm:$0xff]
        %v849 = vld [vmem:[#allocation6 + $0x440] sm:$0xff]
        %v850 = vld [vmem:[#allocation6 + $0x448] sm:$0xff]
        %v851 = vld [vmem:[#allocation6 + $0x450] sm:$0xff]
        %v852 = vld [vmem:[#allocation6 + $0x458] sm:$0xff]
        %v853 = vld [vmem:[#allocation6 + $0x460] sm:$0xff]
        %v854 = vld [vmem:[#allocation6 + $0x468] sm:$0xff]
        %v855 = vld [vmem:[#allocation6 + $0x470] sm:$0xff]
        %v856 = vld [vmem:[#allocation6 + $0x478] sm:$0xff]
        %v857 = vld [vmem:[#allocation6 + $0x480] sm:$0xff]
        %v858 = vld [vmem:[#allocation6 + $0x488] sm:$0xff]
        %v859 = vld [vmem:[#allocation6 + $0x490] sm:$0xff]
        %v860 = vld [vmem:[#allocation6 + $0x498] sm:$0xff]
        %v861 = vld [vmem:[#allocation6 + $0x4a0] sm:$0xff]
        %v862 = vld [vmem:[#allocation6 + $0x4a8] sm:$0xff]
        %v863 = vld [vmem:[#allocation6 + $0x4b0] sm:$0xff]
        %v864 = vld [vmem:[#allocation6 + $0x4b8] sm:$0xff]
        %v865 = vld [vmem:[#allocation6 + $0x4c0] sm:$0xff]
        %v866 = vld [vmem:[#allocation6 + $0x4c8] sm:$0xff]
        %v867 = vld [vmem:[#allocation6 + $0x4d0] sm:$0xff]
        %v868 = vld [vmem:[#allocation6 + $0x4d8] sm:$0xff]
        %v869 = vld [vmem:[#allocation6 + $0x4e0] sm:$0xff]
        %v870 = vld [vmem:[#allocation6 + $0x4e8] sm:$0xff]
        %v871 = vld [vmem:[#allocation6 + $0x4f0] sm:$0xff]
        %v872 = vld [vmem:[#allocation6 + $0x4f8] sm:$0xff]
        %v873 = vld [vmem:[#allocation6 + $0x500] sm:$0xff]
        %v874 = vld [vmem:[#allocation6 + $0x508] sm:$0xff]
        %v875 = vld [vmem:[#allocation6 + $0x510] sm:$0xff]
        %v876 = vld [vmem:[#allocation6 + $0x518] sm:$0xff]
        %v877 = vld [vmem:[#allocation6 + $0x520] sm:$0xff]
        %v878 = vld [vmem:[#allocation6 + $0x528] sm:$0xff]
        %v879 = vld [vmem:[#allocation6 + $0x530] sm:$0xff]
        %v880 = vld [vmem:[#allocation6 + $0x538] sm:$0xff]
        %v881 = vld [vmem:[#allocation6 + $0x540] sm:$0xff]
        %v882 = vld [vmem:[#allocation6 + $0x548] sm:$0xff]
        %v883 = vld [vmem:[#allocation6 + $0x550] sm:$0xff]
        %v884 = vld [vmem:[#allocation6 + $0x558] sm:$0xff]
        %v885 = vld [vmem:[#allocation6 + $0x560] sm:$0xff]
        %v886 = vld [vmem:[#allocation6 + $0x568] sm:$0xff]
        %v887 = vld [vmem:[#allocation6 + $0x570] sm:$0xff]
        %v888 = vld [vmem:[#allocation6 + $0x578] sm:$0xff]
        %v889 = vld [vmem:[#allocation6 + $0x580] sm:$0xff]
        %v890 = vld [vmem:[#allocation6 + $0x588] sm:$0xff]
        %v891 = vld [vmem:[#allocation6 + $0x590] sm:$0xff]
        %v892 = vld [vmem:[#allocation6 + $0x598] sm:$0xff]
        %v893 = vld [vmem:[#allocation6 + $0x5a0] sm:$0xff]
        %v894 = vld [vmem:[#allocation6 + $0x5a8] sm:$0xff]
        %v895 = vld [vmem:[#allocation6 + $0x5b0] sm:$0xff]
        %v896 = vld [vmem:[#allocation6 + $0x5b8] sm:$0xff]
        %v897 = vld [vmem:[#allocation6 + $0x5c0] sm:$0xff]
        %v898 = vld [vmem:[#allocation6 + $0x5c8] sm:$0xff]
        %v899 = vld [vmem:[#allocation6 + $0x5d0] sm:$0xff]
        %v900 = vld [vmem:[#allocation6 + $0x5d8] sm:$0xff]
        %v901 = vld [vmem:[#allocation6 + $0x5e0] sm:$0xff]
        %v902 = vld [vmem:[#allocation6 + $0x5e8] sm:$0xff]
        %v903 = vld [vmem:[#allocation6 + $0x5f0] sm:$0xff]
        %v904 = vld [vmem:[#allocation6 + $0x5f8] sm:$0xff]
        %v905 = vld [vmem:[#allocation6 + $0x600] sm:$0xff]
        %v906 = vld [vmem:[#allocation6 + $0x608] sm:$0xff]
        %v907 = vld [vmem:[#allocation6 + $0x610] sm:$0xff]
        %v908 = vld [vmem:[#allocation6 + $0x618] sm:$0xff]
        %v909 = vld [vmem:[#allocation6 + $0x620] sm:$0xff]
        %v910 = vld [vmem:[#allocation6 + $0x628] sm:$0xff]
        %v911 = vld [vmem:[#allocation6 + $0x630] sm:$0xff]
        %v912 = vld [vmem:[#allocation6 + $0x638] sm:$0xff]
        %v913 = vld [vmem:[#allocation6 + $0x640] sm:$0xff]
        %v914 = vld [vmem:[#allocation6 + $0x648] sm:$0xff]
        %v915 = vld [vmem:[#allocation6 + $0x650] sm:$0xff]
        %v916 = vld [vmem:[#allocation6 + $0x658] sm:$0xff]
        %v917 = vld [vmem:[#allocation6 + $0x660] sm:$0xff]
        %v918 = vld [vmem:[#allocation6 + $0x668] sm:$0xff]
        %v919 = vld [vmem:[#allocation6 + $0x670] sm:$0xff]
        %v920 = vld [vmem:[#allocation6 + $0x678] sm:$0xff]
        %v921 = vld [vmem:[#allocation6 + $0x680] sm:$0xff]
        %v922 = vld [vmem:[#allocation6 + $0x688] sm:$0xff]
        %v923 = vld [vmem:[#allocation6 + $0x690] sm:$0xff]
        %v924 = vld [vmem:[#allocation6 + $0x698] sm:$0xff]
        %v925 = vld [vmem:[#allocation6 + $0x6a0] sm:$0xff]
        %v926 = vld [vmem:[#allocation6 + $0x6a8] sm:$0xff]
        %v927 = vld [vmem:[#allocation6 + $0x6b0] sm:$0xff]
        %v928 = vld [vmem:[#allocation6 + $0x6b8] sm:$0xff]
        %v929 = vld [vmem:[#allocation6 + $0x6c0] sm:$0xff]
        %v930 = vld [vmem:[#allocation6 + $0x6c8] sm:$0xff]
        %v931 = vld [vmem:[#allocation6 + $0x6d0] sm:$0xff]
        %v932 = vld [vmem:[#allocation6 + $0x6d8] sm:$0xff]
        %v933 = vld [vmem:[#allocation6 + $0x6e0] sm:$0xff]
        %v934 = vld [vmem:[#allocation6 + $0x6e8] sm:$0xff]
        %v935 = vld [vmem:[#allocation6 + $0x6f0] sm:$0xff]
        %v936 = vld [vmem:[#allocation6 + $0x6f8] sm:$0xff]
        %v937 = vld [vmem:[#allocation6 + $0x700] sm:$0xff]
        %v938 = vld [vmem:[#allocation6 + $0x708] sm:$0xff]
        %v939 = vld [vmem:[#allocation6 + $0x710] sm:$0xff]
        %v940 = vld [vmem:[#allocation6 + $0x718] sm:$0xff]
        %v941 = vld [vmem:[#allocation6 + $0x720] sm:$0xff]
        %v942 = vld [vmem:[#allocation6 + $0x728] sm:$0xff]
        %v943 = vld [vmem:[#allocation6 + $0x730] sm:$0xff]
        %v944 = vld [vmem:[#allocation6 + $0x738] sm:$0xff]
        %v945 = vld [vmem:[#allocation6 + $0x740] sm:$0xff]
        %v946 = vld [vmem:[#allocation6 + $0x748] sm:$0xff]
        %v947 = vld [vmem:[#allocation6 + $0x750] sm:$0xff]
        %v948 = vld [vmem:[#allocation6 + $0x758] sm:$0xff]
        %v949 = vld [vmem:[#allocation6 + $0x760] sm:$0xff]
        %v950 = vld [vmem:[#allocation6 + $0x768] sm:$0xff]
        %v951 = vld [vmem:[#allocation6 + $0x770] sm:$0xff]
        %v952 = vld [vmem:[#allocation6 + $0x778] sm:$0xff]
        %v953 = vld [vmem:[#allocation6 + $0x780] sm:$0xff]
        %v954 = vld [vmem:[#allocation6 + $0x788] sm:$0xff]
        %v955 = vld [vmem:[#allocation6 + $0x790] sm:$0xff]
        %v956 = vld [vmem:[#allocation6 + $0x798] sm:$0xff]
        %v957 = vld [vmem:[#allocation6 + $0x7a0] sm:$0xff]
        %v958 = vld [vmem:[#allocation6 + $0x7a8] sm:$0xff]
        %v959 = vld [vmem:[#allocation6 + $0x7b0] sm:$0xff]
        %v960 = vld [vmem:[#allocation6 + $0x7b8] sm:$0xff]
        %v961 = vld [vmem:[#allocation6 + $0x7c0] sm:$0xff]
        %v962 = vld [vmem:[#allocation6 + $0x7c8] sm:$0xff]
        %v963 = vld [vmem:[#allocation6 + $0x7d0] sm:$0xff]
        %v964 = vld [vmem:[#allocation6 + $0x7d8] sm:$0xff]
        %v965 = vld [vmem:[#allocation6 + $0x7e0] sm:$0xff]
        %v966 = vld [vmem:[#allocation6 + $0x7e8] sm:$0xff]
        %v967 = vld [vmem:[#allocation6 + $0x7f0] sm:$0xff]
        %v968 = vld [vmem:[#allocation6 + $0x7f8] sm:$0xff]
        %v969 = vld [vmem:[%s2] sm:$0x3]
        %v971 = vlaneseq
        %v972 = vshrl.u32 %v971, 7
        %v973 = vsub.s32 0, %v972
        %v974 = vrot.slane %v969, %v973
        %v975 = vlaneseq
        %v976 = vshrl.u32 %v975, 7
        %v977 = vsub.s32 1, %v976
        %v978 = vrot.slane %v969, %v977
        %v1237 = vunpack.c.l.b16 %v457
        %v1238 = vunpack.c.h.b16 %v457
        %v1239 = vunpack.c.l.b16 %v458
        %v1240 = vunpack.c.h.b16 %v458
        %v1241 = vunpack.c.l.b16 %v459
        %v1242 = vunpack.c.h.b16 %v459
        %v1243 = vunpack.c.l.b16 %v460
        %v1244 = vunpack.c.h.b16 %v460
        %v1245 = vunpack.c.l.b16 %v461
        %v1246 = vunpack.c.h.b16 %v461
        %v1247 = vunpack.c.l.b16 %v462
        %v1248 = vunpack.c.h.b16 %v462
        %v1249 = vunpack.c.l.b16 %v463
        %v1250 = vunpack.c.h.b16 %v463
        %v1251 = vunpack.c.l.b16 %v464
        %v1252 = vunpack.c.h.b16 %v464
        %v1253 = vunpack.c.l.b16 %v465
        %v1254 = vunpack.c.h.b16 %v465
        %v1255 = vunpack.c.l.b16 %v466
        %v1256 = vunpack.c.h.b16 %v466
        %v1257 = vunpack.c.l.b16 %v467
        %v1258 = vunpack.c.h.b16 %v467
        %v1259 = vunpack.c.l.b16 %v468
        %v1260 = vunpack.c.h.b16 %v468
        %v1261 = vunpack.c.l.b16 %v469
        %v1262 = vunpack.c.h.b16 %v469
        %v1263 = vunpack.c.l.b16 %v470
        %v1264 = vunpack.c.h.b16 %v470
        %v1265 = vunpack.c.l.b16 %v471
        %v1266 = vunpack.c.h.b16 %v471
        %v1267 = vunpack.c.l.b16 %v472
        %v1268 = vunpack.c.h.b16 %v472
        %v1269 = vunpack.c.l.b16 %v473
        %v1270 = vunpack.c.h.b16 %v473
        %v1271 = vunpack.c.l.b16 %v474
        %v1272 = vunpack.c.h.b16 %v474
        %v1273 = vunpack.c.l.b16 %v475
        %v1274 = vunpack.c.h.b16 %v475
        %v1275 = vunpack.c.l.b16 %v476
        %v1276 = vunpack.c.h.b16 %v476
        %v1277 = vunpack.c.l.b16 %v477
        %v1278 = vunpack.c.h.b16 %v477
        %v1279 = vunpack.c.l.b16 %v478
        %v1280 = vunpack.c.h.b16 %v478
        %v1281 = vunpack.c.l.b16 %v479
        %v1282 = vunpack.c.h.b16 %v479
        %v1283 = vunpack.c.l.b16 %v480
        %v1284 = vunpack.c.h.b16 %v480
        %v1285 = vunpack.c.l.b16 %v481
        %v1286 = vunpack.c.h.b16 %v481
        %v1287 = vunpack.c.l.b16 %v482
        %v1288 = vunpack.c.h.b16 %v482
        %v1289 = vunpack.c.l.b16 %v483
        %v1290 = vunpack.c.h.b16 %v483
        %v1291 = vunpack.c.l.b16 %v484
        %v1292 = vunpack.c.h.b16 %v484
        %v1293 = vunpack.c.l.b16 %v485
        %v1294 = vunpack.c.h.b16 %v485
        %v1295 = vunpack.c.l.b16 %v486
        %v1296 = vunpack.c.h.b16 %v486
        %v1297 = vunpack.c.l.b16 %v487
        %v1298 = vunpack.c.h.b16 %v487
        %v1299 = vunpack.c.l.b16 %v488
        %v1300 = vunpack.c.h.b16 %v488
        %v1301 = vunpack.c.l.b16 %v489
        %v1302 = vunpack.c.h.b16 %v489
        %v1303 = vunpack.c.l.b16 %v490
        %v1304 = vunpack.c.h.b16 %v490
        %v1305 = vunpack.c.l.b16 %v491
        %v1306 = vunpack.c.h.b16 %v491
        %v1307 = vunpack.c.l.b16 %v492
        %v1308 = vunpack.c.h.b16 %v492
        %v1309 = vunpack.c.l.b16 %v493
        %v1310 = vunpack.c.h.b16 %v493
        %v1311 = vunpack.c.l.b16 %v494
        %v1312 = vunpack.c.h.b16 %v494
        %v1313 = vunpack.c.l.b16 %v495
        %v1314 = vunpack.c.h.b16 %v495
        %v1315 = vunpack.c.l.b16 %v496
        %v1316 = vunpack.c.h.b16 %v496
        %v1317 = vunpack.c.l.b16 %v497
        %v1318 = vunpack.c.h.b16 %v497
        %v1319 = vunpack.c.l.b16 %v498
        %v1320 = vunpack.c.h.b16 %v498
        %v1321 = vunpack.c.l.b16 %v499
        %v1322 = vunpack.c.h.b16 %v499
        %v1323 = vunpack.c.l.b16 %v500
        %v1324 = vunpack.c.h.b16 %v500
        %v1325 = vunpack.c.l.b16 %v501
        %v1326 = vunpack.c.h.b16 %v501
        %v1327 = vunpack.c.l.b16 %v502
        %v1328 = vunpack.c.h.b16 %v502
        %v1329 = vunpack.c.l.b16 %v503
        %v1330 = vunpack.c.h.b16 %v503
        %v1331 = vunpack.c.l.b16 %v504
        %v1332 = vunpack.c.h.b16 %v504
        %v1333 = vunpack.c.l.b16 %v505
        %v1334 = vunpack.c.h.b16 %v505
        %v1335 = vunpack.c.l.b16 %v506
        %v1336 = vunpack.c.h.b16 %v506
        %v1337 = vunpack.c.l.b16 %v507
        %v1338 = vunpack.c.h.b16 %v507
        %v1339 = vunpack.c.l.b16 %v508
        %v1340 = vunpack.c.h.b16 %v508
        %v1341 = vunpack.c.l.b16 %v509
        %v1342 = vunpack.c.h.b16 %v509
        %v1343 = vunpack.c.l.b16 %v510
        %v1344 = vunpack.c.h.b16 %v510
        %v1345 = vunpack.c.l.b16 %v511
        %v1346 = vunpack.c.h.b16 %v511
        %v1347 = vunpack.c.l.b16 %v512
        %v1348 = vunpack.c.h.b16 %v512
        %v1349 = vunpack.c.l.b16 %v513
        %v1350 = vunpack.c.h.b16 %v513
        %v1351 = vunpack.c.l.b16 %v514
        %v1352 = vunpack.c.h.b16 %v514
        %v1353 = vunpack.c.l.b16 %v515
        %v1354 = vunpack.c.h.b16 %v515
        %v1355 = vunpack.c.l.b16 %v516
        %v1356 = vunpack.c.h.b16 %v516
        %v1357 = vunpack.c.l.b16 %v517
        %v1358 = vunpack.c.h.b16 %v517
        %v1359 = vunpack.c.l.b16 %v518
        %v1360 = vunpack.c.h.b16 %v518
        %v1361 = vunpack.c.l.b16 %v519
        %v1362 = vunpack.c.h.b16 %v519
        %v1363 = vunpack.c.l.b16 %v520
        %v1364 = vunpack.c.h.b16 %v520
        %v1365 = vunpack.c.l.b16 %v521
        %v1366 = vunpack.c.h.b16 %v521
        %v1367 = vunpack.c.l.b16 %v522
        %v1368 = vunpack.c.h.b16 %v522
        %v1369 = vunpack.c.l.b16 %v523
        %v1370 = vunpack.c.h.b16 %v523
        %v1371 = vunpack.c.l.b16 %v524
        %v1372 = vunpack.c.h.b16 %v524
        %v1373 = vunpack.c.l.b16 %v525
        %v1374 = vunpack.c.h.b16 %v525
        %v1375 = vunpack.c.l.b16 %v526
        %v1376 = vunpack.c.h.b16 %v526
        %v1377 = vunpack.c.l.b16 %v527
        %v1378 = vunpack.c.h.b16 %v527
        %v1379 = vunpack.c.l.b16 %v528
        %v1380 = vunpack.c.h.b16 %v528
        %v1381 = vunpack.c.l.b16 %v529
        %v1382 = vunpack.c.h.b16 %v529
        %v1383 = vunpack.c.l.b16 %v530
        %v1384 = vunpack.c.h.b16 %v530
        %v1385 = vunpack.c.l.b16 %v531
        %v1386 = vunpack.c.h.b16 %v531
        %v1387 = vunpack.c.l.b16 %v532
        %v1388 = vunpack.c.h.b16 %v532
        %v1389 = vunpack.c.l.b16 %v533
        %v1390 = vunpack.c.h.b16 %v533
        %v1391 = vunpack.c.l.b16 %v534
        %v1392 = vunpack.c.h.b16 %v534
        %v1393 = vunpack.c.l.b16 %v535
        %v1394 = vunpack.c.h.b16 %v535
        %v1395 = vunpack.c.l.b16 %v536
        %v1396 = vunpack.c.h.b16 %v536
        %v1397 = vunpack.c.l.b16 %v537
        %v1398 = vunpack.c.h.b16 %v537
        %v1399 = vunpack.c.l.b16 %v538
        %v1400 = vunpack.c.h.b16 %v538
        %v1401 = vunpack.c.l.b16 %v539
        %v1402 = vunpack.c.h.b16 %v539
        %v1403 = vunpack.c.l.b16 %v540
        %v1404 = vunpack.c.h.b16 %v540
        %v1405 = vunpack.c.l.b16 %v541
        %v1406 = vunpack.c.h.b16 %v541
        %v1407 = vunpack.c.l.b16 %v542
        %v1408 = vunpack.c.h.b16 %v542
        %v1409 = vunpack.c.l.b16 %v543
        %v1410 = vunpack.c.h.b16 %v543
        %v1411 = vunpack.c.l.b16 %v544
        %v1412 = vunpack.c.h.b16 %v544
        %v1413 = vunpack.c.l.b16 %v545
        %v1414 = vunpack.c.h.b16 %v545
        %v1415 = vunpack.c.l.b16 %v546
        %v1416 = vunpack.c.h.b16 %v546
        %v1417 = vunpack.c.l.b16 %v547
        %v1418 = vunpack.c.h.b16 %v547
        %v1419 = vunpack.c.l.b16 %v548
        %v1420 = vunpack.c.h.b16 %v548
        %v1421 = vunpack.c.l.b16 %v549
        %v1422 = vunpack.c.h.b16 %v549
        %v1423 = vunpack.c.l.b16 %v550
        %v1424 = vunpack.c.h.b16 %v550
        %v1425 = vunpack.c.l.b16 %v551
        %v1426 = vunpack.c.h.b16 %v551
        %v1427 = vunpack.c.l.b16 %v552
        %v1428 = vunpack.c.h.b16 %v552
        %v1429 = vunpack.c.l.b16 %v553
        %v1430 = vunpack.c.h.b16 %v553
        %v1431 = vunpack.c.l.b16 %v554
        %v1432 = vunpack.c.h.b16 %v554
        %v1433 = vunpack.c.l.b16 %v555
        %v1434 = vunpack.c.h.b16 %v555
        %v1435 = vunpack.c.l.b16 %v556
        %v1436 = vunpack.c.h.b16 %v556
        %v1437 = vunpack.c.l.b16 %v557
        %v1438 = vunpack.c.h.b16 %v557
        %v1439 = vunpack.c.l.b16 %v558
        %v1440 = vunpack.c.h.b16 %v558
        %v1441 = vunpack.c.l.b16 %v559
        %v1442 = vunpack.c.h.b16 %v559
        %v1443 = vunpack.c.l.b16 %v560
        %v1444 = vunpack.c.h.b16 %v560
        %v1445 = vunpack.c.l.b16 %v561
        %v1446 = vunpack.c.h.b16 %v561
        %v1447 = vunpack.c.l.b16 %v562
        %v1448 = vunpack.c.h.b16 %v562
        %v1449 = vunpack.c.l.b16 %v563
        %v1450 = vunpack.c.h.b16 %v563
        %v1451 = vunpack.c.l.b16 %v564
        %v1452 = vunpack.c.h.b16 %v564
        %v1453 = vunpack.c.l.b16 %v565
        %v1454 = vunpack.c.h.b16 %v565
        %v1455 = vunpack.c.l.b16 %v566
        %v1456 = vunpack.c.h.b16 %v566
        %v1457 = vunpack.c.l.b16 %v567
        %v1458 = vunpack.c.h.b16 %v567
        %v1459 = vunpack.c.l.b16 %v568
        %v1460 = vunpack.c.h.b16 %v568
        %v1461 = vunpack.c.l.b16 %v569
        %v1462 = vunpack.c.h.b16 %v569
        %v1463 = vunpack.c.l.b16 %v570
        %v1464 = vunpack.c.h.b16 %v570
        %v1465 = vunpack.c.l.b16 %v571
        %v1466 = vunpack.c.h.b16 %v571
        %v1467 = vunpack.c.l.b16 %v572
        %v1468 = vunpack.c.h.b16 %v572
        %v1469 = vunpack.c.l.b16 %v573
        %v1470 = vunpack.c.h.b16 %v573
        %v1471 = vunpack.c.l.b16 %v574
        %v1472 = vunpack.c.h.b16 %v574
        %v1473 = vunpack.c.l.b16 %v575
        %v1474 = vunpack.c.h.b16 %v575
        %v1475 = vunpack.c.l.b16 %v576
        %v1476 = vunpack.c.h.b16 %v576
        %v1477 = vunpack.c.l.b16 %v577
        %v1478 = vunpack.c.h.b16 %v577
        %v1479 = vunpack.c.l.b16 %v578
        %v1480 = vunpack.c.h.b16 %v578
        %v1481 = vunpack.c.l.b16 %v579
        %v1482 = vunpack.c.h.b16 %v579
        %v1483 = vunpack.c.l.b16 %v580
        %v1484 = vunpack.c.h.b16 %v580
        %v1485 = vunpack.c.l.b16 %v581
        %v1486 = vunpack.c.h.b16 %v581
        %v1487 = vunpack.c.l.b16 %v582
        %v1488 = vunpack.c.h.b16 %v582
        %v1489 = vunpack.c.l.b16 %v583
        %v1490 = vunpack.c.h.b16 %v583
        %v1491 = vunpack.c.l.b16 %v584
        %v1492 = vunpack.c.h.b16 %v584
        %v1493 = vunpack.c.l.b16 %v585
        %v1494 = vunpack.c.h.b16 %v585
        %v1495 = vunpack.c.l.b16 %v586
        %v1496 = vunpack.c.h.b16 %v586
        %v1497 = vunpack.c.l.b16 %v587
        %v1498 = vunpack.c.h.b16 %v587
        %v1499 = vunpack.c.l.b16 %v588
        %v1500 = vunpack.c.h.b16 %v588
        %v1501 = vunpack.c.l.b16 %v589
        %v1502 = vunpack.c.h.b16 %v589
        %v1503 = vunpack.c.l.b16 %v590
        %v1504 = vunpack.c.h.b16 %v590
        %v1505 = vunpack.c.l.b16 %v591
        %v1506 = vunpack.c.h.b16 %v591
        %v1507 = vunpack.c.l.b16 %v592
        %v1508 = vunpack.c.h.b16 %v592
        %v1509 = vunpack.c.l.b16 %v593
        %v1510 = vunpack.c.h.b16 %v593
        %v1511 = vunpack.c.l.b16 %v594
        %v1512 = vunpack.c.h.b16 %v594
        %v1513 = vunpack.c.l.b16 %v595
        %v1514 = vunpack.c.h.b16 %v595
        %v1515 = vunpack.c.l.b16 %v596
        %v1516 = vunpack.c.h.b16 %v596
        %v1517 = vunpack.c.l.b16 %v597
        %v1518 = vunpack.c.h.b16 %v597
        %v1519 = vunpack.c.l.b16 %v598
        %v1520 = vunpack.c.h.b16 %v598
        %v1521 = vunpack.c.l.b16 %v599
        %v1522 = vunpack.c.h.b16 %v599
        %v1523 = vunpack.c.l.b16 %v600
        %v1524 = vunpack.c.h.b16 %v600
        %v1525 = vunpack.c.l.b16 %v601
        %v1526 = vunpack.c.h.b16 %v601
        %v1527 = vunpack.c.l.b16 %v602
        %v1528 = vunpack.c.h.b16 %v602
        %v1529 = vunpack.c.l.b16 %v603
        %v1530 = vunpack.c.h.b16 %v603
        %v1531 = vunpack.c.l.b16 %v604
        %v1532 = vunpack.c.h.b16 %v604
        %v1533 = vunpack.c.l.b16 %v605
        %v1534 = vunpack.c.h.b16 %v605
        %v1535 = vunpack.c.l.b16 %v606
        %v1536 = vunpack.c.h.b16 %v606
        %v1537 = vunpack.c.l.b16 %v607
        %v1538 = vunpack.c.h.b16 %v607
        %v1539 = vunpack.c.l.b16 %v608
        %v1540 = vunpack.c.h.b16 %v608
        %v1541 = vunpack.c.l.b16 %v609
        %v1542 = vunpack.c.h.b16 %v609
        %v1543 = vunpack.c.l.b16 %v610
        %v1544 = vunpack.c.h.b16 %v610
        %v1545 = vunpack.c.l.b16 %v611
        %v1546 = vunpack.c.h.b16 %v611
        %v1547 = vunpack.c.l.b16 %v612
        %v1548 = vunpack.c.h.b16 %v612
        %v1549 = vunpack.c.l.b16 %v613
        %v1550 = vunpack.c.h.b16 %v613
        %v1551 = vunpack.c.l.b16 %v614
        %v1552 = vunpack.c.h.b16 %v614
        %v1553 = vunpack.c.l.b16 %v615
        %v1554 = vunpack.c.h.b16 %v615
        %v1555 = vunpack.c.l.b16 %v616
        %v1556 = vunpack.c.h.b16 %v616
        %v1557 = vunpack.c.l.b16 %v617
        %v1558 = vunpack.c.h.b16 %v617
        %v1559 = vunpack.c.l.b16 %v618
        %v1560 = vunpack.c.h.b16 %v618
        %v1561 = vunpack.c.l.b16 %v619
        %v1562 = vunpack.c.h.b16 %v619
        %v1563 = vunpack.c.l.b16 %v620
        %v1564 = vunpack.c.h.b16 %v620
        %v1565 = vunpack.c.l.b16 %v621
        %v1566 = vunpack.c.h.b16 %v621
        %v1567 = vunpack.c.l.b16 %v622
        %v1568 = vunpack.c.h.b16 %v622
        %v1569 = vunpack.c.l.b16 %v623
        %v1570 = vunpack.c.h.b16 %v623
        %v1571 = vunpack.c.l.b16 %v624
        %v1572 = vunpack.c.h.b16 %v624
        %v1573 = vunpack.c.l.b16 %v625
        %v1574 = vunpack.c.h.b16 %v625
        %v1575 = vunpack.c.l.b16 %v626
        %v1576 = vunpack.c.h.b16 %v626
        %v1577 = vunpack.c.l.b16 %v627
        %v1578 = vunpack.c.h.b16 %v627
        %v1579 = vunpack.c.l.b16 %v628
        %v1580 = vunpack.c.h.b16 %v628
        %v1581 = vunpack.c.l.b16 %v629
        %v1582 = vunpack.c.h.b16 %v629
        %v1583 = vunpack.c.l.b16 %v630
        %v1584 = vunpack.c.h.b16 %v630
        %v1585 = vunpack.c.l.b16 %v631
        %v1586 = vunpack.c.h.b16 %v631
        %v1587 = vunpack.c.l.b16 %v632
        %v1588 = vunpack.c.h.b16 %v632
        %v1589 = vunpack.c.l.b16 %v633
        %v1590 = vunpack.c.h.b16 %v633
        %v1591 = vunpack.c.l.b16 %v634
        %v1592 = vunpack.c.h.b16 %v634
        %v1593 = vunpack.c.l.b16 %v635
        %v1594 = vunpack.c.h.b16 %v635
        %v1595 = vunpack.c.l.b16 %v636
        %v1596 = vunpack.c.h.b16 %v636
        %v1597 = vunpack.c.l.b16 %v637
        %v1598 = vunpack.c.h.b16 %v637
        %v1599 = vunpack.c.l.b16 %v638
        %v1600 = vunpack.c.h.b16 %v638
        %v1601 = vunpack.c.l.b16 %v639
        %v1602 = vunpack.c.h.b16 %v639
        %v1603 = vunpack.c.l.b16 %v640
        %v1604 = vunpack.c.h.b16 %v640
        %v1605 = vunpack.c.l.b16 %v641
        %v1606 = vunpack.c.h.b16 %v641
        %v1607 = vunpack.c.l.b16 %v642
        %v1608 = vunpack.c.h.b16 %v642
        %v1609 = vunpack.c.l.b16 %v643
        %v1610 = vunpack.c.h.b16 %v643
        %v1611 = vunpack.c.l.b16 %v644
        %v1612 = vunpack.c.h.b16 %v644
        %v1613 = vunpack.c.l.b16 %v645
        %v1614 = vunpack.c.h.b16 %v645
        %v1615 = vunpack.c.l.b16 %v646
        %v1616 = vunpack.c.h.b16 %v646
        %v1617 = vunpack.c.l.b16 %v647
        %v1618 = vunpack.c.h.b16 %v647
        %v1619 = vunpack.c.l.b16 %v648
        %v1620 = vunpack.c.h.b16 %v648
        %v1621 = vunpack.c.l.b16 %v649
        %v1622 = vunpack.c.h.b16 %v649
        %v1623 = vunpack.c.l.b16 %v650
        %v1624 = vunpack.c.h.b16 %v650
        %v1625 = vunpack.c.l.b16 %v651
        %v1626 = vunpack.c.h.b16 %v651
        %v1627 = vunpack.c.l.b16 %v652
        %v1628 = vunpack.c.h.b16 %v652
        %v1629 = vunpack.c.l.b16 %v653
        %v1630 = vunpack.c.h.b16 %v653
        %v1631 = vunpack.c.l.b16 %v654
        %v1632 = vunpack.c.h.b16 %v654
        %v1633 = vunpack.c.l.b16 %v655
        %v1634 = vunpack.c.h.b16 %v655
        %v1635 = vunpack.c.l.b16 %v656
        %v1636 = vunpack.c.h.b16 %v656
        %v1637 = vunpack.c.l.b16 %v657
        %v1638 = vunpack.c.h.b16 %v657
        %v1639 = vunpack.c.l.b16 %v658
        %v1640 = vunpack.c.h.b16 %v658
        %v1641 = vunpack.c.l.b16 %v659
        %v1642 = vunpack.c.h.b16 %v659
        %v1643 = vunpack.c.l.b16 %v660
        %v1644 = vunpack.c.h.b16 %v660
        %v1645 = vunpack.c.l.b16 %v661
        %v1646 = vunpack.c.h.b16 %v661
        %v1647 = vunpack.c.l.b16 %v662
        %v1648 = vunpack.c.h.b16 %v662
        %v1649 = vunpack.c.l.b16 %v663
        %v1650 = vunpack.c.h.b16 %v663
        %v1651 = vunpack.c.l.b16 %v664
        %v1652 = vunpack.c.h.b16 %v664
        %v1653 = vunpack.c.l.b16 %v665
        %v1654 = vunpack.c.h.b16 %v665
        %v1655 = vunpack.c.l.b16 %v666
        %v1656 = vunpack.c.h.b16 %v666
        %v1657 = vunpack.c.l.b16 %v667
        %v1658 = vunpack.c.h.b16 %v667
        %v1659 = vunpack.c.l.b16 %v668
        %v1660 = vunpack.c.h.b16 %v668
        %v1661 = vunpack.c.l.b16 %v669
        %v1662 = vunpack.c.h.b16 %v669
        %v1663 = vunpack.c.l.b16 %v670
        %v1664 = vunpack.c.h.b16 %v670
        %v1665 = vunpack.c.l.b16 %v671
        %v1666 = vunpack.c.h.b16 %v671
        %v1667 = vunpack.c.l.b16 %v672
        %v1668 = vunpack.c.h.b16 %v672
        %v1669 = vunpack.c.l.b16 %v673
        %v1670 = vunpack.c.h.b16 %v673
        %v1671 = vunpack.c.l.b16 %v674
        %v1672 = vunpack.c.h.b16 %v674
        %v1673 = vunpack.c.l.b16 %v675
        %v1674 = vunpack.c.h.b16 %v675
        %v1675 = vunpack.c.l.b16 %v676
        %v1676 = vunpack.c.h.b16 %v676
        %v1677 = vunpack.c.l.b16 %v677
        %v1678 = vunpack.c.h.b16 %v677
        %v1679 = vunpack.c.l.b16 %v678
        %v1680 = vunpack.c.h.b16 %v678
        %v1681 = vunpack.c.l.b16 %v679
        %v1682 = vunpack.c.h.b16 %v679
        %v1683 = vunpack.c.l.b16 %v680
        %v1684 = vunpack.c.h.b16 %v680
        %v1685 = vunpack.c.l.b16 %v681
        %v1686 = vunpack.c.h.b16 %v681
        %v1687 = vunpack.c.l.b16 %v682
        %v1688 = vunpack.c.h.b16 %v682
        %v1689 = vunpack.c.l.b16 %v683
        %v1690 = vunpack.c.h.b16 %v683
        %v1691 = vunpack.c.l.b16 %v684
        %v1692 = vunpack.c.h.b16 %v684
        %v1693 = vunpack.c.l.b16 %v685
        %v1694 = vunpack.c.h.b16 %v685
        %v1695 = vunpack.c.l.b16 %v686
        %v1696 = vunpack.c.h.b16 %v686
        %v1697 = vunpack.c.l.b16 %v687
        %v1698 = vunpack.c.h.b16 %v687
        %v1699 = vunpack.c.l.b16 %v688
        %v1700 = vunpack.c.h.b16 %v688
        %v1701 = vunpack.c.l.b16 %v689
        %v1702 = vunpack.c.h.b16 %v689
        %v1703 = vunpack.c.l.b16 %v690
        %v1704 = vunpack.c.h.b16 %v690
        %v1705 = vunpack.c.l.b16 %v691
        %v1706 = vunpack.c.h.b16 %v691
        %v1707 = vunpack.c.l.b16 %v692
        %v1708 = vunpack.c.h.b16 %v692
        %v1709 = vunpack.c.l.b16 %v693
        %v1710 = vunpack.c.h.b16 %v693
        %v1711 = vunpack.c.l.b16 %v694
        %v1712 = vunpack.c.h.b16 %v694
        %v1713 = vunpack.c.l.b16 %v695
        %v1714 = vunpack.c.h.b16 %v695
        %v1715 = vunpack.c.l.b16 %v696
        %v1716 = vunpack.c.h.b16 %v696
        %v1717 = vunpack.c.l.b16 %v697
        %v1718 = vunpack.c.h.b16 %v697
        %v1719 = vunpack.c.l.b16 %v698
        %v1720 = vunpack.c.h.b16 %v698
        %v1721 = vunpack.c.l.b16 %v699
        %v1722 = vunpack.c.h.b16 %v699
        %v1723 = vunpack.c.l.b16 %v700
        %v1724 = vunpack.c.h.b16 %v700
        %v1725 = vunpack.c.l.b16 %v701
        %v1726 = vunpack.c.h.b16 %v701
        %v1727 = vunpack.c.l.b16 %v702
        %v1728 = vunpack.c.h.b16 %v702
        %v1729 = vunpack.c.l.b16 %v703
        %v1730 = vunpack.c.h.b16 %v703
        %v1731 = vunpack.c.l.b16 %v704
        %v1732 = vunpack.c.h.b16 %v704
        %v1733 = vunpack.c.l.b16 %v705
        %v1734 = vunpack.c.h.b16 %v705
        %v1735 = vunpack.c.l.b16 %v706
        %v1736 = vunpack.c.h.b16 %v706
        %v1737 = vunpack.c.l.b16 %v707
        %v1738 = vunpack.c.h.b16 %v707
        %v1739 = vunpack.c.l.b16 %v708
        %v1740 = vunpack.c.h.b16 %v708
        %v1741 = vunpack.c.l.b16 %v709
        %v1742 = vunpack.c.h.b16 %v709
        %v1743 = vunpack.c.l.b16 %v710
        %v1744 = vunpack.c.h.b16 %v710
        %v1745 = vunpack.c.l.b16 %v711
        %v1746 = vunpack.c.h.b16 %v711
        %v1747 = vunpack.c.l.b16 %v712
        %v1748 = vunpack.c.h.b16 %v712
        %v1749 = vpack.c.b16 %v1253, %v1237
        %v1750 = vpack.c.b16 %v1254, %v1238
        %v1751 = vpack.c.b16 %v1255, %v1239
        %v1752 = vpack.c.b16 %v1256, %v1240
        %v1753 = vpack.c.b16 %v1257, %v1241
        %v1754 = vpack.c.b16 %v1258, %v1242
        %v1755 = vpack.c.b16 %v1259, %v1243
        %v1756 = vpack.c.b16 %v1260, %v1244
        %v1757 = vpack.c.b16 %v1261, %v1245
        %v1758 = vpack.c.b16 %v1262, %v1246
        %v1759 = vpack.c.b16 %v1263, %v1247
        %v1760 = vpack.c.b16 %v1264, %v1248
        %v1761 = vpack.c.b16 %v1265, %v1249
        %v1762 = vpack.c.b16 %v1266, %v1250
        %v1763 = vpack.c.b16 %v1267, %v1251
        %v1764 = vpack.c.b16 %v1268, %v1252
        %v1765 = vpack.c.b16 %v1285, %v1269
        %v1766 = vpack.c.b16 %v1286, %v1270
        %v1767 = vpack.c.b16 %v1287, %v1271
        %v1768 = vpack.c.b16 %v1288, %v1272
        %v1769 = vpack.c.b16 %v1289, %v1273
        %v1770 = vpack.c.b16 %v1290, %v1274
        %v1771 = vpack.c.b16 %v1291, %v1275
        %v1772 = vpack.c.b16 %v1292, %v1276
        %v1773 = vpack.c.b16 %v1293, %v1277
        %v1774 = vpack.c.b16 %v1294, %v1278
        %v1775 = vpack.c.b16 %v1295, %v1279
        %v1776 = vpack.c.b16 %v1296, %v1280
        %v1777 = vpack.c.b16 %v1297, %v1281
        %v1778 = vpack.c.b16 %v1298, %v1282
        %v1779 = vpack.c.b16 %v1299, %v1283
        %v1780 = vpack.c.b16 %v1300, %v1284
        %v1781 = vpack.c.b16 %v1317, %v1301
        %v1782 = vpack.c.b16 %v1318, %v1302
        %v1783 = vpack.c.b16 %v1319, %v1303
        %v1784 = vpack.c.b16 %v1320, %v1304
        %v1785 = vpack.c.b16 %v1321, %v1305
        %v1786 = vpack.c.b16 %v1322, %v1306
        %v1787 = vpack.c.b16 %v1323, %v1307
        %v1788 = vpack.c.b16 %v1324, %v1308
        %v1789 = vpack.c.b16 %v1325, %v1309
        %v1790 = vpack.c.b16 %v1326, %v1310
        %v1791 = vpack.c.b16 %v1327, %v1311
        %v1792 = vpack.c.b16 %v1328, %v1312
        %v1793 = vpack.c.b16 %v1329, %v1313
        %v1794 = vpack.c.b16 %v1330, %v1314
        %v1795 = vpack.c.b16 %v1331, %v1315
        %v1796 = vpack.c.b16 %v1332, %v1316
        %v1797 = vpack.c.b16 %v1349, %v1333
        %v1798 = vpack.c.b16 %v1350, %v1334
        %v1799 = vpack.c.b16 %v1351, %v1335
        %v1800 = vpack.c.b16 %v1352, %v1336
        %v1801 = vpack.c.b16 %v1353, %v1337
        %v1802 = vpack.c.b16 %v1354, %v1338
        %v1803 = vpack.c.b16 %v1355, %v1339
        %v1804 = vpack.c.b16 %v1356, %v1340
        %v1805 = vpack.c.b16 %v1357, %v1341
        %v1806 = vpack.c.b16 %v1358, %v1342
        %v1807 = vpack.c.b16 %v1359, %v1343
        %v1808 = vpack.c.b16 %v1360, %v1344
        %v1809 = vpack.c.b16 %v1361, %v1345
        %v1810 = vpack.c.b16 %v1362, %v1346
        %v1811 = vpack.c.b16 %v1363, %v1347
        %v1812 = vpack.c.b16 %v1364, %v1348
        %v1813 = vpack.c.b16 %v1381, %v1365
        %v1814 = vpack.c.b16 %v1382, %v1366
        %v1815 = vpack.c.b16 %v1383, %v1367
        %v1816 = vpack.c.b16 %v1384, %v1368
        %v1817 = vpack.c.b16 %v1385, %v1369
        %v1818 = vpack.c.b16 %v1386, %v1370
        %v1819 = vpack.c.b16 %v1387, %v1371
        %v1820 = vpack.c.b16 %v1388, %v1372
        %v1821 = vpack.c.b16 %v1389, %v1373
        %v1822 = vpack.c.b16 %v1390, %v1374
        %v1823 = vpack.c.b16 %v1391, %v1375
        %v1824 = vpack.c.b16 %v1392, %v1376
        %v1825 = vpack.c.b16 %v1393, %v1377
        %v1826 = vpack.c.b16 %v1394, %v1378
        %v1827 = vpack.c.b16 %v1395, %v1379
        %v1828 = vpack.c.b16 %v1396, %v1380
        %v1829 = vpack.c.b16 %v1413, %v1397
        %v1830 = vpack.c.b16 %v1414, %v1398
        %v1831 = vpack.c.b16 %v1415, %v1399
        %v1832 = vpack.c.b16 %v1416, %v1400
        %v1833 = vpack.c.b16 %v1417, %v1401
        %v1834 = vpack.c.b16 %v1418, %v1402
        %v1835 = vpack.c.b16 %v1419, %v1403
        %v1836 = vpack.c.b16 %v1420, %v1404
        %v1837 = vpack.c.b16 %v1421, %v1405
        %v1838 = vpack.c.b16 %v1422, %v1406
        %v1839 = vpack.c.b16 %v1423, %v1407
        %v1840 = vpack.c.b16 %v1424, %v1408
        %v1841 = vpack.c.b16 %v1425, %v1409
        %v1842 = vpack.c.b16 %v1426, %v1410
        %v1843 = vpack.c.b16 %v1427, %v1411
        %v1844 = vpack.c.b16 %v1428, %v1412
        %v1845 = vpack.c.b16 %v1445, %v1429
        %v1846 = vpack.c.b16 %v1446, %v1430
        %v1847 = vpack.c.b16 %v1447, %v1431
        %v1848 = vpack.c.b16 %v1448, %v1432
        %v1849 = vpack.c.b16 %v1449, %v1433
        %v1850 = vpack.c.b16 %v1450, %v1434
        %v1851 = vpack.c.b16 %v1451, %v1435
        %v1852 = vpack.c.b16 %v1452, %v1436
        %v1853 = vpack.c.b16 %v1453, %v1437
        %v1854 = vpack.c.b16 %v1454, %v1438
        %v1855 = vpack.c.b16 %v1455, %v1439
        %v1856 = vpack.c.b16 %v1456, %v1440
        %v1857 = vpack.c.b16 %v1457, %v1441
        %v1858 = vpack.c.b16 %v1458, %v1442
        %v1859 = vpack.c.b16 %v1459, %v1443
        %v1860 = vpack.c.b16 %v1460, %v1444
        %v1861 = vpack.c.b16 %v1477, %v1461
        %v1862 = vpack.c.b16 %v1478, %v1462
        %v1863 = vpack.c.b16 %v1479, %v1463
        %v1864 = vpack.c.b16 %v1480, %v1464
        %v1865 = vpack.c.b16 %v1481, %v1465
        %v1866 = vpack.c.b16 %v1482, %v1466
        %v1867 = vpack.c.b16 %v1483, %v1467
        %v1868 = vpack.c.b16 %v1484, %v1468
        %v1869 = vpack.c.b16 %v1485, %v1469
        %v1870 = vpack.c.b16 %v1486, %v1470
        %v1871 = vpack.c.b16 %v1487, %v1471
        %v1872 = vpack.c.b16 %v1488, %v1472
        %v1873 = vpack.c.b16 %v1489, %v1473
        %v1874 = vpack.c.b16 %v1490, %v1474
        %v1875 = vpack.c.b16 %v1491, %v1475
        %v1876 = vpack.c.b16 %v1492, %v1476
        %v1877 = vpack.c.b16 %v1509, %v1493
        %v1878 = vpack.c.b16 %v1510, %v1494
        %v1879 = vpack.c.b16 %v1511, %v1495
        %v1880 = vpack.c.b16 %v1512, %v1496
        %v1881 = vpack.c.b16 %v1513, %v1497
        %v1882 = vpack.c.b16 %v1514, %v1498
        %v1883 = vpack.c.b16 %v1515, %v1499
        %v1884 = vpack.c.b16 %v1516, %v1500
        %v1885 = vpack.c.b16 %v1517, %v1501
        %v1886 = vpack.c.b16 %v1518, %v1502
        %v1887 = vpack.c.b16 %v1519, %v1503
        %v1888 = vpack.c.b16 %v1520, %v1504
        %v1889 = vpack.c.b16 %v1521, %v1505
        %v1890 = vpack.c.b16 %v1522, %v1506
        %v1891 = vpack.c.b16 %v1523, %v1507
        %v1892 = vpack.c.b16 %v1524, %v1508
        %v1893 = vpack.c.b16 %v1541, %v1525
        %v1894 = vpack.c.b16 %v1542, %v1526
        %v1895 = vpack.c.b16 %v1543, %v1527
        %v1896 = vpack.c.b16 %v1544, %v1528
        %v1897 = vpack.c.b16 %v1545, %v1529
        %v1898 = vpack.c.b16 %v1546, %v1530
        %v1899 = vpack.c.b16 %v1547, %v1531
        %v1900 = vpack.c.b16 %v1548, %v1532
        %v1901 = vpack.c.b16 %v1549, %v1533
        %v1902 = vpack.c.b16 %v1550, %v1534
        %v1903 = vpack.c.b16 %v1551, %v1535
        %v1904 = vpack.c.b16 %v1552, %v1536
        %v1905 = vpack.c.b16 %v1553, %v1537
        %v1906 = vpack.c.b16 %v1554, %v1538
        %v1907 = vpack.c.b16 %v1555, %v1539
        %v1908 = vpack.c.b16 %v1556, %v1540
        %v1909 = vpack.c.b16 %v1573, %v1557
        %v1910 = vpack.c.b16 %v1574, %v1558
        %v1911 = vpack.c.b16 %v1575, %v1559
        %v1912 = vpack.c.b16 %v1576, %v1560
        %v1913 = vpack.c.b16 %v1577, %v1561
        %v1914 = vpack.c.b16 %v1578, %v1562
        %v1915 = vpack.c.b16 %v1579, %v1563
        %v1916 = vpack.c.b16 %v1580, %v1564
        %v1917 = vpack.c.b16 %v1581, %v1565
        %v1918 = vpack.c.b16 %v1582, %v1566
        %v1919 = vpack.c.b16 %v1583, %v1567
        %v1920 = vpack.c.b16 %v1584, %v1568
        %v1921 = vpack.c.b16 %v1585, %v1569
        %v1922 = vpack.c.b16 %v1586, %v1570
        %v1923 = vpack.c.b16 %v1587, %v1571
        %v1924 = vpack.c.b16 %v1588, %v1572
        %v1925 = vpack.c.b16 %v1605, %v1589
        %v1926 = vpack.c.b16 %v1606, %v1590
        %v1927 = vpack.c.b16 %v1607, %v1591
        %v1928 = vpack.c.b16 %v1608, %v1592
        %v1929 = vpack.c.b16 %v1609, %v1593
        %v1930 = vpack.c.b16 %v1610, %v1594
        %v1931 = vpack.c.b16 %v1611, %v1595
        %v1932 = vpack.c.b16 %v1612, %v1596
        %v1933 = vpack.c.b16 %v1613, %v1597
        %v1934 = vpack.c.b16 %v1614, %v1598
        %v1935 = vpack.c.b16 %v1615, %v1599
        %v1936 = vpack.c.b16 %v1616, %v1600
        %v1937 = vpack.c.b16 %v1617, %v1601
        %v1938 = vpack.c.b16 %v1618, %v1602
        %v1939 = vpack.c.b16 %v1619, %v1603
        %v1940 = vpack.c.b16 %v1620, %v1604
        %v1941 = vpack.c.b16 %v1637, %v1621
        %v1942 = vpack.c.b16 %v1638, %v1622
        %v1943 = vpack.c.b16 %v1639, %v1623
        %v1944 = vpack.c.b16 %v1640, %v1624
        %v1945 = vpack.c.b16 %v1641, %v1625
        %v1946 = vpack.c.b16 %v1642, %v1626
        %v1947 = vpack.c.b16 %v1643, %v1627
        %v1948 = vpack.c.b16 %v1644, %v1628
        %v1949 = vpack.c.b16 %v1645, %v1629
        %v1950 = vpack.c.b16 %v1646, %v1630
        %v1951 = vpack.c.b16 %v1647, %v1631
        %v1952 = vpack.c.b16 %v1648, %v1632
        %v1953 = vpack.c.b16 %v1649, %v1633
        %v1954 = vpack.c.b16 %v1650, %v1634
        %v1955 = vpack.c.b16 %v1651, %v1635
        %v1956 = vpack.c.b16 %v1652, %v1636
        %v1957 = vpack.c.b16 %v1669, %v1653
        %v1958 = vpack.c.b16 %v1670, %v1654
        %v1959 = vpack.c.b16 %v1671, %v1655
        %v1960 = vpack.c.b16 %v1672, %v1656
        %v1961 = vpack.c.b16 %v1673, %v1657
        %v1962 = vpack.c.b16 %v1674, %v1658
        %v1963 = vpack.c.b16 %v1675, %v1659
        %v1964 = vpack.c.b16 %v1676, %v1660
        %v1965 = vpack.c.b16 %v1677, %v1661
        %v1966 = vpack.c.b16 %v1678, %v1662
        %v1967 = vpack.c.b16 %v1679, %v1663
        %v1968 = vpack.c.b16 %v1680, %v1664
        %v1969 = vpack.c.b16 %v1681, %v1665
        %v1970 = vpack.c.b16 %v1682, %v1666
        %v1971 = vpack.c.b16 %v1683, %v1667
        %v1972 = vpack.c.b16 %v1684, %v1668
        %v1973 = vpack.c.b16 %v1701, %v1685
        %v1974 = vpack.c.b16 %v1702, %v1686
        %v1975 = vpack.c.b16 %v1703, %v1687
        %v1976 = vpack.c.b16 %v1704, %v1688
        %v1977 = vpack.c.b16 %v1705, %v1689
        %v1978 = vpack.c.b16 %v1706, %v1690
        %v1979 = vpack.c.b16 %v1707, %v1691
        %v1980 = vpack.c.b16 %v1708, %v1692
        %v1981 = vpack.c.b16 %v1709, %v1693
        %v1982 = vpack.c.b16 %v1710, %v1694
        %v1983 = vpack.c.b16 %v1711, %v1695
        %v1984 = vpack.c.b16 %v1712, %v1696
        %v1985 = vpack.c.b16 %v1713, %v1697
        %v1986 = vpack.c.b16 %v1714, %v1698
        %v1987 = vpack.c.b16 %v1715, %v1699
        %v1988 = vpack.c.b16 %v1716, %v1700
        %v1989 = vpack.c.b16 %v1733, %v1717
        %v1990 = vpack.c.b16 %v1734, %v1718
        %v1991 = vpack.c.b16 %v1735, %v1719
        %v1992 = vpack.c.b16 %v1736, %v1720
        %v1993 = vpack.c.b16 %v1737, %v1721
        %v1994 = vpack.c.b16 %v1738, %v1722
        %v1995 = vpack.c.b16 %v1739, %v1723
        %v1996 = vpack.c.b16 %v1740, %v1724
        %v1997 = vpack.c.b16 %v1741, %v1725
        %v1998 = vpack.c.b16 %v1742, %v1726
        %v1999 = vpack.c.b16 %v1743, %v1727
        %v2000 = vpack.c.b16 %v1744, %v1728
        %v2001 = vpack.c.b16 %v1745, %v1729
        %v2002 = vpack.c.b16 %v1746, %v1730
        %v2003 = vpack.c.b16 %v1747, %v1731
        %v2004 = vpack.c.b16 %v1748, %v1732
        %v2517 = vunpack.c.l.b16 %v713
        %v2518 = vunpack.c.h.b16 %v713
        %v2519 = vunpack.c.l.b16 %v714
        %v2520 = vunpack.c.h.b16 %v714
        %v2521 = vunpack.c.l.b16 %v715
        %v2522 = vunpack.c.h.b16 %v715
        %v2523 = vunpack.c.l.b16 %v716
        %v2524 = vunpack.c.h.b16 %v716
        %v2525 = vunpack.c.l.b16 %v717
        %v2526 = vunpack.c.h.b16 %v717
        %v2527 = vunpack.c.l.b16 %v718
        %v2528 = vunpack.c.h.b16 %v718
        %v2529 = vunpack.c.l.b16 %v719
        %v2530 = vunpack.c.h.b16 %v719
        %v2531 = vunpack.c.l.b16 %v720
        %v2532 = vunpack.c.h.b16 %v720
        %v2533 = vunpack.c.l.b16 %v721
        %v2534 = vunpack.c.h.b16 %v721
        %v2535 = vunpack.c.l.b16 %v722
        %v2536 = vunpack.c.h.b16 %v722
        %v2537 = vunpack.c.l.b16 %v723
        %v2538 = vunpack.c.h.b16 %v723
        %v2539 = vunpack.c.l.b16 %v724
        %v2540 = vunpack.c.h.b16 %v724
        %v2541 = vunpack.c.l.b16 %v725
        %v2542 = vunpack.c.h.b16 %v725
        %v2543 = vunpack.c.l.b16 %v726
        %v2544 = vunpack.c.h.b16 %v726
        %v2545 = vunpack.c.l.b16 %v727
        %v2546 = vunpack.c.h.b16 %v727
        %v2547 = vunpack.c.l.b16 %v728
        %v2548 = vunpack.c.h.b16 %v728
        %v2549 = vunpack.c.l.b16 %v729
        %v2550 = vunpack.c.h.b16 %v729
        %v2551 = vunpack.c.l.b16 %v730
        %v2552 = vunpack.c.h.b16 %v730
        %v2553 = vunpack.c.l.b16 %v731
        %v2554 = vunpack.c.h.b16 %v731
        %v2555 = vunpack.c.l.b16 %v732
        %v2556 = vunpack.c.h.b16 %v732
        %v2557 = vunpack.c.l.b16 %v733
        %v2558 = vunpack.c.h.b16 %v733
        %v2559 = vunpack.c.l.b16 %v734
        %v2560 = vunpack.c.h.b16 %v734
        %v2561 = vunpack.c.l.b16 %v735
        %v2562 = vunpack.c.h.b16 %v735
        %v2563 = vunpack.c.l.b16 %v736
        %v2564 = vunpack.c.h.b16 %v736
        %v2565 = vunpack.c.l.b16 %v737
        %v2566 = vunpack.c.h.b16 %v737
        %v2567 = vunpack.c.l.b16 %v738
        %v2568 = vunpack.c.h.b16 %v738
        %v2569 = vunpack.c.l.b16 %v739
        %v2570 = vunpack.c.h.b16 %v739
        %v2571 = vunpack.c.l.b16 %v740
        %v2572 = vunpack.c.h.b16 %v740
        %v2573 = vunpack.c.l.b16 %v741
        %v2574 = vunpack.c.h.b16 %v741
        %v2575 = vunpack.c.l.b16 %v742
        %v2576 = vunpack.c.h.b16 %v742
        %v2577 = vunpack.c.l.b16 %v743
        %v2578 = vunpack.c.h.b16 %v743
        %v2579 = vunpack.c.l.b16 %v744
        %v2580 = vunpack.c.h.b16 %v744
        %v2581 = vunpack.c.l.b16 %v745
        %v2582 = vunpack.c.h.b16 %v745
        %v2583 = vunpack.c.l.b16 %v746
        %v2584 = vunpack.c.h.b16 %v746
        %v2585 = vunpack.c.l.b16 %v747
        %v2586 = vunpack.c.h.b16 %v747
        %v2587 = vunpack.c.l.b16 %v748
        %v2588 = vunpack.c.h.b16 %v748
        %v2589 = vunpack.c.l.b16 %v749
        %v2590 = vunpack.c.h.b16 %v749
        %v2591 = vunpack.c.l.b16 %v750
        %v2592 = vunpack.c.h.b16 %v750
        %v2593 = vunpack.c.l.b16 %v751
        %v2594 = vunpack.c.h.b16 %v751
        %v2595 = vunpack.c.l.b16 %v752
        %v2596 = vunpack.c.h.b16 %v752
        %v2597 = vunpack.c.l.b16 %v753
        %v2598 = vunpack.c.h.b16 %v753
        %v2599 = vunpack.c.l.b16 %v754
        %v2600 = vunpack.c.h.b16 %v754
        %v2601 = vunpack.c.l.b16 %v755
        %v2602 = vunpack.c.h.b16 %v755
        %v2603 = vunpack.c.l.b16 %v756
        %v2604 = vunpack.c.h.b16 %v756
        %v2605 = vunpack.c.l.b16 %v757
        %v2606 = vunpack.c.h.b16 %v757
        %v2607 = vunpack.c.l.b16 %v758
        %v2608 = vunpack.c.h.b16 %v758
        %v2609 = vunpack.c.l.b16 %v759
        %v2610 = vunpack.c.h.b16 %v759
        %v2611 = vunpack.c.l.b16 %v760
        %v2612 = vunpack.c.h.b16 %v760
        %v2613 = vunpack.c.l.b16 %v761
        %v2614 = vunpack.c.h.b16 %v761
        %v2615 = vunpack.c.l.b16 %v762
        %v2616 = vunpack.c.h.b16 %v762
        %v2617 = vunpack.c.l.b16 %v763
        %v2618 = vunpack.c.h.b16 %v763
        %v2619 = vunpack.c.l.b16 %v764
        %v2620 = vunpack.c.h.b16 %v764
        %v2621 = vunpack.c.l.b16 %v765
        %v2622 = vunpack.c.h.b16 %v765
        %v2623 = vunpack.c.l.b16 %v766
        %v2624 = vunpack.c.h.b16 %v766
        %v2625 = vunpack.c.l.b16 %v767
        %v2626 = vunpack.c.h.b16 %v767
        %v2627 = vunpack.c.l.b16 %v768
        %v2628 = vunpack.c.h.b16 %v768
        %v2629 = vunpack.c.l.b16 %v769
        %v2630 = vunpack.c.h.b16 %v769
        %v2631 = vunpack.c.l.b16 %v770
        %v2632 = vunpack.c.h.b16 %v770
        %v2633 = vunpack.c.l.b16 %v771
        %v2634 = vunpack.c.h.b16 %v771
        %v2635 = vunpack.c.l.b16 %v772
        %v2636 = vunpack.c.h.b16 %v772
        %v2637 = vunpack.c.l.b16 %v773
        %v2638 = vunpack.c.h.b16 %v773
        %v2639 = vunpack.c.l.b16 %v774
        %v2640 = vunpack.c.h.b16 %v774
        %v2641 = vunpack.c.l.b16 %v775
        %v2642 = vunpack.c.h.b16 %v775
        %v2643 = vunpack.c.l.b16 %v776
        %v2644 = vunpack.c.h.b16 %v776
        %v2645 = vunpack.c.l.b16 %v777
        %v2646 = vunpack.c.h.b16 %v777
        %v2647 = vunpack.c.l.b16 %v778
        %v2648 = vunpack.c.h.b16 %v778
        %v2649 = vunpack.c.l.b16 %v779
        %v2650 = vunpack.c.h.b16 %v779
        %v2651 = vunpack.c.l.b16 %v780
        %v2652 = vunpack.c.h.b16 %v780
        %v2653 = vunpack.c.l.b16 %v781
        %v2654 = vunpack.c.h.b16 %v781
        %v2655 = vunpack.c.l.b16 %v782
        %v2656 = vunpack.c.h.b16 %v782
        %v2657 = vunpack.c.l.b16 %v783
        %v2658 = vunpack.c.h.b16 %v783
        %v2659 = vunpack.c.l.b16 %v784
        %v2660 = vunpack.c.h.b16 %v784
        %v2661 = vunpack.c.l.b16 %v785
        %v2662 = vunpack.c.h.b16 %v785
        %v2663 = vunpack.c.l.b16 %v786
        %v2664 = vunpack.c.h.b16 %v786
        %v2665 = vunpack.c.l.b16 %v787
        %v2666 = vunpack.c.h.b16 %v787
        %v2667 = vunpack.c.l.b16 %v788
        %v2668 = vunpack.c.h.b16 %v788
        %v2669 = vunpack.c.l.b16 %v789
        %v2670 = vunpack.c.h.b16 %v789
        %v2671 = vunpack.c.l.b16 %v790
        %v2672 = vunpack.c.h.b16 %v790
        %v2673 = vunpack.c.l.b16 %v791
        %v2674 = vunpack.c.h.b16 %v791
        %v2675 = vunpack.c.l.b16 %v792
        %v2676 = vunpack.c.h.b16 %v792
        %v2677 = vunpack.c.l.b16 %v793
        %v2678 = vunpack.c.h.b16 %v793
        %v2679 = vunpack.c.l.b16 %v794
        %v2680 = vunpack.c.h.b16 %v794
        %v2681 = vunpack.c.l.b16 %v795
        %v2682 = vunpack.c.h.b16 %v795
        %v2683 = vunpack.c.l.b16 %v796
        %v2684 = vunpack.c.h.b16 %v796
        %v2685 = vunpack.c.l.b16 %v797
        %v2686 = vunpack.c.h.b16 %v797
        %v2687 = vunpack.c.l.b16 %v798
        %v2688 = vunpack.c.h.b16 %v798
        %v2689 = vunpack.c.l.b16 %v799
        %v2690 = vunpack.c.h.b16 %v799
        %v2691 = vunpack.c.l.b16 %v800
        %v2692 = vunpack.c.h.b16 %v800
        %v2693 = vunpack.c.l.b16 %v801
        %v2694 = vunpack.c.h.b16 %v801
        %v2695 = vunpack.c.l.b16 %v802
        %v2696 = vunpack.c.h.b16 %v802
        %v2697 = vunpack.c.l.b16 %v803
        %v2698 = vunpack.c.h.b16 %v803
        %v2699 = vunpack.c.l.b16 %v804
        %v2700 = vunpack.c.h.b16 %v804
        %v2701 = vunpack.c.l.b16 %v805
        %v2702 = vunpack.c.h.b16 %v805
        %v2703 = vunpack.c.l.b16 %v806
        %v2704 = vunpack.c.h.b16 %v806
        %v2705 = vunpack.c.l.b16 %v807
        %v2706 = vunpack.c.h.b16 %v807
        %v2707 = vunpack.c.l.b16 %v808
        %v2708 = vunpack.c.h.b16 %v808
        %v2709 = vunpack.c.l.b16 %v809
        %v2710 = vunpack.c.h.b16 %v809
        %v2711 = vunpack.c.l.b16 %v810
        %v2712 = vunpack.c.h.b16 %v810
        %v2713 = vunpack.c.l.b16 %v811
        %v2714 = vunpack.c.h.b16 %v811
        %v2715 = vunpack.c.l.b16 %v812
        %v2716 = vunpack.c.h.b16 %v812
        %v2717 = vunpack.c.l.b16 %v813
        %v2718 = vunpack.c.h.b16 %v813
        %v2719 = vunpack.c.l.b16 %v814
        %v2720 = vunpack.c.h.b16 %v814
        %v2721 = vunpack.c.l.b16 %v815
        %v2722 = vunpack.c.h.b16 %v815
        %v2723 = vunpack.c.l.b16 %v816
        %v2724 = vunpack.c.h.b16 %v816
        %v2725 = vunpack.c.l.b16 %v817
        %v2726 = vunpack.c.h.b16 %v817
        %v2727 = vunpack.c.l.b16 %v818
        %v2728 = vunpack.c.h.b16 %v818
        %v2729 = vunpack.c.l.b16 %v819
        %v2730 = vunpack.c.h.b16 %v819
        %v2731 = vunpack.c.l.b16 %v820
        %v2732 = vunpack.c.h.b16 %v820
        %v2733 = vunpack.c.l.b16 %v821
        %v2734 = vunpack.c.h.b16 %v821
        %v2735 = vunpack.c.l.b16 %v822
        %v2736 = vunpack.c.h.b16 %v822
        %v2737 = vunpack.c.l.b16 %v823
        %v2738 = vunpack.c.h.b16 %v823
        %v2739 = vunpack.c.l.b16 %v824
        %v2740 = vunpack.c.h.b16 %v824
        %v2741 = vunpack.c.l.b16 %v825
        %v2742 = vunpack.c.h.b16 %v825
        %v2743 = vunpack.c.l.b16 %v826
        %v2744 = vunpack.c.h.b16 %v826
        %v2745 = vunpack.c.l.b16 %v827
        %v2746 = vunpack.c.h.b16 %v827
        %v2747 = vunpack.c.l.b16 %v828
        %v2748 = vunpack.c.h.b16 %v828
        %v2749 = vunpack.c.l.b16 %v829
        %v2750 = vunpack.c.h.b16 %v829
        %v2751 = vunpack.c.l.b16 %v830
        %v2752 = vunpack.c.h.b16 %v830
        %v2753 = vunpack.c.l.b16 %v831
        %v2754 = vunpack.c.h.b16 %v831
        %v2755 = vunpack.c.l.b16 %v832
        %v2756 = vunpack.c.h.b16 %v832
        %v2757 = vunpack.c.l.b16 %v833
        %v2758 = vunpack.c.h.b16 %v833
        %v2759 = vunpack.c.l.b16 %v834
        %v2760 = vunpack.c.h.b16 %v834
        %v2761 = vunpack.c.l.b16 %v835
        %v2762 = vunpack.c.h.b16 %v835
        %v2763 = vunpack.c.l.b16 %v836
        %v2764 = vunpack.c.h.b16 %v836
        %v2765 = vunpack.c.l.b16 %v837
        %v2766 = vunpack.c.h.b16 %v837
        %v2767 = vunpack.c.l.b16 %v838
        %v2768 = vunpack.c.h.b16 %v838
        %v2769 = vunpack.c.l.b16 %v839
        %v2770 = vunpack.c.h.b16 %v839
        %v2771 = vunpack.c.l.b16 %v840
        %v2772 = vunpack.c.h.b16 %v840
        %v2773 = vunpack.c.l.b16 %v841
        %v2774 = vunpack.c.h.b16 %v841
        %v2775 = vunpack.c.l.b16 %v842
        %v2776 = vunpack.c.h.b16 %v842
        %v2777 = vunpack.c.l.b16 %v843
        %v2778 = vunpack.c.h.b16 %v843
        %v2779 = vunpack.c.l.b16 %v844
        %v2780 = vunpack.c.h.b16 %v844
        %v2781 = vunpack.c.l.b16 %v845
        %v2782 = vunpack.c.h.b16 %v845
        %v2783 = vunpack.c.l.b16 %v846
        %v2784 = vunpack.c.h.b16 %v846
        %v2785 = vunpack.c.l.b16 %v847
        %v2786 = vunpack.c.h.b16 %v847
        %v2787 = vunpack.c.l.b16 %v848
        %v2788 = vunpack.c.h.b16 %v848
        %v2789 = vunpack.c.l.b16 %v849
        %v2790 = vunpack.c.h.b16 %v849
        %v2791 = vunpack.c.l.b16 %v850
        %v2792 = vunpack.c.h.b16 %v850
        %v2793 = vunpack.c.l.b16 %v851
        %v2794 = vunpack.c.h.b16 %v851
        %v2795 = vunpack.c.l.b16 %v852
        %v2796 = vunpack.c.h.b16 %v852
        %v2797 = vunpack.c.l.b16 %v853
        %v2798 = vunpack.c.h.b16 %v853
        %v2799 = vunpack.c.l.b16 %v854
        %v2800 = vunpack.c.h.b16 %v854
        %v2801 = vunpack.c.l.b16 %v855
        %v2802 = vunpack.c.h.b16 %v855
        %v2803 = vunpack.c.l.b16 %v856
        %v2804 = vunpack.c.h.b16 %v856
        %v2805 = vunpack.c.l.b16 %v857
        %v2806 = vunpack.c.h.b16 %v857
        %v2807 = vunpack.c.l.b16 %v858
        %v2808 = vunpack.c.h.b16 %v858
        %v2809 = vunpack.c.l.b16 %v859
        %v2810 = vunpack.c.h.b16 %v859
        %v2811 = vunpack.c.l.b16 %v860
        %v2812 = vunpack.c.h.b16 %v860
        %v2813 = vunpack.c.l.b16 %v861
        %v2814 = vunpack.c.h.b16 %v861
        %v2815 = vunpack.c.l.b16 %v862
        %v2816 = vunpack.c.h.b16 %v862
        %v2817 = vunpack.c.l.b16 %v863
        %v2818 = vunpack.c.h.b16 %v863
        %v2819 = vunpack.c.l.b16 %v864
        %v2820 = vunpack.c.h.b16 %v864
        %v2821 = vunpack.c.l.b16 %v865
        %v2822 = vunpack.c.h.b16 %v865
        %v2823 = vunpack.c.l.b16 %v866
        %v2824 = vunpack.c.h.b16 %v866
        %v2825 = vunpack.c.l.b16 %v867
        %v2826 = vunpack.c.h.b16 %v867
        %v2827 = vunpack.c.l.b16 %v868
        %v2828 = vunpack.c.h.b16 %v868
        %v2829 = vunpack.c.l.b16 %v869
        %v2830 = vunpack.c.h.b16 %v869
        %v2831 = vunpack.c.l.b16 %v870
        %v2832 = vunpack.c.h.b16 %v870
        %v2833 = vunpack.c.l.b16 %v871
        %v2834 = vunpack.c.h.b16 %v871
        %v2835 = vunpack.c.l.b16 %v872
        %v2836 = vunpack.c.h.b16 %v872
        %v2837 = vunpack.c.l.b16 %v873
        %v2838 = vunpack.c.h.b16 %v873
        %v2839 = vunpack.c.l.b16 %v874
        %v2840 = vunpack.c.h.b16 %v874
        %v2841 = vunpack.c.l.b16 %v875
        %v2842 = vunpack.c.h.b16 %v875
        %v2843 = vunpack.c.l.b16 %v876
        %v2844 = vunpack.c.h.b16 %v876
        %v2845 = vunpack.c.l.b16 %v877
        %v2846 = vunpack.c.h.b16 %v877
        %v2847 = vunpack.c.l.b16 %v878
        %v2848 = vunpack.c.h.b16 %v878
        %v2849 = vunpack.c.l.b16 %v879
        %v2850 = vunpack.c.h.b16 %v879
        %v2851 = vunpack.c.l.b16 %v880
        %v2852 = vunpack.c.h.b16 %v880
        %v2853 = vunpack.c.l.b16 %v881
        %v2854 = vunpack.c.h.b16 %v881
        %v2855 = vunpack.c.l.b16 %v882
        %v2856 = vunpack.c.h.b16 %v882
        %v2857 = vunpack.c.l.b16 %v883
        %v2858 = vunpack.c.h.b16 %v883
        %v2859 = vunpack.c.l.b16 %v884
        %v2860 = vunpack.c.h.b16 %v884
        %v2861 = vunpack.c.l.b16 %v885
        %v2862 = vunpack.c.h.b16 %v885
        %v2863 = vunpack.c.l.b16 %v886
        %v2864 = vunpack.c.h.b16 %v886
        %v2865 = vunpack.c.l.b16 %v887
        %v2866 = vunpack.c.h.b16 %v887
        %v2867 = vunpack.c.l.b16 %v888
        %v2868 = vunpack.c.h.b16 %v888
        %v2869 = vunpack.c.l.b16 %v889
        %v2870 = vunpack.c.h.b16 %v889
        %v2871 = vunpack.c.l.b16 %v890
        %v2872 = vunpack.c.h.b16 %v890
        %v2873 = vunpack.c.l.b16 %v891
        %v2874 = vunpack.c.h.b16 %v891
        %v2875 = vunpack.c.l.b16 %v892
        %v2876 = vunpack.c.h.b16 %v892
        %v2877 = vunpack.c.l.b16 %v893
        %v2878 = vunpack.c.h.b16 %v893
        %v2879 = vunpack.c.l.b16 %v894
        %v2880 = vunpack.c.h.b16 %v894
        %v2881 = vunpack.c.l.b16 %v895
        %v2882 = vunpack.c.h.b16 %v895
        %v2883 = vunpack.c.l.b16 %v896
        %v2884 = vunpack.c.h.b16 %v896
        %v2885 = vunpack.c.l.b16 %v897
        %v2886 = vunpack.c.h.b16 %v897
        %v2887 = vunpack.c.l.b16 %v898
        %v2888 = vunpack.c.h.b16 %v898
        %v2889 = vunpack.c.l.b16 %v899
        %v2890 = vunpack.c.h.b16 %v899
        %v2891 = vunpack.c.l.b16 %v900
        %v2892 = vunpack.c.h.b16 %v900
        %v2893 = vunpack.c.l.b16 %v901
        %v2894 = vunpack.c.h.b16 %v901
        %v2895 = vunpack.c.l.b16 %v902
        %v2896 = vunpack.c.h.b16 %v902
        %v2897 = vunpack.c.l.b16 %v903
        %v2898 = vunpack.c.h.b16 %v903
        %v2899 = vunpack.c.l.b16 %v904
        %v2900 = vunpack.c.h.b16 %v904
        %v2901 = vunpack.c.l.b16 %v905
        %v2902 = vunpack.c.h.b16 %v905
        %v2903 = vunpack.c.l.b16 %v906
        %v2904 = vunpack.c.h.b16 %v906
        %v2905 = vunpack.c.l.b16 %v907
        %v2906 = vunpack.c.h.b16 %v907
        %v2907 = vunpack.c.l.b16 %v908
        %v2908 = vunpack.c.h.b16 %v908
        %v2909 = vunpack.c.l.b16 %v909
        %v2910 = vunpack.c.h.b16 %v909
        %v2911 = vunpack.c.l.b16 %v910
        %v2912 = vunpack.c.h.b16 %v910
        %v2913 = vunpack.c.l.b16 %v911
        %v2914 = vunpack.c.h.b16 %v911
        %v2915 = vunpack.c.l.b16 %v912
        %v2916 = vunpack.c.h.b16 %v912
        %v2917 = vunpack.c.l.b16 %v913
        %v2918 = vunpack.c.h.b16 %v913
        %v2919 = vunpack.c.l.b16 %v914
        %v2920 = vunpack.c.h.b16 %v914
        %v2921 = vunpack.c.l.b16 %v915
        %v2922 = vunpack.c.h.b16 %v915
        %v2923 = vunpack.c.l.b16 %v916
        %v2924 = vunpack.c.h.b16 %v916
        %v2925 = vunpack.c.l.b16 %v917
        %v2926 = vunpack.c.h.b16 %v917
        %v2927 = vunpack.c.l.b16 %v918
        %v2928 = vunpack.c.h.b16 %v918
        %v2929 = vunpack.c.l.b16 %v919
        %v2930 = vunpack.c.h.b16 %v919
        %v2931 = vunpack.c.l.b16 %v920
        %v2932 = vunpack.c.h.b16 %v920
        %v2933 = vunpack.c.l.b16 %v921
        %v2934 = vunpack.c.h.b16 %v921
        %v2935 = vunpack.c.l.b16 %v922
        %v2936 = vunpack.c.h.b16 %v922
        %v2937 = vunpack.c.l.b16 %v923
        %v2938 = vunpack.c.h.b16 %v923
        %v2939 = vunpack.c.l.b16 %v924
        %v2940 = vunpack.c.h.b16 %v924
        %v2941 = vunpack.c.l.b16 %v925
        %v2942 = vunpack.c.h.b16 %v925
        %v2943 = vunpack.c.l.b16 %v926
        %v2944 = vunpack.c.h.b16 %v926
        %v2945 = vunpack.c.l.b16 %v927
        %v2946 = vunpack.c.h.b16 %v927
        %v2947 = vunpack.c.l.b16 %v928
        %v2948 = vunpack.c.h.b16 %v928
        %v2949 = vunpack.c.l.b16 %v929
        %v2950 = vunpack.c.h.b16 %v929
        %v2951 = vunpack.c.l.b16 %v930
        %v2952 = vunpack.c.h.b16 %v930
        %v2953 = vunpack.c.l.b16 %v931
        %v2954 = vunpack.c.h.b16 %v931
        %v2955 = vunpack.c.l.b16 %v932
        %v2956 = vunpack.c.h.b16 %v932
        %v2957 = vunpack.c.l.b16 %v933
        %v2958 = vunpack.c.h.b16 %v933
        %v2959 = vunpack.c.l.b16 %v934
        %v2960 = vunpack.c.h.b16 %v934
        %v2961 = vunpack.c.l.b16 %v935
        %v2962 = vunpack.c.h.b16 %v935
        %v2963 = vunpack.c.l.b16 %v936
        %v2964 = vunpack.c.h.b16 %v936
        %v2965 = vunpack.c.l.b16 %v937
        %v2966 = vunpack.c.h.b16 %v937
        %v2967 = vunpack.c.l.b16 %v938
        %v2968 = vunpack.c.h.b16 %v938
        %v2969 = vunpack.c.l.b16 %v939
        %v2970 = vunpack.c.h.b16 %v939
        %v2971 = vunpack.c.l.b16 %v940
        %v2972 = vunpack.c.h.b16 %v940
        %v2973 = vunpack.c.l.b16 %v941
        %v2974 = vunpack.c.h.b16 %v941
        %v2975 = vunpack.c.l.b16 %v942
        %v2976 = vunpack.c.h.b16 %v942
        %v2977 = vunpack.c.l.b16 %v943
        %v2978 = vunpack.c.h.b16 %v943
        %v2979 = vunpack.c.l.b16 %v944
        %v2980 = vunpack.c.h.b16 %v944
        %v2981 = vunpack.c.l.b16 %v945
        %v2982 = vunpack.c.h.b16 %v945
        %v2983 = vunpack.c.l.b16 %v946
        %v2984 = vunpack.c.h.b16 %v946
        %v2985 = vunpack.c.l.b16 %v947
        %v2986 = vunpack.c.h.b16 %v947
        %v2987 = vunpack.c.l.b16 %v948
        %v2988 = vunpack.c.h.b16 %v948
        %v2989 = vunpack.c.l.b16 %v949
        %v2990 = vunpack.c.h.b16 %v949
        %v2991 = vunpack.c.l.b16 %v950
        %v2992 = vunpack.c.h.b16 %v950
        %v2993 = vunpack.c.l.b16 %v951
        %v2994 = vunpack.c.h.b16 %v951
        %v2995 = vunpack.c.l.b16 %v952
        %v2996 = vunpack.c.h.b16 %v952
        %v2997 = vunpack.c.l.b16 %v953
        %v2998 = vunpack.c.h.b16 %v953
        %v2999 = vunpack.c.l.b16 %v954
        %v3000 = vunpack.c.h.b16 %v954
        %v3001 = vunpack.c.l.b16 %v955
        %v3002 = vunpack.c.h.b16 %v955
        %v3003 = vunpack.c.l.b16 %v956
        %v3004 = vunpack.c.h.b16 %v956
        %v3005 = vunpack.c.l.b16 %v957
        %v3006 = vunpack.c.h.b16 %v957
        %v3007 = vunpack.c.l.b16 %v958
        %v3008 = vunpack.c.h.b16 %v958
        %v3009 = vunpack.c.l.b16 %v959
        %v3010 = vunpack.c.h.b16 %v959
        %v3011 = vunpack.c.l.b16 %v960
        %v3012 = vunpack.c.h.b16 %v960
        %v3013 = vunpack.c.l.b16 %v961
        %v3014 = vunpack.c.h.b16 %v961
        %v3015 = vunpack.c.l.b16 %v962
        %v3016 = vunpack.c.h.b16 %v962
        %v3017 = vunpack.c.l.b16 %v963
        %v3018 = vunpack.c.h.b16 %v963
        %v3019 = vunpack.c.l.b16 %v964
        %v3020 = vunpack.c.h.b16 %v964
        %v3021 = vunpack.c.l.b16 %v965
        %v3022 = vunpack.c.h.b16 %v965
        %v3023 = vunpack.c.l.b16 %v966
        %v3024 = vunpack.c.h.b16 %v966
        %v3025 = vunpack.c.l.b16 %v967
        %v3026 = vunpack.c.h.b16 %v967
        %v3027 = vunpack.c.l.b16 %v968
        %v3028 = vunpack.c.h.b16 %v968
        %v3029 = vpack.c.b16 %v2519, %v2517
        %v3030 = vpack.c.b16 %v2520, %v2518
        %v3031 = vpack.c.b16 %v2523, %v2521
        %v3032 = vpack.c.b16 %v2524, %v2522
        %v3033 = vpack.c.b16 %v2527, %v2525
        %v3034 = vpack.c.b16 %v2528, %v2526
        %v3035 = vpack.c.b16 %v2531, %v2529
        %v3036 = vpack.c.b16 %v2532, %v2530
        %v3037 = vpack.c.b16 %v2535, %v2533
        %v3038 = vpack.c.b16 %v2536, %v2534
        %v3039 = vpack.c.b16 %v2539, %v2537
        %v3040 = vpack.c.b16 %v2540, %v2538
        %v3041 = vpack.c.b16 %v2543, %v2541
        %v3042 = vpack.c.b16 %v2544, %v2542
        %v3043 = vpack.c.b16 %v2547, %v2545
        %v3044 = vpack.c.b16 %v2548, %v2546
        %v3045 = vpack.c.b16 %v2551, %v2549
        %v3046 = vpack.c.b16 %v2552, %v2550
        %v3047 = vpack.c.b16 %v2555, %v2553
        %v3048 = vpack.c.b16 %v2556, %v2554
        %v3049 = vpack.c.b16 %v2559, %v2557
        %v3050 = vpack.c.b16 %v2560, %v2558
        %v3051 = vpack.c.b16 %v2563, %v2561
        %v3052 = vpack.c.b16 %v2564, %v2562
        %v3053 = vpack.c.b16 %v2567, %v2565
        %v3054 = vpack.c.b16 %v2568, %v2566
        %v3055 = vpack.c.b16 %v2571, %v2569
        %v3056 = vpack.c.b16 %v2572, %v2570
        %v3057 = vpack.c.b16 %v2575, %v2573
        %v3058 = vpack.c.b16 %v2576, %v2574
        %v3059 = vpack.c.b16 %v2579, %v2577
        %v3060 = vpack.c.b16 %v2580, %v2578
        %v3061 = vpack.c.b16 %v2583, %v2581
        %v3062 = vpack.c.b16 %v2584, %v2582
        %v3063 = vpack.c.b16 %v2587, %v2585
        %v3064 = vpack.c.b16 %v2588, %v2586
        %v3065 = vpack.c.b16 %v2591, %v2589
        %v3066 = vpack.c.b16 %v2592, %v2590
        %v3067 = vpack.c.b16 %v2595, %v2593
        %v3068 = vpack.c.b16 %v2596, %v2594
        %v3069 = vpack.c.b16 %v2599, %v2597
        %v3070 = vpack.c.b16 %v2600, %v2598
        %v3071 = vpack.c.b16 %v2603, %v2601
        %v3072 = vpack.c.b16 %v2604, %v2602
        %v3073 = vpack.c.b16 %v2607, %v2605
        %v3074 = vpack.c.b16 %v2608, %v2606
        %v3075 = vpack.c.b16 %v2611, %v2609
        %v3076 = vpack.c.b16 %v2612, %v2610
        %v3077 = vpack.c.b16 %v2615, %v2613
        %v3078 = vpack.c.b16 %v2616, %v2614
        %v3079 = vpack.c.b16 %v2619, %v2617
        %v3080 = vpack.c.b16 %v2620, %v2618
        %v3081 = vpack.c.b16 %v2623, %v2621
        %v3082 = vpack.c.b16 %v2624, %v2622
        %v3083 = vpack.c.b16 %v2627, %v2625
        %v3084 = vpack.c.b16 %v2628, %v2626
        %v3085 = vpack.c.b16 %v2631, %v2629
        %v3086 = vpack.c.b16 %v2632, %v2630
        %v3087 = vpack.c.b16 %v2635, %v2633
        %v3088 = vpack.c.b16 %v2636, %v2634
        %v3089 = vpack.c.b16 %v2639, %v2637
        %v3090 = vpack.c.b16 %v2640, %v2638
        %v3091 = vpack.c.b16 %v2643, %v2641
        %v3092 = vpack.c.b16 %v2644, %v2642
        %v3093 = vpack.c.b16 %v2647, %v2645
        %v3094 = vpack.c.b16 %v2648, %v2646
        %v3095 = vpack.c.b16 %v2651, %v2649
        %v3096 = vpack.c.b16 %v2652, %v2650
        %v3097 = vpack.c.b16 %v2655, %v2653
        %v3098 = vpack.c.b16 %v2656, %v2654
        %v3099 = vpack.c.b16 %v2659, %v2657
        %v3100 = vpack.c.b16 %v2660, %v2658
        %v3101 = vpack.c.b16 %v2663, %v2661
        %v3102 = vpack.c.b16 %v2664, %v2662
        %v3103 = vpack.c.b16 %v2667, %v2665
        %v3104 = vpack.c.b16 %v2668, %v2666
        %v3105 = vpack.c.b16 %v2671, %v2669
        %v3106 = vpack.c.b16 %v2672, %v2670
        %v3107 = vpack.c.b16 %v2675, %v2673
        %v3108 = vpack.c.b16 %v2676, %v2674
        %v3109 = vpack.c.b16 %v2679, %v2677
        %v3110 = vpack.c.b16 %v2680, %v2678
        %v3111 = vpack.c.b16 %v2683, %v2681
        %v3112 = vpack.c.b16 %v2684, %v2682
        %v3113 = vpack.c.b16 %v2687, %v2685
        %v3114 = vpack.c.b16 %v2688, %v2686
        %v3115 = vpack.c.b16 %v2691, %v2689
        %v3116 = vpack.c.b16 %v2692, %v2690
        %v3117 = vpack.c.b16 %v2695, %v2693
        %v3118 = vpack.c.b16 %v2696, %v2694
        %v3119 = vpack.c.b16 %v2699, %v2697
        %v3120 = vpack.c.b16 %v2700, %v2698
        %v3121 = vpack.c.b16 %v2703, %v2701
        %v3122 = vpack.c.b16 %v2704, %v2702
        %v3123 = vpack.c.b16 %v2707, %v2705
        %v3124 = vpack.c.b16 %v2708, %v2706
        %v3125 = vpack.c.b16 %v2711, %v2709
        %v3126 = vpack.c.b16 %v2712, %v2710
        %v3127 = vpack.c.b16 %v2715, %v2713
        %v3128 = vpack.c.b16 %v2716, %v2714
        %v3129 = vpack.c.b16 %v2719, %v2717
        %v3130 = vpack.c.b16 %v2720, %v2718
        %v3131 = vpack.c.b16 %v2723, %v2721
        %v3132 = vpack.c.b16 %v2724, %v2722
        %v3133 = vpack.c.b16 %v2727, %v2725
        %v3134 = vpack.c.b16 %v2728, %v2726
        %v3135 = vpack.c.b16 %v2731, %v2729
        %v3136 = vpack.c.b16 %v2732, %v2730
        %v3137 = vpack.c.b16 %v2735, %v2733
        %v3138 = vpack.c.b16 %v2736, %v2734
        %v3139 = vpack.c.b16 %v2739, %v2737
        %v3140 = vpack.c.b16 %v2740, %v2738
        %v3141 = vpack.c.b16 %v2743, %v2741
        %v3142 = vpack.c.b16 %v2744, %v2742
        %v3143 = vpack.c.b16 %v2747, %v2745
        %v3144 = vpack.c.b16 %v2748, %v2746
        %v3145 = vpack.c.b16 %v2751, %v2749
        %v3146 = vpack.c.b16 %v2752, %v2750
        %v3147 = vpack.c.b16 %v2755, %v2753
        %v3148 = vpack.c.b16 %v2756, %v2754
        %v3149 = vpack.c.b16 %v2759, %v2757
        %v3150 = vpack.c.b16 %v2760, %v2758
        %v3151 = vpack.c.b16 %v2763, %v2761
        %v3152 = vpack.c.b16 %v2764, %v2762
        %v3153 = vpack.c.b16 %v2767, %v2765
        %v3154 = vpack.c.b16 %v2768, %v2766
        %v3155 = vpack.c.b16 %v2771, %v2769
        %v3156 = vpack.c.b16 %v2772, %v2770
        %v3157 = vpack.c.b16 %v2775, %v2773
        %v3158 = vpack.c.b16 %v2776, %v2774
        %v3159 = vpack.c.b16 %v2779, %v2777
        %v3160 = vpack.c.b16 %v2780, %v2778
        %v3161 = vpack.c.b16 %v2783, %v2781
        %v3162 = vpack.c.b16 %v2784, %v2782
        %v3163 = vpack.c.b16 %v2787, %v2785
        %v3164 = vpack.c.b16 %v2788, %v2786
        %v3165 = vpack.c.b16 %v2791, %v2789
        %v3166 = vpack.c.b16 %v2792, %v2790
        %v3167 = vpack.c.b16 %v2795, %v2793
        %v3168 = vpack.c.b16 %v2796, %v2794
        %v3169 = vpack.c.b16 %v2799, %v2797
        %v3170 = vpack.c.b16 %v2800, %v2798
        %v3171 = vpack.c.b16 %v2803, %v2801
        %v3172 = vpack.c.b16 %v2804, %v2802
        %v3173 = vpack.c.b16 %v2807, %v2805
        %v3174 = vpack.c.b16 %v2808, %v2806
        %v3175 = vpack.c.b16 %v2811, %v2809
        %v3176 = vpack.c.b16 %v2812, %v2810
        %v3177 = vpack.c.b16 %v2815, %v2813
        %v3178 = vpack.c.b16 %v2816, %v2814
        %v3179 = vpack.c.b16 %v2819, %v2817
        %v3180 = vpack.c.b16 %v2820, %v2818
        %v3181 = vpack.c.b16 %v2823, %v2821
        %v3182 = vpack.c.b16 %v2824, %v2822
        %v3183 = vpack.c.b16 %v2827, %v2825
        %v3184 = vpack.c.b16 %v2828, %v2826
        %v3185 = vpack.c.b16 %v2831, %v2829
        %v3186 = vpack.c.b16 %v2832, %v2830
        %v3187 = vpack.c.b16 %v2835, %v2833
        %v3188 = vpack.c.b16 %v2836, %v2834
        %v3189 = vpack.c.b16 %v2839, %v2837
        %v3190 = vpack.c.b16 %v2840, %v2838
        %v3191 = vpack.c.b16 %v2843, %v2841
        %v3192 = vpack.c.b16 %v2844, %v2842
        %v3193 = vpack.c.b16 %v2847, %v2845
        %v3194 = vpack.c.b16 %v2848, %v2846
        %v3195 = vpack.c.b16 %v2851, %v2849
        %v3196 = vpack.c.b16 %v2852, %v2850
        %v3197 = vpack.c.b16 %v2855, %v2853
        %v3198 = vpack.c.b16 %v2856, %v2854
        %v3199 = vpack.c.b16 %v2859, %v2857
        %v3200 = vpack.c.b16 %v2860, %v2858
        %v3201 = vpack.c.b16 %v2863, %v2861
        %v3202 = vpack.c.b16 %v2864, %v2862
        %v3203 = vpack.c.b16 %v2867, %v2865
        %v3204 = vpack.c.b16 %v2868, %v2866
        %v3205 = vpack.c.b16 %v2871, %v2869
        %v3206 = vpack.c.b16 %v2872, %v2870
        %v3207 = vpack.c.b16 %v2875, %v2873
        %v3208 = vpack.c.b16 %v2876, %v2874
        %v3209 = vpack.c.b16 %v2879, %v2877
        %v3210 = vpack.c.b16 %v2880, %v2878
        %v3211 = vpack.c.b16 %v2883, %v2881
        %v3212 = vpack.c.b16 %v2884, %v2882
        %v3213 = vpack.c.b16 %v2887, %v2885
        %v3214 = vpack.c.b16 %v2888, %v2886
        %v3215 = vpack.c.b16 %v2891, %v2889
        %v3216 = vpack.c.b16 %v2892, %v2890
        %v3217 = vpack.c.b16 %v2895, %v2893
        %v3218 = vpack.c.b16 %v2896, %v2894
        %v3219 = vpack.c.b16 %v2899, %v2897
        %v3220 = vpack.c.b16 %v2900, %v2898
        %v3221 = vpack.c.b16 %v2903, %v2901
        %v3222 = vpack.c.b16 %v2904, %v2902
        %v3223 = vpack.c.b16 %v2907, %v2905
        %v3224 = vpack.c.b16 %v2908, %v2906
        %v3225 = vpack.c.b16 %v2911, %v2909
        %v3226 = vpack.c.b16 %v2912, %v2910
        %v3227 = vpack.c.b16 %v2915, %v2913
        %v3228 = vpack.c.b16 %v2916, %v2914
        %v3229 = vpack.c.b16 %v2919, %v2917
        %v3230 = vpack.c.b16 %v2920, %v2918
        %v3231 = vpack.c.b16 %v2923, %v2921
        %v3232 = vpack.c.b16 %v2924, %v2922
        %v3233 = vpack.c.b16 %v2927, %v2925
        %v3234 = vpack.c.b16 %v2928, %v2926
        %v3235 = vpack.c.b16 %v2931, %v2929
        %v3236 = vpack.c.b16 %v2932, %v2930
        %v3237 = vpack.c.b16 %v2935, %v2933
        %v3238 = vpack.c.b16 %v2936, %v2934
        %v3239 = vpack.c.b16 %v2939, %v2937
        %v3240 = vpack.c.b16 %v2940, %v2938
        %v3241 = vpack.c.b16 %v2943, %v2941
        %v3242 = vpack.c.b16 %v2944, %v2942
        %v3243 = vpack.c.b16 %v2947, %v2945
        %v3244 = vpack.c.b16 %v2948, %v2946
        %v3245 = vpack.c.b16 %v2951, %v2949
        %v3246 = vpack.c.b16 %v2952, %v2950
        %v3247 = vpack.c.b16 %v2955, %v2953
        %v3248 = vpack.c.b16 %v2956, %v2954
        %v3249 = vpack.c.b16 %v2959, %v2957
        %v3250 = vpack.c.b16 %v2960, %v2958
        %v3251 = vpack.c.b16 %v2963, %v2961
        %v3252 = vpack.c.b16 %v2964, %v2962
        %v3253 = vpack.c.b16 %v2967, %v2965
        %v3254 = vpack.c.b16 %v2968, %v2966
        %v3255 = vpack.c.b16 %v2971, %v2969
        %v3256 = vpack.c.b16 %v2972, %v2970
        %v3257 = vpack.c.b16 %v2975, %v2973
        %v3258 = vpack.c.b16 %v2976, %v2974
        %v3259 = vpack.c.b16 %v2979, %v2977
        %v3260 = vpack.c.b16 %v2980, %v2978
        %v3261 = vpack.c.b16 %v2983, %v2981
        %v3262 = vpack.c.b16 %v2984, %v2982
        %v3263 = vpack.c.b16 %v2987, %v2985
        %v3264 = vpack.c.b16 %v2988, %v2986
        %v3265 = vpack.c.b16 %v2991, %v2989
        %v3266 = vpack.c.b16 %v2992, %v2990
        %v3267 = vpack.c.b16 %v2995, %v2993
        %v3268 = vpack.c.b16 %v2996, %v2994
        %v3269 = vpack.c.b16 %v2999, %v2997
        %v3270 = vpack.c.b16 %v3000, %v2998
        %v3271 = vpack.c.b16 %v3003, %v3001
        %v3272 = vpack.c.b16 %v3004, %v3002
        %v3273 = vpack.c.b16 %v3007, %v3005
        %v3274 = vpack.c.b16 %v3008, %v3006
        %v3275 = vpack.c.b16 %v3011, %v3009
        %v3276 = vpack.c.b16 %v3012, %v3010
        %v3277 = vpack.c.b16 %v3015, %v3013
        %v3278 = vpack.c.b16 %v3016, %v3014
        %v3279 = vpack.c.b16 %v3019, %v3017
        %v3280 = vpack.c.b16 %v3020, %v3018
        %v3281 = vpack.c.b16 %v3023, %v3021
        %v3282 = vpack.c.b16 %v3024, %v3022
        %v3283 = vpack.c.b16 %v3027, %v3025
        %v3284 = vpack.c.b16 %v3028, %v3026
        %3541 = vmatprep.subr.bf16.mxu0 %v3030
        %3542 = vmatpush1.bf16.msra.mxu0 %v3029
        %3543 = vmatprep.subr.bf16.mxu0 %v3032
        %3544 = vmatpush1.bf16.msra.mxu0 %v3031
        %3545 = vmatprep.subr.bf16.mxu0 %v3034
        %3546 = vmatpush1.bf16.msra.mxu0 %v3033
        %3547 = vmatprep.subr.bf16.mxu0 %v3036
        %3548 = vmatpush1.bf16.msra.mxu0 %v3035
        %3549 = vmatprep.subr.bf16.mxu0 %v3038
        %3550 = vmatpush1.bf16.msra.mxu0 %v3037
        %3551 = vmatprep.subr.bf16.mxu0 %v3040
        %3552 = vmatpush1.bf16.msra.mxu0 %v3039
        %3553 = vmatprep.subr.bf16.mxu0 %v3042
        %3554 = vmatpush1.bf16.msra.mxu0 %v3041
        %3555 = vmatprep.subr.bf16.mxu0 %v3044
        %3556 = vmatpush1.bf16.msra.mxu0 %v3043
        %3557 = vmatprep.subr.bf16.mxu0 %v3046
        %3558 = vmatpush1.bf16.msra.mxu0 %v3045
        %3559 = vmatprep.subr.bf16.mxu0 %v3048
        %3560 = vmatpush1.bf16.msra.mxu0 %v3047
        %3561 = vmatprep.subr.bf16.mxu0 %v3050
        %3562 = vmatpush1.bf16.msra.mxu0 %v3049
        %3563 = vmatprep.subr.bf16.mxu0 %v3052
        %3564 = vmatpush1.bf16.msra.mxu0 %v3051
        %3565 = vmatprep.subr.bf16.mxu0 %v3054
        %3566 = vmatpush1.bf16.msra.mxu0 %v3053
        %3567 = vmatprep.subr.bf16.mxu0 %v3056
        %3568 = vmatpush1.bf16.msra.mxu0 %v3055
        %3569 = vmatprep.subr.bf16.mxu0 %v3058
        %3570 = vmatpush1.bf16.msra.mxu0 %v3057
        %3571 = vmatprep.subr.bf16.mxu0 %v3060
        %3572 = vmatpush1.bf16.msra.mxu0 %v3059
        %3573 = vmatprep.mubr.bf16.mxu0 %v1750
        %3574 = vmatmul.mubr.bf16.gmra.mrb[0].mxu0 %v1749
        %v3575 = vpop.f32.mrb[0].mxu0
        %v3576 = vadd.f32 %v974, %v3575
        %v3577 = vpop.f32.mrb[0].mxu0
        %v3578 = vadd.f32 %v978, %v3577
        %v3579 = vpop.f32.mrb[0].mxu0
        %v3580 = vadd.f32 %v974, %v3579
        %v3581 = vpop.f32.mrb[0].mxu0
        %v3582 = vadd.f32 %v978, %v3581
        %3583 = vmatprep.mubr.bf16.mxu0 %v1766
        %3584 = vmatmul.mubr.bf16.gmra.mrb[0].mxu0 %v1765
        %v3585 = vpop.f32.mrb[0].mxu0
        %v3586 = vadd.f32 %v974, %v3585
        %v3587 = vpop.f32.mrb[0].mxu0
        %v3588 = vadd.f32 %v978, %v3587
        %v3589 = vpop.f32.mrb[0].mxu0
        %v3590 = vadd.f32 %v974, %v3589
        %v3591 = vpop.f32.mrb[0].mxu0
        %v3592 = vadd.f32 %v978, %v3591
        %3593 = vmatprep.mubr.bf16.mxu0 %v1782
        %3594 = vmatmul.mubr.bf16.gmra.mrb[0].mxu0 %v1781
        %v3595 = vpop.f32.mrb[0].mxu0
        %v3596 = vadd.f32 %v974, %v3595
        %v3597 = vpop.f32.mrb[0].mxu0
        %v3598 = vadd.f32 %v978, %v3597
        %v3599 = vpop.f32.mrb[0].mxu0
        %v3600 = vadd.f32 %v974, %v3599
        %v3601 = vpop.f32.mrb[0].mxu0
        %v3602 = vadd.f32 %v978, %v3601
        %3603 = vmatprep.mubr.bf16.mxu0 %v1798
        %3604 = vmatmul.mubr.bf16.gmra.mrb[0].mxu0 %v1797
        %v3605 = vpop.f32.mrb[0].mxu0
        %v3606 = vadd.f32 %v974, %v3605
        %v3607 = vpop.f32.mrb[0].mxu0
        %v3608 = vadd.f32 %v978, %v3607
        %v3609 = vpop.f32.mrb[0].mxu0
        %v3610 = vadd.f32 %v974, %v3609
        %v3611 = vpop.f32.mrb[0].mxu0
        %v3612 = vadd.f32 %v978, %v3611
        %3613 = vmatprep.mubr.bf16.mxu0 %v1814
        %3614 = vmatmul.mubr.bf16.gmra.mrb[0].mxu0 %v1813
        %v3615 = vpop.f32.mrb[0].mxu0
        %v3616 = vadd.f32 %v974, %v3615
        %v3617 = vpop.f32.mrb[0].mxu0
        %v3618 = vadd.f32 %v978, %v3617
        %v3619 = vpop.f32.mrb[0].mxu0
        %v3620 = vadd.f32 %v974, %v3619
        %v3621 = vpop.f32.mrb[0].mxu0
        %v3622 = vadd.f32 %v978, %v3621
        %3623 = vmatprep.mubr.bf16.mxu0 %v1830
        %3624 = vmatmul.mubr.bf16.gmra.mrb[0].mxu0 %v1829
        %v3625 = vpop.f32.mrb[0].mxu0
        %v3626 = vadd.f32 %v974, %v3625
        %v3627 = vpop.f32.mrb[0].mxu0
        %v3628 = vadd.f32 %v978, %v3627
        %v3629 = vpop.f32.mrb[0].mxu0
        %v3630 = vadd.f32 %v974, %v3629
        %v3631 = vpop.f32.mrb[0].mxu0
        %v3632 = vadd.f32 %v978, %v3631
        %3633 = vmatprep.mubr.bf16.mxu0 %v1846
        %3634 = vmatmul.mubr.bf16.gmra.mrb[0].mxu0 %v1845
        %v3635 = vpop.f32.mrb[0].mxu0
        %v3636 = vadd.f32 %v974, %v3635
        %v3637 = vpop.f32.mrb[0].mxu0
        %v3638 = vadd.f32 %v978, %v3637
        %v3639 = vpop.f32.mrb[0].mxu0
        %v3640 = vadd.f32 %v974, %v3639
        %v3641 = vpop.f32.mrb[0].mxu0
        %v3642 = vadd.f32 %v978, %v3641
        %3643 = vmatprep.mubr.bf16.mxu0 %v1862
        %3644 = vmatmul.mubr.bf16.gmra.mrb[0].mxu0 %v1861
        %v3645 = vpop.f32.mrb[0].mxu0
        %v3646 = vadd.f32 %v974, %v3645
        %v3647 = vpop.f32.mrb[0].mxu0
        %v3648 = vadd.f32 %v978, %v3647
        %v3649 = vpop.f32.mrb[0].mxu0
        %v3650 = vadd.f32 %v974, %v3649
        %v3651 = vpop.f32.mrb[0].mxu0
        %v3652 = vadd.f32 %v978, %v3651
        %3653 = vmatprep.mubr.bf16.mxu0 %v1878
        %3654 = vmatmul.mubr.bf16.gmra.mrb[0].mxu0 %v1877
        %v3655 = vpop.f32.mrb[0].mxu0
        %v3656 = vadd.f32 %v974, %v3655
        %v3657 = vpop.f32.mrb[0].mxu0
        %v3658 = vadd.f32 %v978, %v3657
        %v3659 = vpop.f32.mrb[0].mxu0
        %v3660 = vadd.f32 %v974, %v3659
        %v3661 = vpop.f32.mrb[0].mxu0
        %v3662 = vadd.f32 %v978, %v3661
        %3663 = vmatprep.mubr.bf16.mxu0 %v1894
        %3664 = vmatmul.mubr.bf16.gmra.mrb[0].mxu0 %v1893
        %v3665 = vpop.f32.mrb[0].mxu0
        %v3666 = vadd.f32 %v974, %v3665
        %v3667 = vpop.f32.mrb[0].mxu0
        %v3668 = vadd.f32 %v978, %v3667
        %v3669 = vpop.f32.mrb[0].mxu0
        %v3670 = vadd.f32 %v974, %v3669
        %v3671 = vpop.f32.mrb[0].mxu0
        %v3672 = vadd.f32 %v978, %v3671
        %3673 = vmatprep.mubr.bf16.mxu0 %v1910
        %3674 = vmatmul.mubr.bf16.gmra.mrb[0].mxu0 %v1909
        %v3675 = vpop.f32.mrb[0].mxu0
        %v3676 = vadd.f32 %v974, %v3675
        %v3677 = vpop.f32.mrb[0].mxu0
        %v3678 = vadd.f32 %v978, %v3677
        %v3679 = vpop.f32.mrb[0].mxu0
        %v3680 = vadd.f32 %v974, %v3679
        %v3681 = vpop.f32.mrb[0].mxu0
        %v3682 = vadd.f32 %v978, %v3681
        %3683 = vmatprep.mubr.bf16.mxu0 %v1926
        %3684 = vmatmul.mubr.bf16.gmra.mrb[0].mxu0 %v1925
        %v3685 = vpop.f32.mrb[0].mxu0
        %v3686 = vadd.f32 %v974, %v3685
        %v3687 = vpop.f32.mrb[0].mxu0
        %v3688 = vadd.f32 %v978, %v3687
        %v3689 = vpop.f32.mrb[0].mxu0
        %v3690 = vadd.f32 %v974, %v3689
        %v3691 = vpop.f32.mrb[0].mxu0
        %v3692 = vadd.f32 %v978, %v3691
        %3693 = vmatprep.mubr.bf16.mxu0 %v1942
        %3694 = vmatmul.mubr.bf16.gmra.mrb[0].mxu0 %v1941
        %v3695 = vpop.f32.mrb[0].mxu0
        %v3696 = vadd.f32 %v974, %v3695
        %v3697 = vpop.f32.mrb[0].mxu0
        %v3698 = vadd.f32 %v978, %v3697
        %v3699 = vpop.f32.mrb[0].mxu0
        %v3700 = vadd.f32 %v974, %v3699
        %v3701 = vpop.f32.mrb[0].mxu0
        %v3702 = vadd.f32 %v978, %v3701
        %3703 = vmatprep.mubr.bf16.mxu0 %v1958
        %3704 = vmatmul.mubr.bf16.gmra.mrb[0].mxu0 %v1957
        %v3705 = vpop.f32.mrb[0].mxu0
        %v3706 = vadd.f32 %v974, %v3705
        %v3707 = vpop.f32.mrb[0].mxu0
        %v3708 = vadd.f32 %v978, %v3707
        %v3709 = vpop.f32.mrb[0].mxu0
        %v3710 = vadd.f32 %v974, %v3709
        %v3711 = vpop.f32.mrb[0].mxu0
        %v3712 = vadd.f32 %v978, %v3711
        %3713 = vmatprep.mubr.bf16.mxu0 %v1974
        %3714 = vmatmul.mubr.bf16.gmra.mrb[0].mxu0 %v1973
        %v3715 = vpop.f32.mrb[0].mxu0
        %v3716 = vadd.f32 %v974, %v3715
        %v3717 = vpop.f32.mrb[0].mxu0
        %v3718 = vadd.f32 %v978, %v3717
        %v3719 = vpop.f32.mrb[0].mxu0
        %v3720 = vadd.f32 %v974, %v3719
        %v3721 = vpop.f32.mrb[0].mxu0
        %v3722 = vadd.f32 %v978, %v3721
        %3723 = vmatprep.mubr.bf16.mxu0 %v1990
        %3724 = vmatmul.mubr.bf16.gmra.mrb[0].mxu0 %v1989
        %v3725 = vpop.f32.mrb[0].mxu0
        %v3726 = vadd.f32 %v974, %v3725
        %v3727 = vpop.f32.mrb[0].mxu0
        %v3728 = vadd.f32 %v978, %v3727
        %v3729 = vpop.f32.mrb[0].mxu0
        %v3730 = vadd.f32 %v974, %v3729
        %v3731 = vpop.f32.mrb[0].mxu0
        %v3732 = vadd.f32 %v978, %v3731
        %3733 = vdwg.mxu0
        %3734 = vmatprep.subr.bf16.mxu0 %v3062
        %3735 = vmatpush1.bf16.msra.mxu0 %v3061
        %3736 = vmatprep.subr.bf16.mxu0 %v3064
        %3737 = vmatpush1.bf16.msra.mxu0 %v3063
        %3738 = vmatprep.subr.bf16.mxu0 %v3066
        %3739 = vmatpush1.bf16.msra.mxu0 %v3065
        %3740 = vmatprep.subr.bf16.mxu0 %v3068
        %3741 = vmatpush1.bf16.msra.mxu0 %v3067
        %3742 = vmatprep.subr.bf16.mxu0 %v3070
        %3743 = vmatpush1.bf16.msra.mxu0 %v3069
        %3744 = vmatprep.subr.bf16.mxu0 %v3072
        %3745 = vmatpush1.bf16.msra.mxu0 %v3071
        %3746 = vmatprep.subr.bf16.mxu0 %v3074
        %3747 = vmatpush1.bf16.msra.mxu0 %v3073
        %3748 = vmatprep.subr.bf16.mxu0 %v3076
        %3749 = vmatpush1.bf16.msra.mxu0 %v3075
        %3750 = vmatprep.subr.bf16.mxu0 %v3078
        %3751 = vmatpush1.bf16.msra.mxu0 %v3077
        %3752 = vmatprep.subr.bf16.mxu0 %v3080
        %3753 = vmatpush1.bf16.msra.mxu0 %v3079
        %3754 = vmatprep.subr.bf16.mxu0 %v3082
        %3755 = vmatpush1.bf16.msra.mxu0 %v3081
        %3756 = vmatprep.subr.bf16.mxu0 %v3084
        %3757 = vmatpush1.bf16.msra.mxu0 %v3083
        %3758 = vmatprep.subr.bf16.mxu0 %v3086
        %3759 = vmatpush1.bf16.msra.mxu0 %v3085
        %3760 = vmatprep.subr.bf16.mxu0 %v3088
        %3761 = vmatpush1.bf16.msra.mxu0 %v3087
        %3762 = vmatprep.subr.bf16.mxu0 %v3090
        %3763 = vmatpush1.bf16.msra.mxu0 %v3089
        %3764 = vmatprep.subr.bf16.mxu0 %v3092
        %3765 = vmatpush1.bf16.msra.mxu0 %v3091
        %3766 = vmatprep.mubr.bf16.mxu0 %v1752
        %3767 = vmatmul.mubr.bf16.gmra.mrb[0].mxu0 %v1751
        %v3768 = vpop.f32.mrb[0].mxu0
        %v3769 = vadd.f32 %v3576, %v3768
        %v3770 = vpop.f32.mrb[0].mxu0
        %v3771 = vadd.f32 %v3578, %v3770
        %v3772 = vpop.f32.mrb[0].mxu0
        %v3773 = vadd.f32 %v3580, %v3772
        %v3774 = vpop.f32.mrb[0].mxu0
        %v3775 = vadd.f32 %v3582, %v3774
        %3776 = vmatprep.mubr.bf16.mxu0 %v1768
        %3777 = vmatmul.mubr.bf16.gmra.mrb[0].mxu0 %v1767
        %v3778 = vpop.f32.mrb[0].mxu0
        %v3779 = vadd.f32 %v3586, %v3778
        %v3780 = vpop.f32.mrb[0].mxu0
        %v3781 = vadd.f32 %v3588, %v3780
        %v3782 = vpop.f32.mrb[0].mxu0
        %v3783 = vadd.f32 %v3590, %v3782
        %v3784 = vpop.f32.mrb[0].mxu0
        %v3785 = vadd.f32 %v3592, %v3784
        %3786 = vmatprep.mubr.bf16.mxu0 %v1784
        %3787 = vmatmul.mubr.bf16.gmra.mrb[0].mxu0 %v1783
        %v3788 = vpop.f32.mrb[0].mxu0
        %v3789 = vadd.f32 %v3596, %v3788
        %v3790 = vpop.f32.mrb[0].mxu0
        %v3791 = vadd.f32 %v3598, %v3790
        %v3792 = vpop.f32.mrb[0].mxu0
        %v3793 = vadd.f32 %v3600, %v3792
        %v3794 = vpop.f32.mrb[0].mxu0
        %v3795 = vadd.f32 %v3602, %v3794
        %3796 = vmatprep.mubr.bf16.mxu0 %v1800
        %3797 = vmatmul.mubr.bf16.gmra.mrb[0].mxu0 %v1799
        %v3798 = vpop.f32.mrb[0].mxu0
        %v3799 = vadd.f32 %v3606, %v3798
        %v3800 = vpop.f32.mrb[0].mxu0
        %v3801 = vadd.f32 %v3608, %v3800
        %v3802 = vpop.f32.mrb[0].mxu0
        %v3803 = vadd.f32 %v3610, %v3802
        %v3804 = vpop.f32.mrb[0].mxu0
        %v3805 = vadd.f32 %v3612, %v3804
        %3806 = vmatprep.mubr.bf16.mxu0 %v1816
        %3807 = vmatmul.mubr.bf16.gmra.mrb[0].mxu0 %v1815
        %v3808 = vpop.f32.mrb[0].mxu0
        %v3809 = vadd.f32 %v3616, %v3808
        %v3810 = vpop.f32.mrb[0].mxu0
        %v3811 = vadd.f32 %v3618, %v3810
        %v3812 = vpop.f32.mrb[0].mxu0
        %v3813 = vadd.f32 %v3620, %v3812
        %v3814 = vpop.f32.mrb[0].mxu0
        %v3815 = vadd.f32 %v3622, %v3814
        %3816 = vmatprep.mubr.bf16.mxu0 %v1832
        %3817 = vmatmul.mubr.bf16.gmra.mrb[0].mxu0 %v1831
        %v3818 = vpop.f32.mrb[0].mxu0
        %v3819 = vadd.f32 %v3626, %v3818
        %v3820 = vpop.f32.mrb[0].mxu0
        %v3821 = vadd.f32 %v3628, %v3820
        %v3822 = vpop.f32.mrb[0].mxu0
        %v3823 = vadd.f32 %v3630, %v3822
        %v3824 = vpop.f32.mrb[0].mxu0
        %v3825 = vadd.f32 %v3632, %v3824
        %3826 = vmatprep.mubr.bf16.mxu0 %v1848
        %3827 = vmatmul.mubr.bf16.gmra.mrb[0].mxu0 %v1847
        %v3828 = vpop.f32.mrb[0].mxu0
        %v3829 = vadd.f32 %v3636, %v3828
        %v3830 = vpop.f32.mrb[0].mxu0
        %v3831 = vadd.f32 %v3638, %v3830
        %v3832 = vpop.f32.mrb[0].mxu0
        %v3833 = vadd.f32 %v3640, %v3832
        %v3834 = vpop.f32.mrb[0].mxu0
        %v3835 = vadd.f32 %v3642, %v3834
        %3836 = vmatprep.mubr.bf16.mxu0 %v1864
        %3837 = vmatmul.mubr.bf16.gmra.mrb[0].mxu0 %v1863
        %v3838 = vpop.f32.mrb[0].mxu0
        %v3839 = vadd.f32 %v3646, %v3838
        %v3840 = vpop.f32.mrb[0].mxu0
        %v3841 = vadd.f32 %v3648, %v3840
        %v3842 = vpop.f32.mrb[0].mxu0
        %v3843 = vadd.f32 %v3650, %v3842
        %v3844 = vpop.f32.mrb[0].mxu0
        %v3845 = vadd.f32 %v3652, %v3844
        %3846 = vmatprep.mubr.bf16.mxu0 %v1880
        %3847 = vmatmul.mubr.bf16.gmra.mrb[0].mxu0 %v1879
        %v3848 = vpop.f32.mrb[0].mxu0
        %v3849 = vadd.f32 %v3656, %v3848
        %v3850 = vpop.f32.mrb[0].mxu0
        %v3851 = vadd.f32 %v3658, %v3850
        %v3852 = vpop.f32.mrb[0].mxu0
        %v3853 = vadd.f32 %v3660, %v3852
        %v3854 = vpop.f32.mrb[0].mxu0
        %v3855 = vadd.f32 %v3662, %v3854
        %3856 = vmatprep.mubr.bf16.mxu0 %v1896
        %3857 = vmatmul.mubr.bf16.gmra.mrb[0].mxu0 %v1895
        %v3858 = vpop.f32.mrb[0].mxu0
        %v3859 = vadd.f32 %v3666, %v3858
        %v3860 = vpop.f32.mrb[0].mxu0
        %v3861 = vadd.f32 %v3668, %v3860
        %v3862 = vpop.f32.mrb[0].mxu0
        %v3863 = vadd.f32 %v3670, %v3862
        %v3864 = vpop.f32.mrb[0].mxu0
        %v3865 = vadd.f32 %v3672, %v3864
        %3866 = vmatprep.mubr.bf16.mxu0 %v1912
        %3867 = vmatmul.mubr.bf16.gmra.mrb[0].mxu0 %v1911
        %v3868 = vpop.f32.mrb[0].mxu0
        %v3869 = vadd.f32 %v3676, %v3868
        %v3870 = vpop.f32.mrb[0].mxu0
        %v3871 = vadd.f32 %v3678, %v3870
        %v3872 = vpop.f32.mrb[0].mxu0
        %v3873 = vadd.f32 %v3680, %v3872
        %v3874 = vpop.f32.mrb[0].mxu0
        %v3875 = vadd.f32 %v3682, %v3874
        %3876 = vmatprep.mubr.bf16.mxu0 %v1928
        %3877 = vmatmul.mubr.bf16.gmra.mrb[0].mxu0 %v1927
        %v3878 = vpop.f32.mrb[0].mxu0
        %v3879 = vadd.f32 %v3686, %v3878
        %v3880 = vpop.f32.mrb[0].mxu0
        %v3881 = vadd.f32 %v3688, %v3880
        %v3882 = vpop.f32.mrb[0].mxu0
        %v3883 = vadd.f32 %v3690, %v3882
        %v3884 = vpop.f32.mrb[0].mxu0
        %v3885 = vadd.f32 %v3692, %v3884
        %3886 = vmatprep.mubr.bf16.mxu0 %v1944
        %3887 = vmatmul.mubr.bf16.gmra.mrb[0].mxu0 %v1943
        %v3888 = vpop.f32.mrb[0].mxu0
        %v3889 = vadd.f32 %v3696, %v3888
        %v3890 = vpop.f32.mrb[0].mxu0
        %v3891 = vadd.f32 %v3698, %v3890
        %v3892 = vpop.f32.mrb[0].mxu0
        %v3893 = vadd.f32 %v3700, %v3892
        %v3894 = vpop.f32.mrb[0].mxu0
        %v3895 = vadd.f32 %v3702, %v3894
        %3896 = vmatprep.mubr.bf16.mxu0 %v1960
        %3897 = vmatmul.mubr.bf16.gmra.mrb[0].mxu0 %v1959
        %v3898 = vpop.f32.mrb[0].mxu0
        %v3899 = vadd.f32 %v3706, %v3898
        %v3900 = vpop.f32.mrb[0].mxu0
        %v3901 = vadd.f32 %v3708, %v3900
        %v3902 = vpop.f32.mrb[0].mxu0
        %v3903 = vadd.f32 %v3710, %v3902
        %v3904 = vpop.f32.mrb[0].mxu0
        %v3905 = vadd.f32 %v3712, %v3904
        %3906 = vmatprep.mubr.bf16.mxu0 %v1976
        %3907 = vmatmul.mubr.bf16.gmra.mrb[0].mxu0 %v1975
        %v3908 = vpop.f32.mrb[0].mxu0
        %v3909 = vadd.f32 %v3716, %v3908
        %v3910 = vpop.f32.mrb[0].mxu0
        %v3911 = vadd.f32 %v3718, %v3910
        %v3912 = vpop.f32.mrb[0].mxu0
        %v3913 = vadd.f32 %v3720, %v3912
        %v3914 = vpop.f32.mrb[0].mxu0
        %v3915 = vadd.f32 %v3722, %v3914
        %3916 = vmatprep.mubr.bf16.mxu0 %v1992
        %3917 = vmatmul.mubr.bf16.gmra.mrb[0].mxu0 %v1991
        %v3918 = vpop.f32.mrb[0].mxu0
        %v3919 = vadd.f32 %v3726, %v3918
        %v3920 = vpop.f32.mrb[0].mxu0
        %v3921 = vadd.f32 %v3728, %v3920
        %v3922 = vpop.f32.mrb[0].mxu0
        %v3923 = vadd.f32 %v3730, %v3922
        %v3924 = vpop.f32.mrb[0].mxu0
        %v3925 = vadd.f32 %v3732, %v3924
        %3926 = vdwg.mxu0
        %3927 = vmatprep.subr.bf16.mxu0 %v3094
        %3928 = vmatpush1.bf16.msra.mxu0 %v3093
        %3929 = vmatprep.subr.bf16.mxu0 %v3096
        %3930 = vmatpush1.bf16.msra.mxu0 %v3095
        %3931 = vmatprep.subr.bf16.mxu0 %v3098
        %3932 = vmatpush1.bf16.msra.mxu0 %v3097
        %3933 = vmatprep.subr.bf16.mxu0 %v3100
        %3934 = vmatpush1.bf16.msra.mxu0 %v3099
        %3935 = vmatprep.subr.bf16.mxu0 %v3102
        %3936 = vmatpush1.bf16.msra.mxu0 %v3101
        %3937 = vmatprep.subr.bf16.mxu0 %v3104
        %3938 = vmatpush1.bf16.msra.mxu0 %v3103
        %3939 = vmatprep.subr.bf16.mxu0 %v3106
        %3940 = vmatpush1.bf16.msra.mxu0 %v3105
        %3941 = vmatprep.subr.bf16.mxu0 %v3108
        %3942 = vmatpush1.bf16.msra.mxu0 %v3107
        %3943 = vmatprep.subr.bf16.mxu0 %v3110
        %3944 = vmatpush1.bf16.msra.mxu0 %v3109
        %3945 = vmatprep.subr.bf16.mxu0 %v3112
        %3946 = vmatpush1.bf16.msra.mxu0 %v3111
        %3947 = vmatprep.subr.bf16.mxu0 %v3114
        %3948 = vmatpush1.bf16.msra.mxu0 %v3113
        %3949 = vmatprep.subr.bf16.mxu0 %v3116
        %3950 = vmatpush1.bf16.msra.mxu0 %v3115
        %3951 = vmatprep.subr.bf16.mxu0 %v3118
        %3952 = vmatpush1.bf16.msra.mxu0 %v3117
        %3953 = vmatprep.subr.bf16.mxu0 %v3120
        %3954 = vmatpush1.bf16.msra.mxu0 %v3119
        %3955 = vmatprep.subr.bf16.mxu0 %v3122
        %3956 = vmatpush1.bf16.msra.mxu0 %v3121
        %3957 = vmatprep.subr.bf16.mxu0 %v3124
        %3958 = vmatpush1.bf16.msra.mxu0 %v3123
        %3959 = vmatprep.mubr.bf16.mxu0 %v1754
        %3960 = vmatmul.mubr.bf16.gmra.mrb[0].mxu0 %v1753
        %v3961 = vpop.f32.mrb[0].mxu0
        %v3962 = vadd.f32 %v3769, %v3961
        %v3963 = vpop.f32.mrb[0].mxu0
        %v3964 = vadd.f32 %v3771, %v3963
        %v3965 = vpop.f32.mrb[0].mxu0
        %v3966 = vadd.f32 %v3773, %v3965
        %v3967 = vpop.f32.mrb[0].mxu0
        %v3968 = vadd.f32 %v3775, %v3967
        %3969 = vmatprep.mubr.bf16.mxu0 %v1770
        %3970 = vmatmul.mubr.bf16.gmra.mrb[0].mxu0 %v1769
        %v3971 = vpop.f32.mrb[0].mxu0
        %v3972 = vadd.f32 %v3779, %v3971
        %v3973 = vpop.f32.mrb[0].mxu0
        %v3974 = vadd.f32 %v3781, %v3973
        %v3975 = vpop.f32.mrb[0].mxu0
        %v3976 = vadd.f32 %v3783, %v3975
        %v3977 = vpop.f32.mrb[0].mxu0
        %v3978 = vadd.f32 %v3785, %v3977
        %3979 = vmatprep.mubr.bf16.mxu0 %v1786
        %3980 = vmatmul.mubr.bf16.gmra.mrb[0].mxu0 %v1785
        %v3981 = vpop.f32.mrb[0].mxu0
        %v3982 = vadd.f32 %v3789, %v3981
        %v3983 = vpop.f32.mrb[0].mxu0
        %v3984 = vadd.f32 %v3791, %v3983
        %v3985 = vpop.f32.mrb[0].mxu0
        %v3986 = vadd.f32 %v3793, %v3985
        %v3987 = vpop.f32.mrb[0].mxu0
        %v3988 = vadd.f32 %v3795, %v3987
        %3989 = vmatprep.mubr.bf16.mxu0 %v1802
        %3990 = vmatmul.mubr.bf16.gmra.mrb[0].mxu0 %v1801
        %v3991 = vpop.f32.mrb[0].mxu0
        %v3992 = vadd.f32 %v3799, %v3991
        %v3993 = vpop.f32.mrb[0].mxu0
        %v3994 = vadd.f32 %v3801, %v3993
        %v3995 = vpop.f32.mrb[0].mxu0
        %v3996 = vadd.f32 %v3803, %v3995
        %v3997 = vpop.f32.mrb[0].mxu0
        %v3998 = vadd.f32 %v3805, %v3997
        %3999 = vmatprep.mubr.bf16.mxu0 %v1818
        %4000 = vmatmul.mubr.bf16.gmra.mrb[0].mxu0 %v1817
        %v4001 = vpop.f32.mrb[0].mxu0
        %v4002 = vadd.f32 %v3809, %v4001
        %v4003 = vpop.f32.mrb[0].mxu0
        %v4004 = vadd.f32 %v3811, %v4003
        %v4005 = vpop.f32.mrb[0].mxu0
        %v4006 = vadd.f32 %v3813, %v4005
        %v4007 = vpop.f32.mrb[0].mxu0
        %v4008 = vadd.f32 %v3815, %v4007
        %4009 = vmatprep.mubr.bf16.mxu0 %v1834
        %4010 = vmatmul.mubr.bf16.gmra.mrb[0].mxu0 %v1833
        %v4011 = vpop.f32.mrb[0].mxu0
        %v4012 = vadd.f32 %v3819, %v4011
        %v4013 = vpop.f32.mrb[0].mxu0
        %v4014 = vadd.f32 %v3821, %v4013
        %v4015 = vpop.f32.mrb[0].mxu0
        %v4016 = vadd.f32 %v3823, %v4015
        %v4017 = vpop.f32.mrb[0].mxu0
        %v4018 = vadd.f32 %v3825, %v4017
        %4019 = vmatprep.mubr.bf16.mxu0 %v1850
        %4020 = vmatmul.mubr.bf16.gmra.mrb[0].mxu0 %v1849
        %v4021 = vpop.f32.mrb[0].mxu0
        %v4022 = vadd.f32 %v3829, %v4021
        %v4023 = vpop.f32.mrb[0].mxu0
        %v4024 = vadd.f32 %v3831, %v4023
        %v4025 = vpop.f32.mrb[0].mxu0
        %v4026 = vadd.f32 %v3833, %v4025
        %v4027 = vpop.f32.mrb[0].mxu0
        %v4028 = vadd.f32 %v3835, %v4027
        %4029 = vmatprep.mubr.bf16.mxu0 %v1866
        %4030 = vmatmul.mubr.bf16.gmra.mrb[0].mxu0 %v1865
        %v4031 = vpop.f32.mrb[0].mxu0
        %v4032 = vadd.f32 %v3839, %v4031
        %v4033 = vpop.f32.mrb[0].mxu0
        %v4034 = vadd.f32 %v3841, %v4033
        %v4035 = vpop.f32.mrb[0].mxu0
        %v4036 = vadd.f32 %v3843, %v4035
        %v4037 = vpop.f32.mrb[0].mxu0
        %v4038 = vadd.f32 %v3845, %v4037
        %4039 = vmatprep.mubr.bf16.mxu0 %v1882
        %4040 = vmatmul.mubr.bf16.gmra.mrb[0].mxu0 %v1881
        %v4041 = vpop.f32.mrb[0].mxu0
        %v4042 = vadd.f32 %v3849, %v4041
        %v4043 = vpop.f32.mrb[0].mxu0
        %v4044 = vadd.f32 %v3851, %v4043
        %v4045 = vpop.f32.mrb[0].mxu0
        %v4046 = vadd.f32 %v3853, %v4045
        %v4047 = vpop.f32.mrb[0].mxu0
        %v4048 = vadd.f32 %v3855, %v4047
        %4049 = vmatprep.mubr.bf16.mxu0 %v1898
        %4050 = vmatmul.mubr.bf16.gmra.mrb[0].mxu0 %v1897
        %v4051 = vpop.f32.mrb[0].mxu0
        %v4052 = vadd.f32 %v3859, %v4051
        %v4053 = vpop.f32.mrb[0].mxu0
        %v4054 = vadd.f32 %v3861, %v4053
        %v4055 = vpop.f32.mrb[0].mxu0
        %v4056 = vadd.f32 %v3863, %v4055
        %v4057 = vpop.f32.mrb[0].mxu0
        %v4058 = vadd.f32 %v3865, %v4057
        %4059 = vmatprep.mubr.bf16.mxu0 %v1914
        %4060 = vmatmul.mubr.bf16.gmra.mrb[0].mxu0 %v1913
        %v4061 = vpop.f32.mrb[0].mxu0
        %v4062 = vadd.f32 %v3869, %v4061
        %v4063 = vpop.f32.mrb[0].mxu0
        %v4064 = vadd.f32 %v3871, %v4063
        %v4065 = vpop.f32.mrb[0].mxu0
        %v4066 = vadd.f32 %v3873, %v4065
        %v4067 = vpop.f32.mrb[0].mxu0
        %v4068 = vadd.f32 %v3875, %v4067
        %4069 = vmatprep.mubr.bf16.mxu0 %v1930
        %4070 = vmatmul.mubr.bf16.gmra.mrb[0].mxu0 %v1929
        %v4071 = vpop.f32.mrb[0].mxu0
        %v4072 = vadd.f32 %v3879, %v4071
        %v4073 = vpop.f32.mrb[0].mxu0
        %v4074 = vadd.f32 %v3881, %v4073
        %v4075 = vpop.f32.mrb[0].mxu0
        %v4076 = vadd.f32 %v3883, %v4075
        %v4077 = vpop.f32.mrb[0].mxu0
        %v4078 = vadd.f32 %v3885, %v4077
        %4079 = vmatprep.mubr.bf16.mxu0 %v1946
        %4080 = vmatmul.mubr.bf16.gmra.mrb[0].mxu0 %v1945
        %v4081 = vpop.f32.mrb[0].mxu0
        %v4082 = vadd.f32 %v3889, %v4081
        %v4083 = vpop.f32.mrb[0].mxu0
        %v4084 = vadd.f32 %v3891, %v4083
        %v4085 = vpop.f32.mrb[0].mxu0
        %v4086 = vadd.f32 %v3893, %v4085
        %v4087 = vpop.f32.mrb[0].mxu0
        %v4088 = vadd.f32 %v3895, %v4087
        %4089 = vmatprep.mubr.bf16.mxu0 %v1962
        %4090 = vmatmul.mubr.bf16.gmra.mrb[0].mxu0 %v1961
        %v4091 = vpop.f32.mrb[0].mxu0
        %v4092 = vadd.f32 %v3899, %v4091
        %v4093 = vpop.f32.mrb[0].mxu0
        %v4094 = vadd.f32 %v3901, %v4093
        %v4095 = vpop.f32.mrb[0].mxu0
        %v4096 = vadd.f32 %v3903, %v4095
        %v4097 = vpop.f32.mrb[0].mxu0
        %v4098 = vadd.f32 %v3905, %v4097
        %4099 = vmatprep.mubr.bf16.mxu0 %v1978
        %4100 = vmatmul.mubr.bf16.gmra.mrb[0].mxu0 %v1977
        %v4101 = vpop.f32.mrb[0].mxu0
        %v4102 = vadd.f32 %v3909, %v4101
        %v4103 = vpop.f32.mrb[0].mxu0
        %v4104 = vadd.f32 %v3911, %v4103
        %v4105 = vpop.f32.mrb[0].mxu0
        %v4106 = vadd.f32 %v3913, %v4105
        %v4107 = vpop.f32.mrb[0].mxu0
        %v4108 = vadd.f32 %v3915, %v4107
        %4109 = vmatprep.mubr.bf16.mxu0 %v1994
        %4110 = vmatmul.mubr.bf16.gmra.mrb[0].mxu0 %v1993
        %v4111 = vpop.f32.mrb[0].mxu0
        %v4112 = vadd.f32 %v3919, %v4111
        %v4113 = vpop.f32.mrb[0].mxu0
        %v4114 = vadd.f32 %v3921, %v4113
        %v4115 = vpop.f32.mrb[0].mxu0
        %v4116 = vadd.f32 %v3923, %v4115
        %v4117 = vpop.f32.mrb[0].mxu0
        %v4118 = vadd.f32 %v3925, %v4117
        %4119 = vdwg.mxu0
        %4120 = vmatprep.subr.bf16.mxu0 %v3126
        %4121 = vmatpush1.bf16.msra.mxu0 %v3125
        %4122 = vmatprep.subr.bf16.mxu0 %v3128
        %4123 = vmatpush1.bf16.msra.mxu0 %v3127
        %4124 = vmatprep.subr.bf16.mxu0 %v3130
        %4125 = vmatpush1.bf16.msra.mxu0 %v3129
        %4126 = vmatprep.subr.bf16.mxu0 %v3132
        %4127 = vmatpush1.bf16.msra.mxu0 %v3131
        %4128 = vmatprep.subr.bf16.mxu0 %v3134
        %4129 = vmatpush1.bf16.msra.mxu0 %v3133
        %4130 = vmatprep.subr.bf16.mxu0 %v3136
        %4131 = vmatpush1.bf16.msra.mxu0 %v3135
        %4132 = vmatprep.subr.bf16.mxu0 %v3138
        %4133 = vmatpush1.bf16.msra.mxu0 %v3137
        %4134 = vmatprep.subr.bf16.mxu0 %v3140
        %4135 = vmatpush1.bf16.msra.mxu0 %v3139
        %4136 = vmatprep.subr.bf16.mxu0 %v3142
        %4137 = vmatpush1.bf16.msra.mxu0 %v3141
        %4138 = vmatprep.subr.bf16.mxu0 %v3144
        %4139 = vmatpush1.bf16.msra.mxu0 %v3143
        %4140 = vmatprep.subr.bf16.mxu0 %v3146
        %4141 = vmatpush1.bf16.msra.mxu0 %v3145
        %4142 = vmatprep.subr.bf16.mxu0 %v3148
        %4143 = vmatpush1.bf16.msra.mxu0 %v3147
        %4144 = vmatprep.subr.bf16.mxu0 %v3150
        %4145 = vmatpush1.bf16.msra.mxu0 %v3149
        %4146 = vmatprep.subr.bf16.mxu0 %v3152
        %4147 = vmatpush1.bf16.msra.mxu0 %v3151
        %4148 = vmatprep.subr.bf16.mxu0 %v3154
        %4149 = vmatpush1.bf16.msra.mxu0 %v3153
        %4150 = vmatprep.subr.bf16.mxu0 %v3156
        %4151 = vmatpush1.bf16.msra.mxu0 %v3155
        %4152 = vmatprep.mubr.bf16.mxu0 %v1756
        %4153 = vmatmul.mubr.bf16.gmra.mrb[0].mxu0 %v1755
        %v4154 = vpop.f32.mrb[0].mxu0
        %v4155 = vadd.f32 %v3962, %v4154
        %v4156 = vpop.f32.mrb[0].mxu0
        %v4157 = vadd.f32 %v3964, %v4156
        %v4158 = vpop.f32.mrb[0].mxu0
        %v4159 = vadd.f32 %v3966, %v4158
        %v4160 = vpop.f32.mrb[0].mxu0
        %v4161 = vadd.f32 %v3968, %v4160
        %4162 = vmatprep.mubr.bf16.mxu0 %v1772
        %4163 = vmatmul.mubr.bf16.gmra.mrb[0].mxu0 %v1771
        %v4164 = vpop.f32.mrb[0].mxu0
        %v4165 = vadd.f32 %v3972, %v4164
        %v4166 = vpop.f32.mrb[0].mxu0
        %v4167 = vadd.f32 %v3974, %v4166
        %v4168 = vpop.f32.mrb[0].mxu0
        %v4169 = vadd.f32 %v3976, %v4168
        %v4170 = vpop.f32.mrb[0].mxu0
        %v4171 = vadd.f32 %v3978, %v4170
        %4172 = vmatprep.mubr.bf16.mxu0 %v1788
        %4173 = vmatmul.mubr.bf16.gmra.mrb[0].mxu0 %v1787
        %v4174 = vpop.f32.mrb[0].mxu0
        %v4175 = vadd.f32 %v3982, %v4174
        %v4176 = vpop.f32.mrb[0].mxu0
        %v4177 = vadd.f32 %v3984, %v4176
        %v4178 = vpop.f32.mrb[0].mxu0
        %v4179 = vadd.f32 %v3986, %v4178
        %v4180 = vpop.f32.mrb[0].mxu0
        %v4181 = vadd.f32 %v3988, %v4180
        %4182 = vmatprep.mubr.bf16.mxu0 %v1804
        %4183 = vmatmul.mubr.bf16.gmra.mrb[0].mxu0 %v1803
        %v4184 = vpop.f32.mrb[0].mxu0
        %v4185 = vadd.f32 %v3992, %v4184
        %v4186 = vpop.f32.mrb[0].mxu0
        %v4187 = vadd.f32 %v3994, %v4186
        %v4188 = vpop.f32.mrb[0].mxu0
        %v4189 = vadd.f32 %v3996, %v4188
        %v4190 = vpop.f32.mrb[0].mxu0
        %v4191 = vadd.f32 %v3998, %v4190
        %4192 = vmatprep.mubr.bf16.mxu0 %v1820
        %4193 = vmatmul.mubr.bf16.gmra.mrb[0].mxu0 %v1819
        %v4194 = vpop.f32.mrb[0].mxu0
        %v4195 = vadd.f32 %v4002, %v4194
        %v4196 = vpop.f32.mrb[0].mxu0
        %v4197 = vadd.f32 %v4004, %v4196
        %v4198 = vpop.f32.mrb[0].mxu0
        %v4199 = vadd.f32 %v4006, %v4198
        %v4200 = vpop.f32.mrb[0].mxu0
        %v4201 = vadd.f32 %v4008, %v4200
        %4202 = vmatprep.mubr.bf16.mxu0 %v1836
        %4203 = vmatmul.mubr.bf16.gmra.mrb[0].mxu0 %v1835
        %v4204 = vpop.f32.mrb[0].mxu0
        %v4205 = vadd.f32 %v4012, %v4204
        %v4206 = vpop.f32.mrb[0].mxu0
        %v4207 = vadd.f32 %v4014, %v4206
        %v4208 = vpop.f32.mrb[0].mxu0
        %v4209 = vadd.f32 %v4016, %v4208
        %v4210 = vpop.f32.mrb[0].mxu0
        %v4211 = vadd.f32 %v4018, %v4210
        %4212 = vmatprep.mubr.bf16.mxu0 %v1852
        %4213 = vmatmul.mubr.bf16.gmra.mrb[0].mxu0 %v1851
        %v4214 = vpop.f32.mrb[0].mxu0
        %v4215 = vadd.f32 %v4022, %v4214
        %v4216 = vpop.f32.mrb[0].mxu0
        %v4217 = vadd.f32 %v4024, %v4216
        %v4218 = vpop.f32.mrb[0].mxu0
        %v4219 = vadd.f32 %v4026, %v4218
        %v4220 = vpop.f32.mrb[0].mxu0
        %v4221 = vadd.f32 %v4028, %v4220
        %4222 = vmatprep.mubr.bf16.mxu0 %v1868
        %4223 = vmatmul.mubr.bf16.gmra.mrb[0].mxu0 %v1867
        %v4224 = vpop.f32.mrb[0].mxu0
        %v4225 = vadd.f32 %v4032, %v4224
        %v4226 = vpop.f32.mrb[0].mxu0
        %v4227 = vadd.f32 %v4034, %v4226
        %v4228 = vpop.f32.mrb[0].mxu0
        %v4229 = vadd.f32 %v4036, %v4228
        %v4230 = vpop.f32.mrb[0].mxu0
        %v4231 = vadd.f32 %v4038, %v4230
        %4232 = vmatprep.mubr.bf16.mxu0 %v1884
        %4233 = vmatmul.mubr.bf16.gmra.mrb[0].mxu0 %v1883
        %v4234 = vpop.f32.mrb[0].mxu0
        %v4235 = vadd.f32 %v4042, %v4234
        %v4236 = vpop.f32.mrb[0].mxu0
        %v4237 = vadd.f32 %v4044, %v4236
        %v4238 = vpop.f32.mrb[0].mxu0
        %v4239 = vadd.f32 %v4046, %v4238
        %v4240 = vpop.f32.mrb[0].mxu0
        %v4241 = vadd.f32 %v4048, %v4240
        %4242 = vmatprep.mubr.bf16.mxu0 %v1900
        %4243 = vmatmul.mubr.bf16.gmra.mrb[0].mxu0 %v1899
        %v4244 = vpop.f32.mrb[0].mxu0
        %v4245 = vadd.f32 %v4052, %v4244
        %v4246 = vpop.f32.mrb[0].mxu0
        %v4247 = vadd.f32 %v4054, %v4246
        %v4248 = vpop.f32.mrb[0].mxu0
        %v4249 = vadd.f32 %v4056, %v4248
        %v4250 = vpop.f32.mrb[0].mxu0
        %v4251 = vadd.f32 %v4058, %v4250
        %4252 = vmatprep.mubr.bf16.mxu0 %v1916
        %4253 = vmatmul.mubr.bf16.gmra.mrb[0].mxu0 %v1915
        %v4254 = vpop.f32.mrb[0].mxu0
        %v4255 = vadd.f32 %v4062, %v4254
        %v4256 = vpop.f32.mrb[0].mxu0
        %v4257 = vadd.f32 %v4064, %v4256
        %v4258 = vpop.f32.mrb[0].mxu0
        %v4259 = vadd.f32 %v4066, %v4258
        %v4260 = vpop.f32.mrb[0].mxu0
        %v4261 = vadd.f32 %v4068, %v4260
        %4262 = vmatprep.mubr.bf16.mxu0 %v1932
        %4263 = vmatmul.mubr.bf16.gmra.mrb[0].mxu0 %v1931
        %v4264 = vpop.f32.mrb[0].mxu0
        %v4265 = vadd.f32 %v4072, %v4264
        %v4266 = vpop.f32.mrb[0].mxu0
        %v4267 = vadd.f32 %v4074, %v4266
        %v4268 = vpop.f32.mrb[0].mxu0
        %v4269 = vadd.f32 %v4076, %v4268
        %v4270 = vpop.f32.mrb[0].mxu0
        %v4271 = vadd.f32 %v4078, %v4270
        %4272 = vmatprep.mubr.bf16.mxu0 %v1948
        %4273 = vmatmul.mubr.bf16.gmra.mrb[0].mxu0 %v1947
        %v4274 = vpop.f32.mrb[0].mxu0
        %v4275 = vadd.f32 %v4082, %v4274
        %v4276 = vpop.f32.mrb[0].mxu0
        %v4277 = vadd.f32 %v4084, %v4276
        %v4278 = vpop.f32.mrb[0].mxu0
        %v4279 = vadd.f32 %v4086, %v4278
        %v4280 = vpop.f32.mrb[0].mxu0
        %v4281 = vadd.f32 %v4088, %v4280
        %4282 = vmatprep.mubr.bf16.mxu0 %v1964
        %4283 = vmatmul.mubr.bf16.gmra.mrb[0].mxu0 %v1963
        %v4284 = vpop.f32.mrb[0].mxu0
        %v4285 = vadd.f32 %v4092, %v4284
        %v4286 = vpop.f32.mrb[0].mxu0
        %v4287 = vadd.f32 %v4094, %v4286
        %v4288 = vpop.f32.mrb[0].mxu0
        %v4289 = vadd.f32 %v4096, %v4288
        %v4290 = vpop.f32.mrb[0].mxu0
        %v4291 = vadd.f32 %v4098, %v4290
        %4292 = vmatprep.mubr.bf16.mxu0 %v1980
        %4293 = vmatmul.mubr.bf16.gmra.mrb[0].mxu0 %v1979
        %v4294 = vpop.f32.mrb[0].mxu0
        %v4295 = vadd.f32 %v4102, %v4294
        %v4296 = vpop.f32.mrb[0].mxu0
        %v4297 = vadd.f32 %v4104, %v4296
        %v4298 = vpop.f32.mrb[0].mxu0
        %v4299 = vadd.f32 %v4106, %v4298
        %v4300 = vpop.f32.mrb[0].mxu0
        %v4301 = vadd.f32 %v4108, %v4300
        %4302 = vmatprep.mubr.bf16.mxu0 %v1996
        %4303 = vmatmul.mubr.bf16.gmra.mrb[0].mxu0 %v1995
        %v4304 = vpop.f32.mrb[0].mxu0
        %v4305 = vadd.f32 %v4112, %v4304
        %v4306 = vpop.f32.mrb[0].mxu0
        %v4307 = vadd.f32 %v4114, %v4306
        %v4308 = vpop.f32.mrb[0].mxu0
        %v4309 = vadd.f32 %v4116, %v4308
        %v4310 = vpop.f32.mrb[0].mxu0
        %v4311 = vadd.f32 %v4118, %v4310
        %4312 = vdwg.mxu0
        %4313 = vmatprep.subr.bf16.mxu0 %v3158
        %4314 = vmatpush1.bf16.msra.mxu0 %v3157
        %4315 = vmatprep.subr.bf16.mxu0 %v3160
        %4316 = vmatpush1.bf16.msra.mxu0 %v3159
        %4317 = vmatprep.subr.bf16.mxu0 %v3162
        %4318 = vmatpush1.bf16.msra.mxu0 %v3161
        %4319 = vmatprep.subr.bf16.mxu0 %v3164
        %4320 = vmatpush1.bf16.msra.mxu0 %v3163
        %4321 = vmatprep.subr.bf16.mxu0 %v3166
        %4322 = vmatpush1.bf16.msra.mxu0 %v3165
        %4323 = vmatprep.subr.bf16.mxu0 %v3168
        %4324 = vmatpush1.bf16.msra.mxu0 %v3167
        %4325 = vmatprep.subr.bf16.mxu0 %v3170
        %4326 = vmatpush1.bf16.msra.mxu0 %v3169
        %4327 = vmatprep.subr.bf16.mxu0 %v3172
        %4328 = vmatpush1.bf16.msra.mxu0 %v3171
        %4329 = vmatprep.subr.bf16.mxu0 %v3174
        %4330 = vmatpush1.bf16.msra.mxu0 %v3173
        %4331 = vmatprep.subr.bf16.mxu0 %v3176
        %4332 = vmatpush1.bf16.msra.mxu0 %v3175
        %4333 = vmatprep.subr.bf16.mxu0 %v3178
        %4334 = vmatpush1.bf16.msra.mxu0 %v3177
        %4335 = vmatprep.subr.bf16.mxu0 %v3180
        %4336 = vmatpush1.bf16.msra.mxu0 %v3179
        %4337 = vmatprep.subr.bf16.mxu0 %v3182
        %4338 = vmatpush1.bf16.msra.mxu0 %v3181
        %4339 = vmatprep.subr.bf16.mxu0 %v3184
        %4340 = vmatpush1.bf16.msra.mxu0 %v3183
        %4341 = vmatprep.subr.bf16.mxu0 %v3186
        %4342 = vmatpush1.bf16.msra.mxu0 %v3185
        %4343 = vmatprep.subr.bf16.mxu0 %v3188
        %4344 = vmatpush1.bf16.msra.mxu0 %v3187
        %4345 = vmatprep.mubr.bf16.mxu0 %v1758
        %4346 = vmatmul.mubr.bf16.gmra.mrb[0].mxu0 %v1757
        %v4347 = vpop.f32.mrb[0].mxu0
        %v4348 = vadd.f32 %v4155, %v4347
        %v4349 = vpop.f32.mrb[0].mxu0
        %v4350 = vadd.f32 %v4157, %v4349
        %v4351 = vpop.f32.mrb[0].mxu0
        %v4352 = vadd.f32 %v4159, %v4351
        %v4353 = vpop.f32.mrb[0].mxu0
        %v4354 = vadd.f32 %v4161, %v4353
        %4355 = vmatprep.mubr.bf16.mxu0 %v1774
        %4356 = vmatmul.mubr.bf16.gmra.mrb[0].mxu0 %v1773
        %v4357 = vpop.f32.mrb[0].mxu0
        %v4358 = vadd.f32 %v4165, %v4357
        %v4359 = vpop.f32.mrb[0].mxu0
        %v4360 = vadd.f32 %v4167, %v4359
        %v4361 = vpop.f32.mrb[0].mxu0
        %v4362 = vadd.f32 %v4169, %v4361
        %v4363 = vpop.f32.mrb[0].mxu0
        %v4364 = vadd.f32 %v4171, %v4363
        %4365 = vmatprep.mubr.bf16.mxu0 %v1790
        %4366 = vmatmul.mubr.bf16.gmra.mrb[0].mxu0 %v1789
        %v4367 = vpop.f32.mrb[0].mxu0
        %v4368 = vadd.f32 %v4175, %v4367
        %v4369 = vpop.f32.mrb[0].mxu0
        %v4370 = vadd.f32 %v4177, %v4369
        %v4371 = vpop.f32.mrb[0].mxu0
        %v4372 = vadd.f32 %v4179, %v4371
        %v4373 = vpop.f32.mrb[0].mxu0
        %v4374 = vadd.f32 %v4181, %v4373
        %4375 = vmatprep.mubr.bf16.mxu0 %v1806
        %4376 = vmatmul.mubr.bf16.gmra.mrb[0].mxu0 %v1805
        %v4377 = vpop.f32.mrb[0].mxu0
        %v4378 = vadd.f32 %v4185, %v4377
        %v4379 = vpop.f32.mrb[0].mxu0
        %v4380 = vadd.f32 %v4187, %v4379
        %v4381 = vpop.f32.mrb[0].mxu0
        %v4382 = vadd.f32 %v4189, %v4381
        %v4383 = vpop.f32.mrb[0].mxu0
        %v4384 = vadd.f32 %v4191, %v4383
        %4385 = vmatprep.mubr.bf16.mxu0 %v1822
        %4386 = vmatmul.mubr.bf16.gmra.mrb[0].mxu0 %v1821
        %v4387 = vpop.f32.mrb[0].mxu0
        %v4388 = vadd.f32 %v4195, %v4387
        %v4389 = vpop.f32.mrb[0].mxu0
        %v4390 = vadd.f32 %v4197, %v4389
        %v4391 = vpop.f32.mrb[0].mxu0
        %v4392 = vadd.f32 %v4199, %v4391
        %v4393 = vpop.f32.mrb[0].mxu0
        %v4394 = vadd.f32 %v4201, %v4393
        %4395 = vmatprep.mubr.bf16.mxu0 %v1838
        %4396 = vmatmul.mubr.bf16.gmra.mrb[0].mxu0 %v1837
        %v4397 = vpop.f32.mrb[0].mxu0
        %v4398 = vadd.f32 %v4205, %v4397
        %v4399 = vpop.f32.mrb[0].mxu0
        %v4400 = vadd.f32 %v4207, %v4399
        %v4401 = vpop.f32.mrb[0].mxu0
        %v4402 = vadd.f32 %v4209, %v4401
        %v4403 = vpop.f32.mrb[0].mxu0
        %v4404 = vadd.f32 %v4211, %v4403
        %4405 = vmatprep.mubr.bf16.mxu0 %v1854
        %4406 = vmatmul.mubr.bf16.gmra.mrb[0].mxu0 %v1853
        %v4407 = vpop.f32.mrb[0].mxu0
        %v4408 = vadd.f32 %v4215, %v4407
        %v4409 = vpop.f32.mrb[0].mxu0
        %v4410 = vadd.f32 %v4217, %v4409
        %v4411 = vpop.f32.mrb[0].mxu0
        %v4412 = vadd.f32 %v4219, %v4411
        %v4413 = vpop.f32.mrb[0].mxu0
        %v4414 = vadd.f32 %v4221, %v4413
        %4415 = vmatprep.mubr.bf16.mxu0 %v1870
        %4416 = vmatmul.mubr.bf16.gmra.mrb[0].mxu0 %v1869
        %v4417 = vpop.f32.mrb[0].mxu0
        %v4418 = vadd.f32 %v4225, %v4417
        %v4419 = vpop.f32.mrb[0].mxu0
        %v4420 = vadd.f32 %v4227, %v4419
        %v4421 = vpop.f32.mrb[0].mxu0
        %v4422 = vadd.f32 %v4229, %v4421
        %v4423 = vpop.f32.mrb[0].mxu0
        %v4424 = vadd.f32 %v4231, %v4423
        %4425 = vmatprep.mubr.bf16.mxu0 %v1886
        %4426 = vmatmul.mubr.bf16.gmra.mrb[0].mxu0 %v1885
        %v4427 = vpop.f32.mrb[0].mxu0
        %v4428 = vadd.f32 %v4235, %v4427
        %v4429 = vpop.f32.mrb[0].mxu0
        %v4430 = vadd.f32 %v4237, %v4429
        %v4431 = vpop.f32.mrb[0].mxu0
        %v4432 = vadd.f32 %v4239, %v4431
        %v4433 = vpop.f32.mrb[0].mxu0
        %v4434 = vadd.f32 %v4241, %v4433
        %4435 = vmatprep.mubr.bf16.mxu0 %v1902
        %4436 = vmatmul.mubr.bf16.gmra.mrb[0].mxu0 %v1901
        %v4437 = vpop.f32.mrb[0].mxu0
        %v4438 = vadd.f32 %v4245, %v4437
        %v4439 = vpop.f32.mrb[0].mxu0
        %v4440 = vadd.f32 %v4247, %v4439
        %v4441 = vpop.f32.mrb[0].mxu0
        %v4442 = vadd.f32 %v4249, %v4441
        %v4443 = vpop.f32.mrb[0].mxu0
        %v4444 = vadd.f32 %v4251, %v4443
        %4445 = vmatprep.mubr.bf16.mxu0 %v1918
        %4446 = vmatmul.mubr.bf16.gmra.mrb[0].mxu0 %v1917
        %v4447 = vpop.f32.mrb[0].mxu0
        %v4448 = vadd.f32 %v4255, %v4447
        %v4449 = vpop.f32.mrb[0].mxu0
        %v4450 = vadd.f32 %v4257, %v4449
        %v4451 = vpop.f32.mrb[0].mxu0
        %v4452 = vadd.f32 %v4259, %v4451
        %v4453 = vpop.f32.mrb[0].mxu0
        %v4454 = vadd.f32 %v4261, %v4453
        %4455 = vmatprep.mubr.bf16.mxu0 %v1934
        %4456 = vmatmul.mubr.bf16.gmra.mrb[0].mxu0 %v1933
        %v4457 = vpop.f32.mrb[0].mxu0
        %v4458 = vadd.f32 %v4265, %v4457
        %v4459 = vpop.f32.mrb[0].mxu0
        %v4460 = vadd.f32 %v4267, %v4459
        %v4461 = vpop.f32.mrb[0].mxu0
        %v4462 = vadd.f32 %v4269, %v4461
        %v4463 = vpop.f32.mrb[0].mxu0
        %v4464 = vadd.f32 %v4271, %v4463
        %4465 = vmatprep.mubr.bf16.mxu0 %v1950
        %4466 = vmatmul.mubr.bf16.gmra.mrb[0].mxu0 %v1949
        %v4467 = vpop.f32.mrb[0].mxu0
        %v4468 = vadd.f32 %v4275, %v4467
        %v4469 = vpop.f32.mrb[0].mxu0
        %v4470 = vadd.f32 %v4277, %v4469
        %v4471 = vpop.f32.mrb[0].mxu0
        %v4472 = vadd.f32 %v4279, %v4471
        %v4473 = vpop.f32.mrb[0].mxu0
        %v4474 = vadd.f32 %v4281, %v4473
        %4475 = vmatprep.mubr.bf16.mxu0 %v1966
        %4476 = vmatmul.mubr.bf16.gmra.mrb[0].mxu0 %v1965
        %v4477 = vpop.f32.mrb[0].mxu0
        %v4478 = vadd.f32 %v4285, %v4477
        %v4479 = vpop.f32.mrb[0].mxu0
        %v4480 = vadd.f32 %v4287, %v4479
        %v4481 = vpop.f32.mrb[0].mxu0
        %v4482 = vadd.f32 %v4289, %v4481
        %v4483 = vpop.f32.mrb[0].mxu0
        %v4484 = vadd.f32 %v4291, %v4483
        %4485 = vmatprep.mubr.bf16.mxu0 %v1982
        %4486 = vmatmul.mubr.bf16.gmra.mrb[0].mxu0 %v1981
        %v4487 = vpop.f32.mrb[0].mxu0
        %v4488 = vadd.f32 %v4295, %v4487
        %v4489 = vpop.f32.mrb[0].mxu0
        %v4490 = vadd.f32 %v4297, %v4489
        %v4491 = vpop.f32.mrb[0].mxu0
        %v4492 = vadd.f32 %v4299, %v4491
        %v4493 = vpop.f32.mrb[0].mxu0
        %v4494 = vadd.f32 %v4301, %v4493
        %4495 = vmatprep.mubr.bf16.mxu0 %v1998
        %4496 = vmatmul.mubr.bf16.gmra.mrb[0].mxu0 %v1997
        %v4497 = vpop.f32.mrb[0].mxu0
        %v4498 = vadd.f32 %v4305, %v4497
        %v4499 = vpop.f32.mrb[0].mxu0
        %v4500 = vadd.f32 %v4307, %v4499
        %v4501 = vpop.f32.mrb[0].mxu0
        %v4502 = vadd.f32 %v4309, %v4501
        %v4503 = vpop.f32.mrb[0].mxu0
        %v4504 = vadd.f32 %v4311, %v4503
        %4505 = vdwg.mxu0
        %4506 = vmatprep.subr.bf16.mxu0 %v3190
        %4507 = vmatpush1.bf16.msra.mxu0 %v3189
        %4508 = vmatprep.subr.bf16.mxu0 %v3192
        %4509 = vmatpush1.bf16.msra.mxu0 %v3191
        %4510 = vmatprep.subr.bf16.mxu0 %v3194
        %4511 = vmatpush1.bf16.msra.mxu0 %v3193
        %4512 = vmatprep.subr.bf16.mxu0 %v3196
        %4513 = vmatpush1.bf16.msra.mxu0 %v3195
        %4514 = vmatprep.subr.bf16.mxu0 %v3198
        %4515 = vmatpush1.bf16.msra.mxu0 %v3197
        %4516 = vmatprep.subr.bf16.mxu0 %v3200
        %4517 = vmatpush1.bf16.msra.mxu0 %v3199
        %4518 = vmatprep.subr.bf16.mxu0 %v3202
        %4519 = vmatpush1.bf16.msra.mxu0 %v3201
        %4520 = vmatprep.subr.bf16.mxu0 %v3204
        %4521 = vmatpush1.bf16.msra.mxu0 %v3203
        %4522 = vmatprep.subr.bf16.mxu0 %v3206
        %4523 = vmatpush1.bf16.msra.mxu0 %v3205
        %4524 = vmatprep.subr.bf16.mxu0 %v3208
        %4525 = vmatpush1.bf16.msra.mxu0 %v3207
        %4526 = vmatprep.subr.bf16.mxu0 %v3210
        %4527 = vmatpush1.bf16.msra.mxu0 %v3209
        %4528 = vmatprep.subr.bf16.mxu0 %v3212
        %4529 = vmatpush1.bf16.msra.mxu0 %v3211
        %4530 = vmatprep.subr.bf16.mxu0 %v3214
        %4531 = vmatpush1.bf16.msra.mxu0 %v3213
        %4532 = vmatprep.subr.bf16.mxu0 %v3216
        %4533 = vmatpush1.bf16.msra.mxu0 %v3215
        %4534 = vmatprep.subr.bf16.mxu0 %v3218
        %4535 = vmatpush1.bf16.msra.mxu0 %v3217
        %4536 = vmatprep.subr.bf16.mxu0 %v3220
        %4537 = vmatpush1.bf16.msra.mxu0 %v3219
        %4538 = vmatprep.mubr.bf16.mxu0 %v1760
        %4539 = vmatmul.mubr.bf16.gmra.mrb[0].mxu0 %v1759
        %v4540 = vpop.f32.mrb[0].mxu0
        %v4541 = vadd.f32 %v4348, %v4540
        %v4542 = vpop.f32.mrb[0].mxu0
        %v4543 = vadd.f32 %v4350, %v4542
        %v4544 = vpop.f32.mrb[0].mxu0
        %v4545 = vadd.f32 %v4352, %v4544
        %v4546 = vpop.f32.mrb[0].mxu0
        %v4547 = vadd.f32 %v4354, %v4546
        %4548 = vmatprep.mubr.bf16.mxu0 %v1776
        %4549 = vmatmul.mubr.bf16.gmra.mrb[0].mxu0 %v1775
        %v4550 = vpop.f32.mrb[0].mxu0
        %v4551 = vadd.f32 %v4358, %v4550
        %v4552 = vpop.f32.mrb[0].mxu0
        %v4553 = vadd.f32 %v4360, %v4552
        %v4554 = vpop.f32.mrb[0].mxu0
        %v4555 = vadd.f32 %v4362, %v4554
        %v4556 = vpop.f32.mrb[0].mxu0
        %v4557 = vadd.f32 %v4364, %v4556
        %4558 = vmatprep.mubr.bf16.mxu0 %v1792
        %4559 = vmatmul.mubr.bf16.gmra.mrb[0].mxu0 %v1791
        %v4560 = vpop.f32.mrb[0].mxu0
        %v4561 = vadd.f32 %v4368, %v4560
        %v4562 = vpop.f32.mrb[0].mxu0
        %v4563 = vadd.f32 %v4370, %v4562
        %v4564 = vpop.f32.mrb[0].mxu0
        %v4565 = vadd.f32 %v4372, %v4564
        %v4566 = vpop.f32.mrb[0].mxu0
        %v4567 = vadd.f32 %v4374, %v4566
        %4568 = vmatprep.mubr.bf16.mxu0 %v1808
        %4569 = vmatmul.mubr.bf16.gmra.mrb[0].mxu0 %v1807
        %v4570 = vpop.f32.mrb[0].mxu0
        %v4571 = vadd.f32 %v4378, %v4570
        %v4572 = vpop.f32.mrb[0].mxu0
        %v4573 = vadd.f32 %v4380, %v4572
        %v4574 = vpop.f32.mrb[0].mxu0
        %v4575 = vadd.f32 %v4382, %v4574
        %v4576 = vpop.f32.mrb[0].mxu0
        %v4577 = vadd.f32 %v4384, %v4576
        %4578 = vmatprep.mubr.bf16.mxu0 %v1824
        %4579 = vmatmul.mubr.bf16.gmra.mrb[0].mxu0 %v1823
        %v4580 = vpop.f32.mrb[0].mxu0
        %v4581 = vadd.f32 %v4388, %v4580
        %v4582 = vpop.f32.mrb[0].mxu0
        %v4583 = vadd.f32 %v4390, %v4582
        %v4584 = vpop.f32.mrb[0].mxu0
        %v4585 = vadd.f32 %v4392, %v4584
        %v4586 = vpop.f32.mrb[0].mxu0
        %v4587 = vadd.f32 %v4394, %v4586
        %4588 = vmatprep.mubr.bf16.mxu0 %v1840
        %4589 = vmatmul.mubr.bf16.gmra.mrb[0].mxu0 %v1839
        %v4590 = vpop.f32.mrb[0].mxu0
        %v4591 = vadd.f32 %v4398, %v4590
        %v4592 = vpop.f32.mrb[0].mxu0
        %v4593 = vadd.f32 %v4400, %v4592
        %v4594 = vpop.f32.mrb[0].mxu0
        %v4595 = vadd.f32 %v4402, %v4594
        %v4596 = vpop.f32.mrb[0].mxu0
        %v4597 = vadd.f32 %v4404, %v4596
        %4598 = vmatprep.mubr.bf16.mxu0 %v1856
        %4599 = vmatmul.mubr.bf16.gmra.mrb[0].mxu0 %v1855
        %v4600 = vpop.f32.mrb[0].mxu0
        %v4601 = vadd.f32 %v4408, %v4600
        %v4602 = vpop.f32.mrb[0].mxu0
        %v4603 = vadd.f32 %v4410, %v4602
        %v4604 = vpop.f32.mrb[0].mxu0
        %v4605 = vadd.f32 %v4412, %v4604
        %v4606 = vpop.f32.mrb[0].mxu0
        %v4607 = vadd.f32 %v4414, %v4606
        %4608 = vmatprep.mubr.bf16.mxu0 %v1872
        %4609 = vmatmul.mubr.bf16.gmra.mrb[0].mxu0 %v1871
        %v4610 = vpop.f32.mrb[0].mxu0
        %v4611 = vadd.f32 %v4418, %v4610
        %v4612 = vpop.f32.mrb[0].mxu0
        %v4613 = vadd.f32 %v4420, %v4612
        %v4614 = vpop.f32.mrb[0].mxu0
        %v4615 = vadd.f32 %v4422, %v4614
        %v4616 = vpop.f32.mrb[0].mxu0
        %v4617 = vadd.f32 %v4424, %v4616
        %4618 = vmatprep.mubr.bf16.mxu0 %v1888
        %4619 = vmatmul.mubr.bf16.gmra.mrb[0].mxu0 %v1887
        %v4620 = vpop.f32.mrb[0].mxu0
        %v4621 = vadd.f32 %v4428, %v4620
        %v4622 = vpop.f32.mrb[0].mxu0
        %v4623 = vadd.f32 %v4430, %v4622
        %v4624 = vpop.f32.mrb[0].mxu0
        %v4625 = vadd.f32 %v4432, %v4624
        %v4626 = vpop.f32.mrb[0].mxu0
        %v4627 = vadd.f32 %v4434, %v4626
        %4628 = vmatprep.mubr.bf16.mxu0 %v1904
        %4629 = vmatmul.mubr.bf16.gmra.mrb[0].mxu0 %v1903
        %v4630 = vpop.f32.mrb[0].mxu0
        %v4631 = vadd.f32 %v4438, %v4630
        %v4632 = vpop.f32.mrb[0].mxu0
        %v4633 = vadd.f32 %v4440, %v4632
        %v4634 = vpop.f32.mrb[0].mxu0
        %v4635 = vadd.f32 %v4442, %v4634
        %v4636 = vpop.f32.mrb[0].mxu0
        %v4637 = vadd.f32 %v4444, %v4636
        %4638 = vmatprep.mubr.bf16.mxu0 %v1920
        %4639 = vmatmul.mubr.bf16.gmra.mrb[0].mxu0 %v1919
        %v4640 = vpop.f32.mrb[0].mxu0
        %v4641 = vadd.f32 %v4448, %v4640
        %v4642 = vpop.f32.mrb[0].mxu0
        %v4643 = vadd.f32 %v4450, %v4642
        %v4644 = vpop.f32.mrb[0].mxu0
        %v4645 = vadd.f32 %v4452, %v4644
        %v4646 = vpop.f32.mrb[0].mxu0
        %v4647 = vadd.f32 %v4454, %v4646
        %4648 = vmatprep.mubr.bf16.mxu0 %v1936
        %4649 = vmatmul.mubr.bf16.gmra.mrb[0].mxu0 %v1935
        %v4650 = vpop.f32.mrb[0].mxu0
        %v4651 = vadd.f32 %v4458, %v4650
        %v4652 = vpop.f32.mrb[0].mxu0
        %v4653 = vadd.f32 %v4460, %v4652
        %v4654 = vpop.f32.mrb[0].mxu0
        %v4655 = vadd.f32 %v4462, %v4654
        %v4656 = vpop.f32.mrb[0].mxu0
        %v4657 = vadd.f32 %v4464, %v4656
        %4658 = vmatprep.mubr.bf16.mxu0 %v1952
        %4659 = vmatmul.mubr.bf16.gmra.mrb[0].mxu0 %v1951
        %v4660 = vpop.f32.mrb[0].mxu0
        %v4661 = vadd.f32 %v4468, %v4660
        %v4662 = vpop.f32.mrb[0].mxu0
        %v4663 = vadd.f32 %v4470, %v4662
        %v4664 = vpop.f32.mrb[0].mxu0
        %v4665 = vadd.f32 %v4472, %v4664
        %v4666 = vpop.f32.mrb[0].mxu0
        %v4667 = vadd.f32 %v4474, %v4666
        %4668 = vmatprep.mubr.bf16.mxu0 %v1968
        %4669 = vmatmul.mubr.bf16.gmra.mrb[0].mxu0 %v1967
        %v4670 = vpop.f32.mrb[0].mxu0
        %v4671 = vadd.f32 %v4478, %v4670
        %v4672 = vpop.f32.mrb[0].mxu0
        %v4673 = vadd.f32 %v4480, %v4672
        %v4674 = vpop.f32.mrb[0].mxu0
        %v4675 = vadd.f32 %v4482, %v4674
        %v4676 = vpop.f32.mrb[0].mxu0
        %v4677 = vadd.f32 %v4484, %v4676
        %4678 = vmatprep.mubr.bf16.mxu0 %v1984
        %4679 = vmatmul.mubr.bf16.gmra.mrb[0].mxu0 %v1983
        %v4680 = vpop.f32.mrb[0].mxu0
        %v4681 = vadd.f32 %v4488, %v4680
        %v4682 = vpop.f32.mrb[0].mxu0
        %v4683 = vadd.f32 %v4490, %v4682
        %v4684 = vpop.f32.mrb[0].mxu0
        %v4685 = vadd.f32 %v4492, %v4684
        %v4686 = vpop.f32.mrb[0].mxu0
        %v4687 = vadd.f32 %v4494, %v4686
        %4688 = vmatprep.mubr.bf16.mxu0 %v2000
        %4689 = vmatmul.mubr.bf16.gmra.mrb[0].mxu0 %v1999
        %v4690 = vpop.f32.mrb[0].mxu0
        %v4691 = vadd.f32 %v4498, %v4690
        %v4692 = vpop.f32.mrb[0].mxu0
        %v4693 = vadd.f32 %v4500, %v4692
        %v4694 = vpop.f32.mrb[0].mxu0
        %v4695 = vadd.f32 %v4502, %v4694
        %v4696 = vpop.f32.mrb[0].mxu0
        %v4697 = vadd.f32 %v4504, %v4696
        %4698 = vdwg.mxu0
        %4699 = vmatprep.subr.bf16.mxu0 %v3222
        %4700 = vmatpush1.bf16.msra.mxu0 %v3221
        %4701 = vmatprep.subr.bf16.mxu0 %v3224
        %4702 = vmatpush1.bf16.msra.mxu0 %v3223
        %4703 = vmatprep.subr.bf16.mxu0 %v3226
        %4704 = vmatpush1.bf16.msra.mxu0 %v3225
        %4705 = vmatprep.subr.bf16.mxu0 %v3228
        %4706 = vmatpush1.bf16.msra.mxu0 %v3227
        %4707 = vmatprep.subr.bf16.mxu0 %v3230
        %4708 = vmatpush1.bf16.msra.mxu0 %v3229
        %4709 = vmatprep.subr.bf16.mxu0 %v3232
        %4710 = vmatpush1.bf16.msra.mxu0 %v3231
        %4711 = vmatprep.subr.bf16.mxu0 %v3234
        %4712 = vmatpush1.bf16.msra.mxu0 %v3233
        %4713 = vmatprep.subr.bf16.mxu0 %v3236
        %4714 = vmatpush1.bf16.msra.mxu0 %v3235
        %4715 = vmatprep.subr.bf16.mxu0 %v3238
        %4716 = vmatpush1.bf16.msra.mxu0 %v3237
        %4717 = vmatprep.subr.bf16.mxu0 %v3240
        %4718 = vmatpush1.bf16.msra.mxu0 %v3239
        %4719 = vmatprep.subr.bf16.mxu0 %v3242
        %4720 = vmatpush1.bf16.msra.mxu0 %v3241
        %4721 = vmatprep.subr.bf16.mxu0 %v3244
        %4722 = vmatpush1.bf16.msra.mxu0 %v3243
        %4723 = vmatprep.subr.bf16.mxu0 %v3246
        %4724 = vmatpush1.bf16.msra.mxu0 %v3245
        %4725 = vmatprep.subr.bf16.mxu0 %v3248
        %4726 = vmatpush1.bf16.msra.mxu0 %v3247
        %4727 = vmatprep.subr.bf16.mxu0 %v3250
        %4728 = vmatpush1.bf16.msra.mxu0 %v3249
        %4729 = vmatprep.subr.bf16.mxu0 %v3252
        %4730 = vmatpush1.bf16.msra.mxu0 %v3251
        %4731 = vmatprep.mubr.bf16.mxu0 %v1762
        %4732 = vmatmul.mubr.bf16.gmra.mrb[0].mxu0 %v1761
        %v4733 = vpop.f32.mrb[0].mxu0
        %v4734 = vadd.f32 %v4541, %v4733
        %v4735 = vpop.f32.mrb[0].mxu0
        %v4736 = vadd.f32 %v4543, %v4735
        %v4737 = vpop.f32.mrb[0].mxu0
        %v4738 = vadd.f32 %v4545, %v4737
        %v4739 = vpop.f32.mrb[0].mxu0
        %v4740 = vadd.f32 %v4547, %v4739
        %4741 = vmatprep.mubr.bf16.mxu0 %v1778
        %4742 = vmatmul.mubr.bf16.gmra.mrb[0].mxu0 %v1777
        %v4743 = vpop.f32.mrb[0].mxu0
        %v4744 = vadd.f32 %v4551, %v4743
        %v4745 = vpop.f32.mrb[0].mxu0
        %v4746 = vadd.f32 %v4553, %v4745
        %v4747 = vpop.f32.mrb[0].mxu0
        %v4748 = vadd.f32 %v4555, %v4747
        %v4749 = vpop.f32.mrb[0].mxu0
        %v4750 = vadd.f32 %v4557, %v4749
        %4751 = vmatprep.mubr.bf16.mxu0 %v1794
        %4752 = vmatmul.mubr.bf16.gmra.mrb[0].mxu0 %v1793
        %v4753 = vpop.f32.mrb[0].mxu0
        %v4754 = vadd.f32 %v4561, %v4753
        %v4755 = vpop.f32.mrb[0].mxu0
        %v4756 = vadd.f32 %v4563, %v4755
        %v4757 = vpop.f32.mrb[0].mxu0
        %v4758 = vadd.f32 %v4565, %v4757
        %v4759 = vpop.f32.mrb[0].mxu0
        %v4760 = vadd.f32 %v4567, %v4759
        %4761 = vmatprep.mubr.bf16.mxu0 %v1810
        %4762 = vmatmul.mubr.bf16.gmra.mrb[0].mxu0 %v1809
        %v4763 = vpop.f32.mrb[0].mxu0
        %v4764 = vadd.f32 %v4571, %v4763
        %v4765 = vpop.f32.mrb[0].mxu0
        %v4766 = vadd.f32 %v4573, %v4765
        %v4767 = vpop.f32.mrb[0].mxu0
        %v4768 = vadd.f32 %v4575, %v4767
        %v4769 = vpop.f32.mrb[0].mxu0
        %v4770 = vadd.f32 %v4577, %v4769
        %4771 = vmatprep.mubr.bf16.mxu0 %v1826
        %4772 = vmatmul.mubr.bf16.gmra.mrb[0].mxu0 %v1825
        %v4773 = vpop.f32.mrb[0].mxu0
        %v4774 = vadd.f32 %v4581, %v4773
        %v4775 = vpop.f32.mrb[0].mxu0
        %v4776 = vadd.f32 %v4583, %v4775
        %v4777 = vpop.f32.mrb[0].mxu0
        %v4778 = vadd.f32 %v4585, %v4777
        %v4779 = vpop.f32.mrb[0].mxu0
        %v4780 = vadd.f32 %v4587, %v4779
        %4781 = vmatprep.mubr.bf16.mxu0 %v1842
        %4782 = vmatmul.mubr.bf16.gmra.mrb[0].mxu0 %v1841
        %v4783 = vpop.f32.mrb[0].mxu0
        %v4784 = vadd.f32 %v4591, %v4783
        %v4785 = vpop.f32.mrb[0].mxu0
        %v4786 = vadd.f32 %v4593, %v4785
        %v4787 = vpop.f32.mrb[0].mxu0
        %v4788 = vadd.f32 %v4595, %v4787
        %v4789 = vpop.f32.mrb[0].mxu0
        %v4790 = vadd.f32 %v4597, %v4789
        %4791 = vmatprep.mubr.bf16.mxu0 %v1858
        %4792 = vmatmul.mubr.bf16.gmra.mrb[0].mxu0 %v1857
        %v4793 = vpop.f32.mrb[0].mxu0
        %v4794 = vadd.f32 %v4601, %v4793
        %v4795 = vpop.f32.mrb[0].mxu0
        %v4796 = vadd.f32 %v4603, %v4795
        %v4797 = vpop.f32.mrb[0].mxu0
        %v4798 = vadd.f32 %v4605, %v4797
        %v4799 = vpop.f32.mrb[0].mxu0
        %v4800 = vadd.f32 %v4607, %v4799
        %4801 = vmatprep.mubr.bf16.mxu0 %v1874
        %4802 = vmatmul.mubr.bf16.gmra.mrb[0].mxu0 %v1873
        %v4803 = vpop.f32.mrb[0].mxu0
        %v4804 = vadd.f32 %v4611, %v4803
        %v4805 = vpop.f32.mrb[0].mxu0
        %v4806 = vadd.f32 %v4613, %v4805
        %v4807 = vpop.f32.mrb[0].mxu0
        %v4808 = vadd.f32 %v4615, %v4807
        %v4809 = vpop.f32.mrb[0].mxu0
        %v4810 = vadd.f32 %v4617, %v4809
        %4811 = vmatprep.mubr.bf16.mxu0 %v1890
        %4812 = vmatmul.mubr.bf16.gmra.mrb[0].mxu0 %v1889
        %v4813 = vpop.f32.mrb[0].mxu0
        %v4814 = vadd.f32 %v4621, %v4813
        %v4815 = vpop.f32.mrb[0].mxu0
        %v4816 = vadd.f32 %v4623, %v4815
        %v4817 = vpop.f32.mrb[0].mxu0
        %v4818 = vadd.f32 %v4625, %v4817
        %v4819 = vpop.f32.mrb[0].mxu0
        %v4820 = vadd.f32 %v4627, %v4819
        %4821 = vmatprep.mubr.bf16.mxu0 %v1906
        %4822 = vmatmul.mubr.bf16.gmra.mrb[0].mxu0 %v1905
        %v4823 = vpop.f32.mrb[0].mxu0
        %v4824 = vadd.f32 %v4631, %v4823
        %v4825 = vpop.f32.mrb[0].mxu0
        %v4826 = vadd.f32 %v4633, %v4825
        %v4827 = vpop.f32.mrb[0].mxu0
        %v4828 = vadd.f32 %v4635, %v4827
        %v4829 = vpop.f32.mrb[0].mxu0
        %v4830 = vadd.f32 %v4637, %v4829
        %4831 = vmatprep.mubr.bf16.mxu0 %v1922
        %4832 = vmatmul.mubr.bf16.gmra.mrb[0].mxu0 %v1921
        %v4833 = vpop.f32.mrb[0].mxu0
        %v4834 = vadd.f32 %v4641, %v4833
        %v4835 = vpop.f32.mrb[0].mxu0
        %v4836 = vadd.f32 %v4643, %v4835
        %v4837 = vpop.f32.mrb[0].mxu0
        %v4838 = vadd.f32 %v4645, %v4837
        %v4839 = vpop.f32.mrb[0].mxu0
        %v4840 = vadd.f32 %v4647, %v4839
        %4841 = vmatprep.mubr.bf16.mxu0 %v1938
        %4842 = vmatmul.mubr.bf16.gmra.mrb[0].mxu0 %v1937
        %v4843 = vpop.f32.mrb[0].mxu0
        %v4844 = vadd.f32 %v4651, %v4843
        %v4845 = vpop.f32.mrb[0].mxu0
        %v4846 = vadd.f32 %v4653, %v4845
        %v4847 = vpop.f32.mrb[0].mxu0
        %v4848 = vadd.f32 %v4655, %v4847
        %v4849 = vpop.f32.mrb[0].mxu0
        %v4850 = vadd.f32 %v4657, %v4849
        %4851 = vmatprep.mubr.bf16.mxu0 %v1954
        %4852 = vmatmul.mubr.bf16.gmra.mrb[0].mxu0 %v1953
        %v4853 = vpop.f32.mrb[0].mxu0
        %v4854 = vadd.f32 %v4661, %v4853
        %v4855 = vpop.f32.mrb[0].mxu0
        %v4856 = vadd.f32 %v4663, %v4855
        %v4857 = vpop.f32.mrb[0].mxu0
        %v4858 = vadd.f32 %v4665, %v4857
        %v4859 = vpop.f32.mrb[0].mxu0
        %v4860 = vadd.f32 %v4667, %v4859
        %4861 = vmatprep.mubr.bf16.mxu0 %v1970
        %4862 = vmatmul.mubr.bf16.gmra.mrb[0].mxu0 %v1969
        %v4863 = vpop.f32.mrb[0].mxu0
        %v4864 = vadd.f32 %v4671, %v4863
        %v4865 = vpop.f32.mrb[0].mxu0
        %v4866 = vadd.f32 %v4673, %v4865
        %v4867 = vpop.f32.mrb[0].mxu0
        %v4868 = vadd.f32 %v4675, %v4867
        %v4869 = vpop.f32.mrb[0].mxu0
        %v4870 = vadd.f32 %v4677, %v4869
        %4871 = vmatprep.mubr.bf16.mxu0 %v1986
        %4872 = vmatmul.mubr.bf16.gmra.mrb[0].mxu0 %v1985
        %v4873 = vpop.f32.mrb[0].mxu0
        %v4874 = vadd.f32 %v4681, %v4873
        %v4875 = vpop.f32.mrb[0].mxu0
        %v4876 = vadd.f32 %v4683, %v4875
        %v4877 = vpop.f32.mrb[0].mxu0
        %v4878 = vadd.f32 %v4685, %v4877
        %v4879 = vpop.f32.mrb[0].mxu0
        %v4880 = vadd.f32 %v4687, %v4879
        %4881 = vmatprep.mubr.bf16.mxu0 %v2002
        %4882 = vmatmul.mubr.bf16.gmra.mrb[0].mxu0 %v2001
        %v4883 = vpop.f32.mrb[0].mxu0
        %v4884 = vadd.f32 %v4691, %v4883
        %v4885 = vpop.f32.mrb[0].mxu0
        %v4886 = vadd.f32 %v4693, %v4885
        %v4887 = vpop.f32.mrb[0].mxu0
        %v4888 = vadd.f32 %v4695, %v4887
        %v4889 = vpop.f32.mrb[0].mxu0
        %v4890 = vadd.f32 %v4697, %v4889
        %4891 = vdwg.mxu0
        %4892 = vmatprep.subr.bf16.mxu0 %v3254
        %4893 = vmatpush1.bf16.msra.mxu0 %v3253
        %4894 = vmatprep.subr.bf16.mxu0 %v3256
        %4895 = vmatpush1.bf16.msra.mxu0 %v3255
        %4896 = vmatprep.subr.bf16.mxu0 %v3258
        %4897 = vmatpush1.bf16.msra.mxu0 %v3257
        %4898 = vmatprep.subr.bf16.mxu0 %v3260
        %4899 = vmatpush1.bf16.msra.mxu0 %v3259
        %4900 = vmatprep.subr.bf16.mxu0 %v3262
        %4901 = vmatpush1.bf16.msra.mxu0 %v3261
        %4902 = vmatprep.subr.bf16.mxu0 %v3264
        %4903 = vmatpush1.bf16.msra.mxu0 %v3263
        %4904 = vmatprep.subr.bf16.mxu0 %v3266
        %4905 = vmatpush1.bf16.msra.mxu0 %v3265
        %4906 = vmatprep.subr.bf16.mxu0 %v3268
        %4907 = vmatpush1.bf16.msra.mxu0 %v3267
        %4908 = vmatprep.subr.bf16.mxu0 %v3270
        %4909 = vmatpush1.bf16.msra.mxu0 %v3269
        %4910 = vmatprep.subr.bf16.mxu0 %v3272
        %4911 = vmatpush1.bf16.msra.mxu0 %v3271
        %4912 = vmatprep.subr.bf16.mxu0 %v3274
        %4913 = vmatpush1.bf16.msra.mxu0 %v3273
        %4914 = vmatprep.subr.bf16.mxu0 %v3276
        %4915 = vmatpush1.bf16.msra.mxu0 %v3275
        %4916 = vmatprep.subr.bf16.mxu0 %v3278
        %4917 = vmatpush1.bf16.msra.mxu0 %v3277
        %4918 = vmatprep.subr.bf16.mxu0 %v3280
        %4919 = vmatpush1.bf16.msra.mxu0 %v3279
        %4920 = vmatprep.subr.bf16.mxu0 %v3282
        %4921 = vmatpush1.bf16.msra.mxu0 %v3281
        %4922 = vmatprep.subr.bf16.mxu0 %v3284
        %4923 = vmatpush1.bf16.msra.mxu0 %v3283
        %4924 = vmatprep.mubr.bf16.mxu0 %v1764
        %4925 = vmatmul.mubr.bf16.gmra.mrb[0].mxu0 %v1763
        %v4926 = vpop.f32.mrb[0].mxu0
        %v4927 = vadd.f32 %v4734, %v4926
        %v4928 = vpop.f32.mrb[0].mxu0
        %v4929 = vadd.f32 %v4736, %v4928
        %v4930 = vpop.f32.mrb[0].mxu0
        %v4931 = vadd.f32 %v4738, %v4930
        %v4932 = vpop.f32.mrb[0].mxu0
        %v4933 = vadd.f32 %v4740, %v4932
        %4934 = vmatprep.mubr.bf16.mxu0 %v1780
        %4935 = vmatmul.mubr.bf16.gmra.mrb[0].mxu0 %v1779
        %v4936 = vpop.f32.mrb[0].mxu0
        %v4937 = vadd.f32 %v4744, %v4936
        %v4938 = vpop.f32.mrb[0].mxu0
        %v4939 = vadd.f32 %v4746, %v4938
        %v4940 = vpop.f32.mrb[0].mxu0
        %v4941 = vadd.f32 %v4748, %v4940
        %v4942 = vpop.f32.mrb[0].mxu0
        %v4943 = vadd.f32 %v4750, %v4942
        %4944 = vmatprep.mubr.bf16.mxu0 %v1796
        %4945 = vmatmul.mubr.bf16.gmra.mrb[0].mxu0 %v1795
        %v4946 = vpop.f32.mrb[0].mxu0
        %v4947 = vadd.f32 %v4754, %v4946
        %v4948 = vpop.f32.mrb[0].mxu0
        %v4949 = vadd.f32 %v4756, %v4948
        %v4950 = vpop.f32.mrb[0].mxu0
        %v4951 = vadd.f32 %v4758, %v4950
        %v4952 = vpop.f32.mrb[0].mxu0
        %v4953 = vadd.f32 %v4760, %v4952
        %4954 = vmatprep.mubr.bf16.mxu0 %v1812
        %4955 = vmatmul.mubr.bf16.gmra.mrb[0].mxu0 %v1811
        %v4956 = vpop.f32.mrb[0].mxu0
        %v4957 = vadd.f32 %v4764, %v4956
        %v4958 = vpop.f32.mrb[0].mxu0
        %v4959 = vadd.f32 %v4766, %v4958
        %v4960 = vpop.f32.mrb[0].mxu0
        %v4961 = vadd.f32 %v4768, %v4960
        %v4962 = vpop.f32.mrb[0].mxu0
        %v4963 = vadd.f32 %v4770, %v4962
        %4964 = vmatprep.mubr.bf16.mxu0 %v1828
        %4965 = vmatmul.mubr.bf16.gmra.mrb[0].mxu0 %v1827
        %v4966 = vpop.f32.mrb[0].mxu0
        %v4967 = vadd.f32 %v4774, %v4966
        %v4968 = vpop.f32.mrb[0].mxu0
        %v4969 = vadd.f32 %v4776, %v4968
        %v4970 = vpop.f32.mrb[0].mxu0
        %v4971 = vadd.f32 %v4778, %v4970
        %v4972 = vpop.f32.mrb[0].mxu0
        %v4973 = vadd.f32 %v4780, %v4972
        %4974 = vmatprep.mubr.bf16.mxu0 %v1844
        %4975 = vmatmul.mubr.bf16.gmra.mrb[0].mxu0 %v1843
        %v4976 = vpop.f32.mrb[0].mxu0
        %v4977 = vadd.f32 %v4784, %v4976
        %v4978 = vpop.f32.mrb[0].mxu0
        %v4979 = vadd.f32 %v4786, %v4978
        %v4980 = vpop.f32.mrb[0].mxu0
        %v4981 = vadd.f32 %v4788, %v4980
        %v4982 = vpop.f32.mrb[0].mxu0
        %v4983 = vadd.f32 %v4790, %v4982
        %4984 = vmatprep.mubr.bf16.mxu0 %v1860
        %4985 = vmatmul.mubr.bf16.gmra.mrb[0].mxu0 %v1859
        %v4986 = vpop.f32.mrb[0].mxu0
        %v4987 = vadd.f32 %v4794, %v4986
        %v4988 = vpop.f32.mrb[0].mxu0
        %v4989 = vadd.f32 %v4796, %v4988
        %v4990 = vpop.f32.mrb[0].mxu0
        %v4991 = vadd.f32 %v4798, %v4990
        %v4992 = vpop.f32.mrb[0].mxu0
        %v4993 = vadd.f32 %v4800, %v4992
        %4994 = vmatprep.mubr.bf16.mxu0 %v1876
        %4995 = vmatmul.mubr.bf16.gmra.mrb[0].mxu0 %v1875
        %v4996 = vpop.f32.mrb[0].mxu0
        %v4997 = vadd.f32 %v4804, %v4996
        %v4998 = vpop.f32.mrb[0].mxu0
        %v4999 = vadd.f32 %v4806, %v4998
        %v5000 = vpop.f32.mrb[0].mxu0
        %v5001 = vadd.f32 %v4808, %v5000
        %v5002 = vpop.f32.mrb[0].mxu0
        %v5003 = vadd.f32 %v4810, %v5002
        %5004 = vmatprep.mubr.bf16.mxu0 %v1892
        %5005 = vmatmul.mubr.bf16.gmra.mrb[0].mxu0 %v1891
        %v5006 = vpop.f32.mrb[0].mxu0
        %v5007 = vadd.f32 %v4814, %v5006
        %v5008 = vpop.f32.mrb[0].mxu0
        %v5009 = vadd.f32 %v4816, %v5008
        %v5010 = vpop.f32.mrb[0].mxu0
        %v5011 = vadd.f32 %v4818, %v5010
        %v5012 = vpop.f32.mrb[0].mxu0
        %v5013 = vadd.f32 %v4820, %v5012
        %5014 = vmatprep.mubr.bf16.mxu0 %v1908
        %5015 = vmatmul.mubr.bf16.gmra.mrb[0].mxu0 %v1907
        %v5016 = vpop.f32.mrb[0].mxu0
        %v5017 = vadd.f32 %v4824, %v5016
        %v5018 = vpop.f32.mrb[0].mxu0
        %v5019 = vadd.f32 %v4826, %v5018
        %v5020 = vpop.f32.mrb[0].mxu0
        %v5021 = vadd.f32 %v4828, %v5020
        %v5022 = vpop.f32.mrb[0].mxu0
        %v5023 = vadd.f32 %v4830, %v5022
        %5024 = vmatprep.mubr.bf16.mxu0 %v1924
        %5025 = vmatmul.mubr.bf16.gmra.mrb[0].mxu0 %v1923
        %v5026 = vpop.f32.mrb[0].mxu0
        %v5027 = vadd.f32 %v4834, %v5026
        %v5028 = vpop.f32.mrb[0].mxu0
        %v5029 = vadd.f32 %v4836, %v5028
        %v5030 = vpop.f32.mrb[0].mxu0
        %v5031 = vadd.f32 %v4838, %v5030
        %v5032 = vpop.f32.mrb[0].mxu0
        %v5033 = vadd.f32 %v4840, %v5032
        %5034 = vmatprep.mubr.bf16.mxu0 %v1940
        %5035 = vmatmul.mubr.bf16.gmra.mrb[0].mxu0 %v1939
        %v5036 = vpop.f32.mrb[0].mxu0
        %v5037 = vadd.f32 %v4844, %v5036
        %v5038 = vpop.f32.mrb[0].mxu0
        %v5039 = vadd.f32 %v4846, %v5038
        %v5040 = vpop.f32.mrb[0].mxu0
        %v5041 = vadd.f32 %v4848, %v5040
        %v5042 = vpop.f32.mrb[0].mxu0
        %v5043 = vadd.f32 %v4850, %v5042
        %5044 = vmatprep.mubr.bf16.mxu0 %v1956
        %5045 = vmatmul.mubr.bf16.gmra.mrb[0].mxu0 %v1955
        %v5046 = vpop.f32.mrb[0].mxu0
        %v5047 = vadd.f32 %v4854, %v5046
        %v5048 = vpop.f32.mrb[0].mxu0
        %v5049 = vadd.f32 %v4856, %v5048
        %v5050 = vpop.f32.mrb[0].mxu0
        %v5051 = vadd.f32 %v4858, %v5050
        %v5052 = vpop.f32.mrb[0].mxu0
        %v5053 = vadd.f32 %v4860, %v5052
        %5054 = vmatprep.mubr.bf16.mxu0 %v1972
        %5055 = vmatmul.mubr.bf16.gmra.mrb[0].mxu0 %v1971
        %v5056 = vpop.f32.mrb[0].mxu0
        %v5057 = vadd.f32 %v4864, %v5056
        %v5058 = vpop.f32.mrb[0].mxu0
        %v5059 = vadd.f32 %v4866, %v5058
        %v5060 = vpop.f32.mrb[0].mxu0
        %v5061 = vadd.f32 %v4868, %v5060
        %v5062 = vpop.f32.mrb[0].mxu0
        %v5063 = vadd.f32 %v4870, %v5062
        %5064 = vmatprep.mubr.bf16.mxu0 %v1988
        %5065 = vmatmul.mubr.bf16.gmra.mrb[0].mxu0 %v1987
        %v5066 = vpop.f32.mrb[0].mxu0
        %v5067 = vadd.f32 %v4874, %v5066
        %v5068 = vpop.f32.mrb[0].mxu0
        %v5069 = vadd.f32 %v4876, %v5068
        %v5070 = vpop.f32.mrb[0].mxu0
        %v5071 = vadd.f32 %v4878, %v5070
        %v5072 = vpop.f32.mrb[0].mxu0
        %v5073 = vadd.f32 %v4880, %v5072
        %5074 = vmatprep.mubr.bf16.mxu0 %v2004
        %5075 = vmatmul.mubr.bf16.gmra.mrb[0].mxu0 %v2003
        %v5076 = vpop.f32.mrb[0].mxu0
        %v5077 = vadd.f32 %v4884, %v5076
        %v5078 = vpop.f32.mrb[0].mxu0
        %v5079 = vadd.f32 %v4886, %v5078
        %v5080 = vpop.f32.mrb[0].mxu0
        %v5081 = vadd.f32 %v4888, %v5080
        %v5082 = vpop.f32.mrb[0].mxu0
        %v5083 = vadd.f32 %v4890, %v5082
        %5084 = vdwg.mxu0
        %v5085 = vmax.f32 %v4927, 0.0
        %v5086 = vmax.f32 %v4929, 0.0
        %v5087 = vmax.f32 %v4931, 0.0
        %v5088 = vmax.f32 %v4933, 0.0
        %v5089 = vmax.f32 %v4937, 0.0
        %v5090 = vmax.f32 %v4939, 0.0
        %v5091 = vmax.f32 %v4941, 0.0
        %v5092 = vmax.f32 %v4943, 0.0
        %v5093 = vmax.f32 %v4947, 0.0
        %v5094 = vmax.f32 %v4949, 0.0
        %v5095 = vmax.f32 %v4951, 0.0
        %v5096 = vmax.f32 %v4953, 0.0
        %v5097 = vmax.f32 %v4957, 0.0
        %v5098 = vmax.f32 %v4959, 0.0
        %v5099 = vmax.f32 %v4961, 0.0
        %v5100 = vmax.f32 %v4963, 0.0
        %v5101 = vmax.f32 %v4967, 0.0
        %v5102 = vmax.f32 %v4969, 0.0
        %v5103 = vmax.f32 %v4971, 0.0
        %v5104 = vmax.f32 %v4973, 0.0
        %v5105 = vmax.f32 %v4977, 0.0
        %v5106 = vmax.f32 %v4979, 0.0
        %v5107 = vmax.f32 %v4981, 0.0
        %v5108 = vmax.f32 %v4983, 0.0
        %v5109 = vmax.f32 %v4987, 0.0
        %v5110 = vmax.f32 %v4989, 0.0
        %v5111 = vmax.f32 %v4991, 0.0
        %v5112 = vmax.f32 %v4993, 0.0
        %v5113 = vmax.f32 %v4997, 0.0
        %v5114 = vmax.f32 %v4999, 0.0
        %v5115 = vmax.f32 %v5001, 0.0
        %v5116 = vmax.f32 %v5003, 0.0
        %v5117 = vmax.f32 %v5007, 0.0
        %v5118 = vmax.f32 %v5009, 0.0
        %v5119 = vmax.f32 %v5011, 0.0
        %v5120 = vmax.f32 %v5013, 0.0
        %v5121 = vmax.f32 %v5017, 0.0
        %v5122 = vmax.f32 %v5019, 0.0
        %v5123 = vmax.f32 %v5021, 0.0
        %v5124 = vmax.f32 %v5023, 0.0
        %v5125 = vmax.f32 %v5027, 0.0
        %v5126 = vmax.f32 %v5029, 0.0
        %v5127 = vmax.f32 %v5031, 0.0
        %v5128 = vmax.f32 %v5033, 0.0
        %v5129 = vmax.f32 %v5037, 0.0
        %v5130 = vmax.f32 %v5039, 0.0
        %v5131 = vmax.f32 %v5041, 0.0
        %v5132 = vmax.f32 %v5043, 0.0
        %v5133 = vmax.f32 %v5047, 0.0
        %v5134 = vmax.f32 %v5049, 0.0
        %v5135 = vmax.f32 %v5051, 0.0
        %v5136 = vmax.f32 %v5053, 0.0
        %v5137 = vmax.f32 %v5057, 0.0
        %v5138 = vmax.f32 %v5059, 0.0
        %v5139 = vmax.f32 %v5061, 0.0
        %v5140 = vmax.f32 %v5063, 0.0
        %v5141 = vmax.f32 %v5067, 0.0
        %v5142 = vmax.f32 %v5069, 0.0
        %v5143 = vmax.f32 %v5071, 0.0
        %v5144 = vmax.f32 %v5073, 0.0
        %v5145 = vmax.f32 %v5077, 0.0
        %v5146 = vmax.f32 %v5079, 0.0
        %v5147 = vmax.f32 %v5081, 0.0
        %v5148 = vmax.f32 %v5083, 0.0
        %v5149 = vpack.c.bf16 %v5087, %v5085
        %v5150 = vpack.c.bf16 %v5088, %v5086
        %v5151 = vpack.c.bf16 %v5091, %v5089
        %v5152 = vpack.c.bf16 %v5092, %v5090
        %v5153 = vpack.c.bf16 %v5095, %v5093
        %v5154 = vpack.c.bf16 %v5096, %v5094
        %v5155 = vpack.c.bf16 %v5099, %v5097
        %v5156 = vpack.c.bf16 %v5100, %v5098
        %v5157 = vpack.c.bf16 %v5103, %v5101
        %v5158 = vpack.c.bf16 %v5104, %v5102
        %v5159 = vpack.c.bf16 %v5107, %v5105
        %v5160 = vpack.c.bf16 %v5108, %v5106
        %v5161 = vpack.c.bf16 %v5111, %v5109
        %v5162 = vpack.c.bf16 %v5112, %v5110
        %v5163 = vpack.c.bf16 %v5115, %v5113
        %v5164 = vpack.c.bf16 %v5116, %v5114
        %v5165 = vpack.c.bf16 %v5119, %v5117
        %v5166 = vpack.c.bf16 %v5120, %v5118
        %v5167 = vpack.c.bf16 %v5123, %v5121
        %v5168 = vpack.c.bf16 %v5124, %v5122
        %v5169 = vpack.c.bf16 %v5127, %v5125
        %v5170 = vpack.c.bf16 %v5128, %v5126
        %v5171 = vpack.c.bf16 %v5131, %v5129
        %v5172 = vpack.c.bf16 %v5132, %v5130
        %v5173 = vpack.c.bf16 %v5135, %v5133
        %v5174 = vpack.c.bf16 %v5136, %v5134
        %v5175 = vpack.c.bf16 %v5139, %v5137
        %v5176 = vpack.c.bf16 %v5140, %v5138
        %v5177 = vpack.c.bf16 %v5143, %v5141
        %v5178 = vpack.c.bf16 %v5144, %v5142
        %v5179 = vpack.c.bf16 %v5147, %v5145
        %v5180 = vpack.c.bf16 %v5148, %v5146
        %v5181 = vld [vmem:[%s3] sm:$0xf]
        %v5182 = vld [vmem:[%s3 + $0x4] sm:$0xf]
        %v5183 = vld [vmem:[%s3 + $0x8] sm:$0xf]
        %v5184 = vld [vmem:[%s3 + $0xc] sm:$0xf]
        %v5185 = vld [vmem:[%s3 + $0x10] sm:$0xf]
        %v5186 = vld [vmem:[%s3 + $0x14] sm:$0xf]
        %v5187 = vld [vmem:[%s3 + $0x18] sm:$0xf]
        %v5188 = vld [vmem:[%s3 + $0x1c] sm:$0xf]
        %v5189 = vld [vmem:[%s3 + $0x20] sm:$0xf]
        %v5190 = vld [vmem:[%s3 + $0x24] sm:$0xf]
        %v5191 = vld [vmem:[%s3 + $0x28] sm:$0xf]
        %v5192 = vld [vmem:[%s3 + $0x2c] sm:$0xf]
        %v5193 = vld [vmem:[%s3 + $0x30] sm:$0xf]
        %v5194 = vld [vmem:[%s3 + $0x34] sm:$0xf]
        %v5195 = vld [vmem:[%s3 + $0x38] sm:$0xf]
        %v5196 = vld [vmem:[%s3 + $0x3c] sm:$0xf]
        %v5197 = vld [vmem:[%s3 + $0x40] sm:$0xf]
        %v5198 = vld [vmem:[%s3 + $0x44] sm:$0xf]
        %v5199 = vld [vmem:[%s3 + $0x48] sm:$0xf]
        %v5200 = vld [vmem:[%s3 + $0x4c] sm:$0xf]
        %v5201 = vld [vmem:[%s3 + $0x50] sm:$0xf]
        %v5202 = vld [vmem:[%s3 + $0x54] sm:$0xf]
        %v5203 = vld [vmem:[%s3 + $0x58] sm:$0xf]
        %v5204 = vld [vmem:[%s3 + $0x5c] sm:$0xf]
        %v5205 = vld [vmem:[%s3 + $0x60] sm:$0xf]
        %v5206 = vld [vmem:[%s3 + $0x64] sm:$0xf]
        %v5207 = vld [vmem:[%s3 + $0x68] sm:$0xf]
        %v5208 = vld [vmem:[%s3 + $0x6c] sm:$0xf]
        %v5209 = vld [vmem:[%s3 + $0x70] sm:$0xf]
        %v5210 = vld [vmem:[%s3 + $0x74] sm:$0xf]
        %v5211 = vld [vmem:[%s3 + $0x78] sm:$0xf]
        %v5212 = vld [vmem:[%s3 + $0x7c] sm:$0xf]
        %v5213 = vld [vmem:[%s4] sm:$0x1]
        %v5215 = vlaneseq
        %v5216 = vshrl.u32 %v5215, 7
        %v5217 = vsub.s32 0, %v5216
        %v5218 = vrot.slane %v5213, %v5217
        %v5252 = vunpack.c.l.b16 %v5181
        %v5253 = vunpack.c.l.b16 %v5182
        %v5254 = vunpack.c.l.b16 %v5183
        %v5255 = vunpack.c.l.b16 %v5184
        %v5256 = vunpack.c.l.b16 %v5185
        %v5257 = vunpack.c.l.b16 %v5186
        %v5258 = vunpack.c.l.b16 %v5187
        %v5259 = vunpack.c.l.b16 %v5188
        %v5260 = vunpack.c.l.b16 %v5189
        %v5261 = vunpack.c.l.b16 %v5190
        %v5262 = vunpack.c.l.b16 %v5191
        %v5263 = vunpack.c.l.b16 %v5192
        %v5264 = vunpack.c.l.b16 %v5193
        %v5265 = vunpack.c.l.b16 %v5194
        %v5266 = vunpack.c.l.b16 %v5195
        %v5267 = vunpack.c.l.b16 %v5196
        %v5268 = vunpack.c.l.b16 %v5197
        %v5269 = vunpack.c.l.b16 %v5198
        %v5270 = vunpack.c.l.b16 %v5199
        %v5271 = vunpack.c.l.b16 %v5200
        %v5272 = vunpack.c.l.b16 %v5201
        %v5273 = vunpack.c.l.b16 %v5202
        %v5274 = vunpack.c.l.b16 %v5203
        %v5275 = vunpack.c.l.b16 %v5204
        %v5276 = vunpack.c.l.b16 %v5205
        %v5277 = vunpack.c.l.b16 %v5206
        %v5278 = vunpack.c.l.b16 %v5207
        %v5279 = vunpack.c.l.b16 %v5208
        %v5280 = vunpack.c.l.b16 %v5209
        %v5281 = vunpack.c.l.b16 %v5210
        %v5282 = vunpack.c.l.b16 %v5211
        %v5283 = vunpack.c.l.b16 %v5212
        %v5284 = vpack.c.b16 %v5253, %v5252
        %v5285 = vpack.c.b16 %v5255, %v5254
        %v5286 = vpack.c.b16 %v5257, %v5256
        %v5287 = vpack.c.b16 %v5259, %v5258
        %v5288 = vpack.c.b16 %v5261, %v5260
        %v5289 = vpack.c.b16 %v5263, %v5262
        %v5290 = vpack.c.b16 %v5265, %v5264
        %v5291 = vpack.c.b16 %v5267, %v5266
        %v5292 = vpack.c.b16 %v5269, %v5268
        %v5293 = vpack.c.b16 %v5271, %v5270
        %v5294 = vpack.c.b16 %v5273, %v5272
        %v5295 = vpack.c.b16 %v5275, %v5274
        %v5296 = vpack.c.b16 %v5277, %v5276
        %v5297 = vpack.c.b16 %v5279, %v5278
        %v5298 = vpack.c.b16 %v5281, %v5280
        %v5299 = vpack.c.b16 %v5283, %v5282
        %5316 = vmatprep.subr.bf16.mxu0 0
        %5317 = vmatpush1.bf16.msra.mxu0 %v5284
        %5318 = vmatprep.subr.bf16.mxu0 0
        %5319 = vmatpush1.bf16.msra.mxu0 %v5285
        %5320 = vmatprep.subr.bf16.mxu0 0
        %5321 = vmatpush1.bf16.msra.mxu0 %v5286
        %5322 = vmatprep.subr.bf16.mxu0 0
        %5323 = vmatpush1.bf16.msra.mxu0 %v5287
        %5324 = vmatprep.subr.bf16.mxu0 0
        %5325 = vmatpush1.bf16.msra.mxu0 %v5288
        %5326 = vmatprep.subr.bf16.mxu0 0
        %5327 = vmatpush1.bf16.msra.mxu0 %v5289
        %5328 = vmatprep.subr.bf16.mxu0 0
        %5329 = vmatpush1.bf16.msra.mxu0 %v5290
        %5330 = vmatprep.subr.bf16.mxu0 0
        %5331 = vmatpush1.bf16.msra.mxu0 %v5291
        %5332 = vmatprep.subr.bf16.mxu0 0
        %5333 = vmatpush1.bf16.msra.mxu0 %v5292
        %5334 = vmatprep.subr.bf16.mxu0 0
        %5335 = vmatpush1.bf16.msra.mxu0 %v5293
        %5336 = vmatprep.subr.bf16.mxu0 0
        %5337 = vmatpush1.bf16.msra.mxu0 %v5294
        %5338 = vmatprep.subr.bf16.mxu0 0
        %5339 = vmatpush1.bf16.msra.mxu0 %v5295
        %5340 = vmatprep.subr.bf16.mxu0 0
        %5341 = vmatpush1.bf16.msra.mxu0 %v5296
        %5342 = vmatprep.subr.bf16.mxu0 0
        %5343 = vmatpush1.bf16.msra.mxu0 %v5297
        %5344 = vmatprep.subr.bf16.mxu0 0
        %5345 = vmatpush1.bf16.msra.mxu0 %v5298
        %5346 = vmatprep.subr.bf16.mxu0 0
        %5347 = vmatpush1.bf16.msra.mxu0 %v5299
        %5348 = vmatprep.mubr.bf16.mxu0 %v5150
        %5349 = vmatmul.mubr.bf16.gmra.mrb[0].mxu0 %v5149
        %v5350 = vpop.f32.mrb[0].mxu0
        %v5351 = vadd.f32 %v5218, %v5350
        %v5352 = vpop.f32.mrb[0].mxu0
        %v5353 = vpop.f32.mrb[0].mxu0
        %v5354 = vadd.f32 %v5218, %v5353
        %v5355 = vpop.f32.mrb[0].mxu0
        %5356 = vmatprep.mubr.bf16.mxu0 %v5152
        %5357 = vmatmul.mubr.bf16.gmra.mrb[0].mxu0 %v5151
        %v5358 = vpop.f32.mrb[0].mxu0
        %v5359 = vadd.f32 %v5218, %v5358
        %v5360 = vpop.f32.mrb[0].mxu0
        %v5361 = vpop.f32.mrb[0].mxu0
        %v5362 = vadd.f32 %v5218, %v5361
        %v5363 = vpop.f32.mrb[0].mxu0
        %5364 = vmatprep.mubr.bf16.mxu0 %v5154
        %5365 = vmatmul.mubr.bf16.gmra.mrb[0].mxu0 %v5153
        %v5366 = vpop.f32.mrb[0].mxu0
        %v5367 = vadd.f32 %v5218, %v5366
        %v5368 = vpop.f32.mrb[0].mxu0
        %v5369 = vpop.f32.mrb[0].mxu0
        %v5370 = vadd.f32 %v5218, %v5369
        %v5371 = vpop.f32.mrb[0].mxu0
        %5372 = vmatprep.mubr.bf16.mxu0 %v5156
        %5373 = vmatmul.mubr.bf16.gmra.mrb[0].mxu0 %v5155
        %v5374 = vpop.f32.mrb[0].mxu0
        %v5375 = vadd.f32 %v5218, %v5374
        %v5376 = vpop.f32.mrb[0].mxu0
        %v5377 = vpop.f32.mrb[0].mxu0
        %v5378 = vadd.f32 %v5218, %v5377
        %v5379 = vpop.f32.mrb[0].mxu0
        %5380 = vmatprep.mubr.bf16.mxu0 %v5158
        %5381 = vmatmul.mubr.bf16.gmra.mrb[0].mxu0 %v5157
        %v5382 = vpop.f32.mrb[0].mxu0
        %v5383 = vadd.f32 %v5218, %v5382
        %v5384 = vpop.f32.mrb[0].mxu0
        %v5385 = vpop.f32.mrb[0].mxu0
        %v5386 = vadd.f32 %v5218, %v5385
        %v5387 = vpop.f32.mrb[0].mxu0
        %5388 = vmatprep.mubr.bf16.mxu0 %v5160
        %5389 = vmatmul.mubr.bf16.gmra.mrb[0].mxu0 %v5159
        %v5390 = vpop.f32.mrb[0].mxu0
        %v5391 = vadd.f32 %v5218, %v5390
        %v5392 = vpop.f32.mrb[0].mxu0
        %v5393 = vpop.f32.mrb[0].mxu0
        %v5394 = vadd.f32 %v5218, %v5393
        %v5395 = vpop.f32.mrb[0].mxu0
        %5396 = vmatprep.mubr.bf16.mxu0 %v5162
        %5397 = vmatmul.mubr.bf16.gmra.mrb[0].mxu0 %v5161
        %v5398 = vpop.f32.mrb[0].mxu0
        %v5399 = vadd.f32 %v5218, %v5398
        %v5400 = vpop.f32.mrb[0].mxu0
        %v5401 = vpop.f32.mrb[0].mxu0
        %v5402 = vadd.f32 %v5218, %v5401
        %v5403 = vpop.f32.mrb[0].mxu0
        %5404 = vmatprep.mubr.bf16.mxu0 %v5164
        %5405 = vmatmul.mubr.bf16.gmra.mrb[0].mxu0 %v5163
        %v5406 = vpop.f32.mrb[0].mxu0
        %v5407 = vadd.f32 %v5218, %v5406
        %v5408 = vpop.f32.mrb[0].mxu0
        %v5409 = vpop.f32.mrb[0].mxu0
        %v5410 = vadd.f32 %v5218, %v5409
        %v5411 = vpop.f32.mrb[0].mxu0
        %5412 = vmatprep.mubr.bf16.mxu0 %v5166
        %5413 = vmatmul.mubr.bf16.gmra.mrb[0].mxu0 %v5165
        %v5414 = vpop.f32.mrb[0].mxu0
        %v5415 = vadd.f32 %v5218, %v5414
        %v5416 = vpop.f32.mrb[0].mxu0
        %v5417 = vpop.f32.mrb[0].mxu0
        %v5418 = vadd.f32 %v5218, %v5417
        %v5419 = vpop.f32.mrb[0].mxu0
        %5420 = vmatprep.mubr.bf16.mxu0 %v5168
        %5421 = vmatmul.mubr.bf16.gmra.mrb[0].mxu0 %v5167
        %v5422 = vpop.f32.mrb[0].mxu0
        %v5423 = vadd.f32 %v5218, %v5422
        %v5424 = vpop.f32.mrb[0].mxu0
        %v5425 = vpop.f32.mrb[0].mxu0
        %v5426 = vadd.f32 %v5218, %v5425
        %v5427 = vpop.f32.mrb[0].mxu0
        %5428 = vmatprep.mubr.bf16.mxu0 %v5170
        %5429 = vmatmul.mubr.bf16.gmra.mrb[0].mxu0 %v5169
        %v5430 = vpop.f32.mrb[0].mxu0
        %v5431 = vadd.f32 %v5218, %v5430
        %v5432 = vpop.f32.mrb[0].mxu0
        %v5433 = vpop.f32.mrb[0].mxu0
        %v5434 = vadd.f32 %v5218, %v5433
        %v5435 = vpop.f32.mrb[0].mxu0
        %5436 = vmatprep.mubr.bf16.mxu0 %v5172
        %5437 = vmatmul.mubr.bf16.gmra.mrb[0].mxu0 %v5171
        %v5438 = vpop.f32.mrb[0].mxu0
        %v5439 = vadd.f32 %v5218, %v5438
        %v5440 = vpop.f32.mrb[0].mxu0
        %v5441 = vpop.f32.mrb[0].mxu0
        %v5442 = vadd.f32 %v5218, %v5441
        %v5443 = vpop.f32.mrb[0].mxu0
        %5444 = vmatprep.mubr.bf16.mxu0 %v5174
        %5445 = vmatmul.mubr.bf16.gmra.mrb[0].mxu0 %v5173
        %v5446 = vpop.f32.mrb[0].mxu0
        %v5447 = vadd.f32 %v5218, %v5446
        %v5448 = vpop.f32.mrb[0].mxu0
        %v5449 = vpop.f32.mrb[0].mxu0
        %v5450 = vadd.f32 %v5218, %v5449
        %v5451 = vpop.f32.mrb[0].mxu0
        %5452 = vmatprep.mubr.bf16.mxu0 %v5176
        %5453 = vmatmul.mubr.bf16.gmra.mrb[0].mxu0 %v5175
        %v5454 = vpop.f32.mrb[0].mxu0
        %v5455 = vadd.f32 %v5218, %v5454
        %v5456 = vpop.f32.mrb[0].mxu0
        %v5457 = vpop.f32.mrb[0].mxu0
        %v5458 = vadd.f32 %v5218, %v5457
        %v5459 = vpop.f32.mrb[0].mxu0
        %5460 = vmatprep.mubr.bf16.mxu0 %v5178
        %5461 = vmatmul.mubr.bf16.gmra.mrb[0].mxu0 %v5177
        %v5462 = vpop.f32.mrb[0].mxu0
        %v5463 = vadd.f32 %v5218, %v5462
        %v5464 = vpop.f32.mrb[0].mxu0
        %v5465 = vpop.f32.mrb[0].mxu0
        %v5466 = vadd.f32 %v5218, %v5465
        %v5467 = vpop.f32.mrb[0].mxu0
        %5468 = vmatprep.mubr.bf16.mxu0 %v5180
        %5469 = vmatmul.mubr.bf16.gmra.mrb[0].mxu0 %v5179
        %v5470 = vpop.f32.mrb[0].mxu0
        %v5471 = vadd.f32 %v5218, %v5470
        %v5472 = vpop.f32.mrb[0].mxu0
        %v5473 = vpop.f32.mrb[0].mxu0
        %v5474 = vadd.f32 %v5218, %v5473
        %v5475 = vpop.f32.mrb[0].mxu0
        %5476 = vdwg.mxu0
        %v5477 = vmax.f32 %v5351, 0.0
        %v5478 = vmax.f32 %v5354, 0.0
        %v5479 = vmax.f32 %v5359, 0.0
        %v5480 = vmax.f32 %v5362, 0.0
        %v5481 = vmax.f32 %v5367, 0.0
        %v5482 = vmax.f32 %v5370, 0.0
        %v5483 = vmax.f32 %v5375, 0.0
        %v5484 = vmax.f32 %v5378, 0.0
        %v5485 = vmax.f32 %v5383, 0.0
        %v5486 = vmax.f32 %v5386, 0.0
        %v5487 = vmax.f32 %v5391, 0.0
        %v5488 = vmax.f32 %v5394, 0.0
        %v5489 = vmax.f32 %v5399, 0.0
        %v5490 = vmax.f32 %v5402, 0.0
        %v5491 = vmax.f32 %v5407, 0.0
        %v5492 = vmax.f32 %v5410, 0.0
        %v5493 = vmax.f32 %v5415, 0.0
        %v5494 = vmax.f32 %v5418, 0.0
        %v5495 = vmax.f32 %v5423, 0.0
        %v5496 = vmax.f32 %v5426, 0.0
        %v5497 = vmax.f32 %v5431, 0.0
        %v5498 = vmax.f32 %v5434, 0.0
        %v5499 = vmax.f32 %v5439, 0.0
        %v5500 = vmax.f32 %v5442, 0.0
        %v5501 = vmax.f32 %v5447, 0.0
        %v5502 = vmax.f32 %v5450, 0.0
        %v5503 = vmax.f32 %v5455, 0.0
        %v5504 = vmax.f32 %v5458, 0.0
        %v5505 = vmax.f32 %v5463, 0.0
        %v5506 = vmax.f32 %v5466, 0.0
        %v5507 = vmax.f32 %v5471, 0.0
        %v5508 = vmax.f32 %v5474, 0.0
        %5509 = vxpose.xlu0.b32.start [1/16] %v5477, 128
        %5510 = vxpose.xlu0.b32.cont [2/16] %v5478, 128
        %5511 = vxpose.xlu0.b32.cont [3/16] %v5479, 128
        %5512 = vxpose.xlu0.b32.cont [4/16] %v5480, 128
        %5513 = vxpose.xlu0.b32.cont [5/16] %v5481, 128
        %5514 = vxpose.xlu0.b32.cont [6/16] %v5482, 128
        %5515 = vxpose.xlu0.b32.cont [7/16] %v5483, 128
        %5516 = vxpose.xlu0.b32.cont [8/16] %v5484, 128
        %5517 = vxpose.xlu0.b32.cont [9/16] %v5485, 128
        %5518 = vxpose.xlu0.b32.cont [10/16] %v5486, 128
        %5519 = vxpose.xlu0.b32.cont [11/16] %v5487, 128
        %5520 = vxpose.xlu0.b32.cont [12/16] %v5488, 128
        %5521 = vxpose.xlu0.b32.cont [13/16] %v5489, 128
        %5522 = vxpose.xlu0.b32.cont [14/16] %v5490, 128
        %5523 = vxpose.xlu0.b32.cont [15/16] %v5491, 128
        %5524 = vxpose.xlu0.b32.end [16/16] %v5492, 128
        %v5525 = vpop.trf.xlu0
        %v5526 = vpop.trf.xlu0
        %v5527 = vpop.trf.xlu0
        %v5528 = vpop.trf.xlu0
        %v5529 = vpop.trf.xlu0
        %v5530 = vpop.trf.xlu0
        %v5531 = vpop.trf.xlu0
        %v5532 = vpop.trf.xlu0
        %v5533 = vpop.trf.xlu0
        %v5534 = vpop.trf.xlu0
        %v5535 = vpop.trf.xlu0
        %v5536 = vpop.trf.xlu0
        %v5537 = vpop.trf.xlu0
        %v5538 = vpop.trf.xlu0
        %v5539 = vpop.trf.xlu0
        %v5540 = vpop.trf.xlu0
        %5541 = vxpose.xlu0.b32.start [1/16] %v5493, 128
        %5542 = vxpose.xlu0.b32.cont [2/16] %v5494, 128
        %5543 = vxpose.xlu0.b32.cont [3/16] %v5495, 128
        %5544 = vxpose.xlu0.b32.cont [4/16] %v5496, 128
        %5545 = vxpose.xlu0.b32.cont [5/16] %v5497, 128
        %5546 = vxpose.xlu0.b32.cont [6/16] %v5498, 128
        %5547 = vxpose.xlu0.b32.cont [7/16] %v5499, 128
        %5548 = vxpose.xlu0.b32.cont [8/16] %v5500, 128
        %5549 = vxpose.xlu0.b32.cont [9/16] %v5501, 128
        %5550 = vxpose.xlu0.b32.cont [10/16] %v5502, 128
        %5551 = vxpose.xlu0.b32.cont [11/16] %v5503, 128
        %5552 = vxpose.xlu0.b32.cont [12/16] %v5504, 128
        %5553 = vxpose.xlu0.b32.cont [13/16] %v5505, 128
        %5554 = vxpose.xlu0.b32.cont [14/16] %v5506, 128
        %5555 = vxpose.xlu0.b32.cont [15/16] %v5507, 128
        %5556 = vxpose.xlu0.b32.end [16/16] %v5508, 128
        %v5557 = vpop.trf.xlu0
        %v5558 = vpop.trf.xlu0
        %v5559 = vpop.trf.xlu0
        %v5560 = vpop.trf.xlu0
        %v5561 = vpop.trf.xlu0
        %v5562 = vpop.trf.xlu0
        %v5563 = vpop.trf.xlu0
        %v5564 = vpop.trf.xlu0
        %v5565 = vpop.trf.xlu0
        %v5566 = vpop.trf.xlu0
        %v5567 = vpop.trf.xlu0
        %v5568 = vpop.trf.xlu0
        %v5569 = vpop.trf.xlu0
        %v5570 = vpop.trf.xlu0
        %v5571 = vpop.trf.xlu0
        %v5572 = vpop.trf.xlu0
        %v5573 = vld [vmem:[%s5] sm:$0xff]
        %v5574 = vld [vmem:[%s5 + $0x8] sm:$0xff]
        %v5575 = vld [vmem:[%s5 + $0x10] sm:$0xff]
        %v5576 = vld [vmem:[%s5 + $0x18] sm:$0xff]
        %v5577 = vld [vmem:[%s5 + $0x20] sm:$0xff]
        %v5578 = vld [vmem:[%s5 + $0x28] sm:$0xff]
        %v5579 = vld [vmem:[%s5 + $0x30] sm:$0xff]
        %v5580 = vld [vmem:[%s5 + $0x38] sm:$0xff]
        %v5581 = vld [vmem:[%s5 + $0x40] sm:$0xff]
        %v5582 = vld [vmem:[%s5 + $0x48] sm:$0xff]
        %v5583 = vld [vmem:[%s5 + $0x50] sm:$0xff]
        %v5584 = vld [vmem:[%s5 + $0x58] sm:$0xff]
        %v5585 = vld [vmem:[%s5 + $0x60] sm:$0xff]
        %v5586 = vld [vmem:[%s5 + $0x68] sm:$0xff]
        %v5587 = vld [vmem:[%s5 + $0x70] sm:$0xff]
        %v5588 = vld [vmem:[%s5 + $0x78] sm:$0xff]
        %5590 = vset.pattern.permute.xlu0 0
        %5591 = vperm.xlu0 %5590, %v5573
        %v5592 = vpop.permute.xlu0 %5591
        %5595 = vset.pattern.permute.xlu0 0
        %5596 = vperm.xlu0 %5595, %v5574
        %v5597 = vpop.permute.xlu0 %5596
        %5600 = vset.pattern.permute.xlu0 0
        %5601 = vperm.xlu0 %5600, %v5575
        %v5602 = vpop.permute.xlu0 %5601
        %5605 = vset.pattern.permute.xlu0 0
        %5606 = vperm.xlu0 %5605, %v5576
        %v5607 = vpop.permute.xlu0 %5606
        %5610 = vset.pattern.permute.xlu0 0
        %5611 = vperm.xlu0 %5610, %v5577
        %v5612 = vpop.permute.xlu0 %5611
        %5615 = vset.pattern.permute.xlu0 0
        %5616 = vperm.xlu0 %5615, %v5578
        %v5617 = vpop.permute.xlu0 %5616
        %5620 = vset.pattern.permute.xlu0 0
        %5621 = vperm.xlu0 %5620, %v5579
        %v5622 = vpop.permute.xlu0 %5621
        %5625 = vset.pattern.permute.xlu0 0
        %5626 = vperm.xlu0 %5625, %v5580
        %v5627 = vpop.permute.xlu0 %5626
        %5630 = vset.pattern.permute.xlu0 0
        %5631 = vperm.xlu0 %5630, %v5581
        %v5632 = vpop.permute.xlu0 %5631
        %5635 = vset.pattern.permute.xlu0 0
        %5636 = vperm.xlu0 %5635, %v5582
        %v5637 = vpop.permute.xlu0 %5636
        %5640 = vset.pattern.permute.xlu0 0
        %5641 = vperm.xlu0 %5640, %v5583
        %v5642 = vpop.permute.xlu0 %5641
        %5645 = vset.pattern.permute.xlu0 0
        %5646 = vperm.xlu0 %5645, %v5584
        %v5647 = vpop.permute.xlu0 %5646
        %5650 = vset.pattern.permute.xlu0 0
        %5651 = vperm.xlu0 %5650, %v5585
        %v5652 = vpop.permute.xlu0 %5651
        %5655 = vset.pattern.permute.xlu0 0
        %5656 = vperm.xlu0 %5655, %v5586
        %v5657 = vpop.permute.xlu0 %5656
        %5660 = vset.pattern.permute.xlu0 0
        %5661 = vperm.xlu0 %5660, %v5587
        %v5662 = vpop.permute.xlu0 %5661
        %5665 = vset.pattern.permute.xlu0 0
        %5666 = vperm.xlu0 %5665, %v5588
        %v5667 = vpop.permute.xlu0 %5666
        %v5669 = vmul.f32 %v5525, %v5592
        %v5670 = vmul.f32 %v5557, %v5592
        %v5671 = vmul.f32 %v5526, %v5597
        %v5672 = vmul.f32 %v5558, %v5597
        %v5673 = vmul.f32 %v5527, %v5602
        %v5674 = vmul.f32 %v5559, %v5602
        %v5675 = vmul.f32 %v5528, %v5607
        %v5676 = vmul.f32 %v5560, %v5607
        %v5677 = vmul.f32 %v5529, %v5612
        %v5678 = vmul.f32 %v5561, %v5612
        %v5679 = vmul.f32 %v5530, %v5617
        %v5680 = vmul.f32 %v5562, %v5617
        %v5681 = vmul.f32 %v5531, %v5622
        %v5682 = vmul.f32 %v5563, %v5622
        %v5683 = vmul.f32 %v5532, %v5627
        %v5684 = vmul.f32 %v5564, %v5627
        %v5685 = vmul.f32 %v5533, %v5632
        %v5686 = vmul.f32 %v5565, %v5632
        %v5687 = vmul.f32 %v5534, %v5637
        %v5688 = vmul.f32 %v5566, %v5637
        %v5689 = vmul.f32 %v5535, %v5642
        %v5690 = vmul.f32 %v5567, %v5642
        %v5691 = vmul.f32 %v5536, %v5647
        %v5692 = vmul.f32 %v5568, %v5647
        %v5693 = vmul.f32 %v5537, %v5652
        %v5694 = vmul.f32 %v5569, %v5652
        %v5695 = vmul.f32 %v5538, %v5657
        %v5696 = vmul.f32 %v5570, %v5657
        %v5697 = vmul.f32 %v5539, %v5662
        %v5698 = vmul.f32 %v5571, %v5662
        %v5699 = vmul.f32 %v5540, %v5667
        %v5700 = vmul.f32 %v5572, %v5667
        %v5701 = vadd.f32 %v5669, %v5671
        %v5702 = vadd.f32 %v5701, %v5673
        %v5703 = vadd.f32 %v5702, %v5675
        %v5704 = vadd.f32 %v5703, %v5677
        %v5705 = vadd.f32 %v5704, %v5679
        %v5706 = vadd.f32 %v5705, %v5681
        %v5707 = vadd.f32 %v5706, %v5683
        %v5708 = vadd.f32 %v5707, %v5685
        %v5709 = vadd.f32 %v5708, %v5687
        %v5710 = vadd.f32 %v5709, %v5689
        %v5711 = vadd.f32 %v5710, %v5691
        %v5712 = vadd.f32 %v5711, %v5693
        %v5713 = vadd.f32 %v5712, %v5695
        %v5714 = vadd.f32 %v5713, %v5697
        %v5715 = vadd.f32 %v5714, %v5699
        %v5716 = vrot.slane %v5715, 4
        %v5717 = vadd.f32 %v5715, %v5716
        %v5718 = vrot.slane %v5717, 2
        %v5719 = vadd.f32 %v5717, %v5718
        %v5720 = vrot.slane %v5719, 1
        %v5721 = vadd.f32 %v5719, %v5720
        %v5722 = vadd.f32 %v5670, %v5672
        %v5723 = vadd.f32 %v5722, %v5674
        %v5724 = vadd.f32 %v5723, %v5676
        %v5725 = vadd.f32 %v5724, %v5678
        %v5726 = vadd.f32 %v5725, %v5680
        %v5727 = vadd.f32 %v5726, %v5682
        %v5728 = vadd.f32 %v5727, %v5684
        %v5729 = vadd.f32 %v5728, %v5686
        %v5730 = vadd.f32 %v5729, %v5688
        %v5731 = vadd.f32 %v5730, %v5690
        %v5732 = vadd.f32 %v5731, %v5692
        %v5733 = vadd.f32 %v5732, %v5694
        %v5734 = vadd.f32 %v5733, %v5696
        %v5735 = vadd.f32 %v5734, %v5698
        %v5736 = vadd.f32 %v5735, %v5700
        %v5737 = vrot.slane %v5736, 4
        %v5738 = vadd.f32 %v5736, %v5737
        %v5739 = vrot.slane %v5738, 2
        %v5740 = vadd.f32 %v5738, %v5739
        %v5741 = vrot.slane %v5740, 1
        %v5742 = vadd.f32 %v5740, %v5741
        %v5743 = vld [vmem:[#allocation2] sm:$0x1]
        %5745 = vset.pattern.permute.xlu0 0
        %5746 = vperm.xlu0 %5745, %v5743
        %v5747 = vpop.permute.xlu0 %5746
        %v5749 = vlaneseq
        %v5750 = vshrl.u32 %v5749, 7
        %v5751 = vsub.s32 0, %v5750
        %v5752 = vrot.slane %v5747, %v5751
        %v5753 = vadd.f32 %v5721, %v5752
        %v5754 = vadd.f32 %v5742, %v5752
        %v5757 = vcombine.low %v5753, %v5754
        %v5759 = vunpack.c.l.s4 1966171168
        %v5760 = vunpack.c.0.s8 %v5759
        %v5761 = vlaneseq
        %v5762 = vshrl.u32 %v5761, 7
        %v5763 = vsub.s32 %v5760, %v5762
        %v5764 = vrot.slane %v5757, %v5763
        %v5766 = vunpack.c.l.s4 1966171168
        %v5767 = vunpack.c.0.s8 %v5766
        %v5768 = vlaneseq
        %v5769 = vshrl.u32 %v5768, 7
        %v5770 = vsub.s32 %v5767, %v5769
        %v5771 = vrot.slane %v5764, %v5770
        %v5773 = vlaneseq
        %vm5774 = vcmp.ge.s32.totalorder %v5773, 0
        %vm5775 = vcmp.lt.s32.totalorder %v5773, 256
        %vm5776 = vmand %vm5774, %vm5775
        %5777 = vst.msk [vmem:[%s321] sm:$0x3] %vm5776, %v5771
        %s5778 = sand.u32 %s187, 1
        %s5779 = scalar_lea.sflag [#allocation5], %s5778
        %s5780 = sand.u32 %s187, 1
        %s5781 = smul.addr %s5780, 2
        %s5782 = scalar_lea.vmem [#allocation8], %s5781
        // Predicated region
        $region57: #{tpu_custom_call.1} parent=47 // pred_check
          %p5783 = pneg %p197
        $region58: #{tpu_custom_call.1} parent=47 // pred_check_branch
          %5785 = sbr.rel (%p5783) target = $region60
        $region59: #{tpu_custom_call.1} parent=47 // pred_region
          %s5787 = ssub.s32 32, 32
          %5788 = vsyncadd %s5779, %s5787
          %s5789 = smul.addr %s27, 2
          %s5790 = smul.addr %s5789, 16
          %s5791 = scalar_lea.hbm %s7, %s5790
          %s5793 = sshll.u32 %s5782, 4
          %s5794 = int_to_ptr.vmem [resolvable:$true] %s5793
          %5796 = dma.vmem_to_hbm [thread:$0]  %s5794, 32, %s5791, %s5779
        $region60: #{tpu_custom_call.1} parent=47 // pred_fallthru
          _
      $region48: #{tpu_custom_call.1} parent=5 // pred_fallthru
        _
      %p5797 = scmp.le.s32.totalorder 2, %s22
      // Predicated region
      $region61: #{tpu_custom_call.1} parent=5 // pred_check
        %p5798 = pneg %p5797
      $region62: #{tpu_custom_call.1} parent=5 // pred_check_branch
        %5800 = sbr.rel (%p5798) target = $region64
      $region63: #{tpu_custom_call.1} parent=5 // pred_region
        %s5801 = ssub.s32 %s22, 2
        // Predicated region
        $region65: #{tpu_custom_call.1} parent=63 // pred_check
          %p5802 = pneg %p203
        $region66: #{tpu_custom_call.1} parent=63 // pred_check_branch
          %5804 = sbr.rel (%p5802) target = $region68
        $region67: #{tpu_custom_call.1} parent=63 // pred_region
          %s5805 = sand.u32 %s188, 1
          %s5806 = scalar_lea.sflag [#allocation5], %s5805
          %s5807 = sand.u32 %s188, 1
          %s5808 = smul.addr %s5807, 2
          %s5809 = scalar_lea.vmem [#allocation8], %s5808
          %5810 = dma.done %s5806, 32
        $region68: #{tpu_custom_call.1} parent=63 // pred_fallthru
          _
      $region64: #{tpu_custom_call.1} parent=5 // pred_fallthru
        _
    $region6: #{tpu_custom_call.1} parent=1 // loop_footer
      %s26 = sadd.s32 1, %s22
    $region7: #{tpu_custom_call.1} parent=1 // loop_footer_branch
      %21 = sbr.rel target = $region3
    $region8: #{tpu_custom_call.1} parent=1 // loop_exit
      _
    %5811 = vsyncpa [#allocation4], 1
    %s5812 = scalar_lea.sflag [#allocation4], 1
    %5813 = vsyncpa %s5812, 1
    %5814 = vsyncpa [#allocation7], 1
    %5815 = vsyncpa [#allocation5], 1
    %s5816 = scalar_lea.sflag [#allocation5], 1
    %5817 = vsyncpa %s5816, 1

</llo_original>
